<compile_context>
chip_gen: v5e
topology: v5e:2x2
jax: 0.10.0
libtpu: 0.0.40
codegen_flags: <defaults>
</compile_context>

<pallas_src>
import math
from functools import partial

import jax
import jax.numpy as jnp
from jax import lax
from jax.experimental import pallas as pl
from jax.experimental.pallas import tpu as pltpu

NEURON_FC1 = 32
NUM_LAYERS_LSTM = 2

# TPU-native padded sizes.
BP = 8        # batch padded to one sublane tile
HP = 128      # each of the 4 LSTM gates padded to a full 128-lane block
DP = 8        # input-feature dim (state_size=4) padded only to 8 (trimmed from 128)
AP = 128      # action dim padded to one lane block
G4 = 4 * HP   # 512: one layer's padded gate width


# --------------------------------------------------------------------------------------
# Fused Pallas kernel: wavefront-interleaved 2-layer LSTM + Linear, all VMEM resident.
# --------------------------------------------------------------------------------------
def make_fused_kernel(T):
    def kernel(x_ref, wih0_ref, b0_ref, wblk_hbm, b1_ref, wfc_ref, bfc_ref,
               o_ref, gx_scr, wblk_vmem, dma_sem):
        """
        x_ref     : (T*BP, DP)     time-major, batch/feature padded input
        wih0_ref  : (DP, 4*HP)     layer-0 input->gates (padded, gate order [i,f,g,o])
        b0_ref    : (1, 4*HP)      layer-0 b_ih + b_hh (padded)
        wblk_hbm  : (2*HP, 8*HP)   HBM ref: [[Whh0, Wih1],[0, Whh1]] (manual DMA)
        b1_ref    : (1, 4*HP)      layer-1 b_ih + b_hh (padded)
        wfc_ref   : (HP, AP), bfc_ref : (1, AP)
        o_ref     : (BP, AP)       padded Q-values
        gx_scr    : (T*BP, 4*HP)   hoisted layer-0 gate pre-activations
        wblk_vmem : (2*HP, 8*HP)   VMEM landing buffer for the block weight
        dma_sem   : DMA semaphore
        """
        # Kick off the block-weight DMA; it is not needed until wavefront step 1,
        # so it overlaps with the hoisted input projection and step 0 below.
        cp = pltpu.make_async_copy(wblk_hbm, wblk_vmem, dma_sem)
        cp.start()

        def sigmoid(v):  # one EUP op per gate instead of exp + divide
            return 0.5 * (jnp.tanh(0.5 * v) + 1.0)

        def lstm_cell(gates, c_prev):
            i_g = sigmoid(gates[:, 0 * HP:1 * HP])
            f_g = sigmoid(gates[:, 1 * HP:2 * HP])
            g_g = jnp.tanh(gates[:, 2 * HP:3 * HP])
            o_g = sigmoid(gates[:, 3 * HP:4 * HP])
            c = f_g * c_prev + i_g * g_g
            h = o_g * jnp.tanh(c)
            return h, c

        # Hoisted layer-0 input projection: one (T*BP, DP) @ (DP, 4*HP) matmul.
        gx_scr[...] = (
            jnp.dot(x_ref[...], wih0_ref[...], preferred_element_type=jnp.float32)
            + b0_ref[...]
        )

        zeros = jnp.zeros((BP, HP), jnp.float32)

        # Wavefront step s=0: layer 0 only (h0_prev = h1_prev = 0 -> block matmul is 0).
        h0, c0 = lstm_cell(gx_scr[0:BP, :], zeros)
        h1, c1 = zeros, zeros

        # Block weight is first needed at wavefront step 1.
        cp.wait()

        b1 = b1_ref[...]

        def step(s, carry):
            h0, c0, h1, c1 = carry
            # One fused MXU call for both layers' gates:
            #   [h0_{s-1} | h1_{s-2}] @ [[Whh0, Wih1],[0, Whh1]]
            lhs = jnp.concatenate([h0, h1], axis=1)                  # (BP, 2*HP)
            gg = jnp.dot(lhs, wblk_vmem[...],
                         preferred_element_type=jnp.float32)         # (BP, 8*HP)
            row = pl.multiple_of(s * BP, BP)
            gates0 = gx_scr[pl.ds(row, BP), :] + gg[:, :G4]
            gates1 = gg[:, G4:] + b1
            h0n, c0n = lstm_cell(gates0, c0)   # layer 0, time s
            h1n, c1n = lstm_cell(gates1, c1)   # layer 1, time s-1 (input h0_{s-1})
            return h0n, c0n, h1n, c1n

        h0, c0, h1, c1 = lax.fori_loop(1, T, step, (h0, c0, h1, c1), unroll=True)

        # Final wavefront step s=T: layer 1 consumes h0_{T-1}.
        lhs = jnp.concatenate([h0, h1], axis=1)
        gates1 = jnp.dot(lhs, wblk_vmem[:, G4:],
                         preferred_element_type=jnp.float32) + b1
        h1, _ = lstm_cell(gates1, c1)

        # Final Linear on the resident last hidden state of layer 1.
        o_ref[...] = (
            jnp.dot(h1, wfc_ref[...], preferred_element_type=jnp.float32)
            + bfc_ref[...]
        )

    return kernel


# --------------------------------------------------------------------------------------
# Host wrapper
# --------------------------------------------------------------------------------------
@partial(jax.jit, static_argnames=("action_size",))
def qnetwork_lstm_forward(state, padded, *, action_size):
    """state: (B, T, state_size) batch-first (like the PyTorch module).
    Returns (B, action_size)."""
    B, T, D = state.shape

    # batch-first -> time-major; pad batch to BP sublanes and features to DP lanes in a
    # single jnp.pad; the reshape is layout-free (row t*BP + b holds x[b, t, :]).
    x_tm = jnp.transpose(state, (1, 0, 2))                               # (T, B, D)
    x_flat = jnp.pad(x_tm, ((0, 0), (0, BP - B), (0, DP - D))).reshape(T * BP, DP)

    vmem = pl.BlockSpec(memory_space=pltpu.MemorySpace.VMEM)
    out = pl.pallas_call(
        make_fused_kernel(T),
        out_shape=jax.ShapeDtypeStruct((BP, AP), jnp.float32),
        in_specs=[vmem, vmem, vmem,
                  pl.BlockSpec(memory_space=pl.ANY),   # block weight: manual, overlapped DMA
                  vmem, vmem, vmem],
        out_specs=vmem,
        scratch_shapes=[
            pltpu.VMEM((T * BP, G4), jnp.float32),     # hoisted layer-0 gate pre-acts
            pltpu.VMEM((2 * HP, 2 * G4), jnp.float32), # block-weight landing buffer
            pltpu.SemaphoreType.DMA(()),               # DMA completion semaphore
        ],
    )(x_flat, padded["wih0"], padded["b0"], padded["wblk"],
      padded["b1"], padded["wfc"], padded["bfc"])

    return out[:B, :action_size]


# --------------------------------------------------------------------------------------
# Parameter init (mirrors nn.LSTM / nn.Linear: uniform +-1/sqrt(H)) + kernel-layout pad.
# --------------------------------------------------------------------------------------
def init_params(key, state_size, action_size):
    H = NEURON_FC1
    bound = 1.0 / math.sqrt(H)
    params = {"lstm": [], "fc": None}
    for layer in range(NUM_LAYERS_LSTM):
        in_dim = state_size if layer == 0 else H
        key, k1, k2, k3, k4 = jax.random.split(key, 5)
        w_ih = jax.random.uniform(k1, (4 * H, in_dim), jnp.float32, -bound, bound)
        w_hh = jax.random.uniform(k2, (4 * H, H), jnp.float32, -bound, bound)
        b_ih = jax.random.uniform(k3, (4 * H,), jnp.float32, -bound, bound)
        b_hh = jax.random.uniform(k4, (4 * H,), jnp.float32, -bound, bound)
        params["lstm"].append(
            {
                "w_ih_t": w_ih.T,                      # (in_dim, 4H)
                "w_hh_t": w_hh.T,                      # (H, 4H)
                "b": (b_ih + b_hh).reshape(1, 4 * H),  # (1, 4H)
            }
        )
    key, k1, k2 = jax.random.split(key, 3)
    w_fc = jax.random.uniform(k1, (action_size, H), jnp.float32, -bound, bound)
    b_fc = jax.random.uniform(k2, (action_size,), jnp.float32, -bound, bound)
    params["fc"] = {"w_t": w_fc.T, "b": b_fc.reshape(1, action_size)}
    return params


def pad_params_for_kernel(params, state_size, action_size):
    """Kernel layout: every gate in its own 128-lane block; all padded rows/lanes are
    EXACTLY zero (the kernel relies on this so padded h/c lanes stay 0:
    sigmoid(0)*tanh(0) = 0 and never leak into real lanes)."""
    H = NEURON_FC1
    l0, l1 = params["lstm"]

    def pad_gates(w, rows):
        out = jnp.zeros((rows, 4 * HP), jnp.float32)
        r = w.shape[0]
        for g in range(4):
            out = out.at[:r, g * HP:g * HP + H].set(w[:, g * H:(g + 1) * H])
        return out

    wih0 = pad_gates(l0["w_ih_t"], DP)          # (8, 512)
    b0 = pad_gates(l0["b"], 1)                  # (1, 512)
    b1 = pad_gates(l1["b"], 1)                  # (1, 512)

    # Fused block weight [[Whh0, Wih1], [0, Whh1]] -> (256, 1024)
    whh0 = pad_gates(l0["w_hh_t"], HP)          # (128, 512)
    wih1 = pad_gates(l1["w_ih_t"], HP)          # (128, 512)
    whh1 = pad_gates(l1["w_hh_t"], HP)          # (128, 512)
    zblk = jnp.zeros((HP, 4 * HP), jnp.float32)
    wblk = jnp.concatenate(
        [jnp.concatenate([whh0, wih1], axis=1),
         jnp.concatenate([zblk, whh1], axis=1)], axis=0)

    wfc = jnp.zeros((HP, AP), jnp.float32).at[:H, :action_size].set(params["fc"]["w_t"])
    bfc = jnp.zeros((1, AP), jnp.float32).at[:, :action_size].set(params["fc"]["b"])
    return {"wih0": wih0, "b0": b0, "wblk": wblk, "b1": b1, "wfc": wfc, "bfc": bfc}


# --------------------------------------------------------------------------------------
# Pure-JAX reference (for correctness sanity check)
# --------------------------------------------------------------------------------------
def reference_forward(state, params):
    x = state  # (B, T, D)
    for lp in params["lstm"]:
        B, T, _ = x.shape
        H = lp["w_hh_t"].shape[0]
        h = jnp.zeros((B, H), jnp.float32)
        c = jnp.zeros((B, H), jnp.float32)
        outs = []
        for t in range(T):
            gates = x[:, t, :] @ lp["w_ih_t"] + h @ lp["w_hh_t"] + lp["b"]
            i = jax.nn.sigmoid(gates[:, 0 * H:1 * H])
            f = jax.nn.sigmoid(gates[:, 1 * H:2 * H])
            g = jnp.tanh(gates[:, 2 * H:3 * H])
            o = jax.nn.sigmoid(gates[:, 3 * H:4 * H])
            c = f * c + i * g
            h = o * jnp.tanh(c)
            outs.append(h)
        x = jnp.stack(outs, axis=1)
    return x[:, -1, :] @ params["fc"]["w_t"] + params["fc"]["b"]


if __name__ == "__main__":
    assert NUM_LAYERS_LSTM == 2
    B, T, state_size, action_size = 2, 8, 4, 4

    key = jax.random.PRNGKey(0)
    key, kx = jax.random.split(key)
    state = jax.random.normal(kx, (B, T, state_size), jnp.float32)
    params = init_params(key, state_size, action_size)
    padded = pad_params_for_kernel(params, state_size, action_size)

    out = qnetwork_lstm_forward(state, padded, action_size=action_size)
    out = jax.block_until_ready(out)

    ref = reference_forward(state, params)
    assert out.shape == (B, action_size)
    # Tolerance covers MXU-vs-XLA f32 matmul precision differences (XLA's default TPU
    # matmul precision may truncate inputs to bf16); any structural error is >> 1e-3.
    assert jnp.allclose(out, ref, atol=1e-3, rtol=1e-3), (out, ref)

    print("KERNEL_OK")
</pallas_src>

<mosaic_0001>
module attributes {stable_mosaic.version = 11 : i64} {
  func.func @kernel(%arg0: memref<64x8xf32, #tpu.memory_space<vmem>>, %arg1: memref<8x512xf32, #tpu.memory_space<vmem>>, %arg2: memref<1x512xf32, #tpu.memory_space<vmem>>, %arg3: memref<256x1024xf32, #tpu.memory_space<any>>, %arg4: memref<1x512xf32, #tpu.memory_space<vmem>>, %arg5: memref<128x128xf32, #tpu.memory_space<vmem>>, %arg6: memref<1x128xf32, #tpu.memory_space<vmem>>, %arg7: memref<8x128xf32, #tpu.memory_space<vmem>>, %arg8: memref<64x512xf32, #tpu.memory_space<vmem>>, %arg9: memref<256x1024xf32, #tpu.memory_space<vmem>>, %arg10: memref<!tpu.dma_semaphore, #tpu.memory_space<semaphore_mem>>) attributes {dimension_semantics = [], scalar_prefetch = 0 : i64, scratch_operands = 3 : i64, tpu.core_type = #tpu.core_type<tc>} {
    tpu.enqueue_dma source(%arg3 : memref<256x1024xf32, #tpu.memory_space<any>>) target(%arg9 : memref<256x1024xf32, #tpu.memory_space<vmem>>) target_semaphore(%arg10 : memref<!tpu.dma_semaphore, #tpu.memory_space<semaphore_mem>>)
    %c0 = arith.constant 0 : index
    %c0_0 = arith.constant 0 : index
    %0 = vector.load %arg0[%c0, %c0_0] : memref<64x8xf32, #tpu.memory_space<vmem>>, vector<64x8xf32>
    %c0_1 = arith.constant 0 : index
    %c0_2 = arith.constant 0 : index
    %1 = vector.load %arg1[%c0_1, %c0_2] : memref<8x512xf32, #tpu.memory_space<vmem>>, vector<8x512xf32>
    %cst = arith.constant dense<0.000000e+00> : vector<64x512xf32>
    %2 = tpu.matmul %0, %1, %cst {dimension_numbers = #tpu.dot_dimension_numbers<[1], [0], [0], [1], [0, 0, 1, 1], [], []>} : vector<64x8xf32>, vector<8x512xf32>, vector<64x512xf32> -> vector<64x512xf32>
    %c0_3 = arith.constant 0 : index
    %c0_4 = arith.constant 0 : index
    %3 = vector.load %arg2[%c0_3, %c0_4] : memref<1x512xf32, #tpu.memory_space<vmem>>, vector<1x512xf32>
    %4 = vector.broadcast %3 : vector<1x512xf32> to vector<64x512xf32>
    %5 = arith.addf %2, %4 : vector<64x512xf32>
    %c0_5 = arith.constant 0 : index
    %c0_6 = arith.constant 0 : index
    %6 = vector.load %arg8[%c0_5, %c0_6] : memref<64x512xf32, #tpu.memory_space<vmem>>, vector<64x512xf32>
    tpu.vector_store %arg8[%c0_5, %c0_6], %5 {strides = array<i32>} : memref<64x512xf32, #tpu.memory_space<vmem>>, vector<64x512xf32>,
    %cst_7 = arith.constant 0.000000e+00 : f32
    %7 = vector.broadcast %cst_7 : f32 to vector<8x128xf32>
    %c0_8 = arith.constant 0 : index
    %c0_9 = arith.constant 0 : index
    %8 = vector.load %arg8[%c0_8, %c0_9] : memref<64x512xf32, #tpu.memory_space<vmem>>, vector<8x512xf32>
    %9 = vector.extract_strided_slice %8 {offsets = [0, 0], sizes = [8, 128], strides = [1, 1]} : vector<8x512xf32> to vector<8x128xf32>
    %cst_10 = arith.constant 5.000000e-01 : f32
    %10 = vector.broadcast %cst_10 : f32 to vector<8x128xf32>
    %11 = arith.mulf %10, %9 : vector<8x128xf32>
    %12 = math.tanh %11 : vector<8x128xf32>
    %cst_11 = arith.constant 1.000000e+00 : f32
    %13 = vector.broadcast %cst_11 : f32 to vector<8x128xf32>
    %14 = arith.addf %12, %13 : vector<8x128xf32>
    %cst_12 = arith.constant 5.000000e-01 : f32
    %15 = vector.broadcast %cst_12 : f32 to vector<8x128xf32>
    %16 = arith.mulf %15, %14 : vector<8x128xf32>
    %17 = vector.extract_strided_slice %8 {offsets = [0, 128], sizes = [8, 128], strides = [1, 1]} : vector<8x512xf32> to vector<8x128xf32>
    %cst_13 = arith.constant 5.000000e-01 : f32
    %18 = vector.broadcast %cst_13 : f32 to vector<8x128xf32>
    %19 = arith.mulf %18, %17 : vector<8x128xf32>
    %20 = math.tanh %19 : vector<8x128xf32>
    %cst_14 = arith.constant 1.000000e+00 : f32
    %21 = vector.broadcast %cst_14 : f32 to vector<8x128xf32>
    %22 = arith.addf %20, %21 : vector<8x128xf32>
    %cst_15 = arith.constant 5.000000e-01 : f32
    %23 = vector.broadcast %cst_15 : f32 to vector<8x128xf32>
    %24 = arith.mulf %23, %22 : vector<8x128xf32>
    %25 = vector.extract_strided_slice %8 {offsets = [0, 256], sizes = [8, 128], strides = [1, 1]} : vector<8x512xf32> to vector<8x128xf32>
    %26 = math.tanh %25 : vector<8x128xf32>
    %27 = vector.extract_strided_slice %8 {offsets = [0, 384], sizes = [8, 128], strides = [1, 1]} : vector<8x512xf32> to vector<8x128xf32>
    %cst_16 = arith.constant 5.000000e-01 : f32
    %28 = vector.broadcast %cst_16 : f32 to vector<8x128xf32>
    %29 = arith.mulf %28, %27 : vector<8x128xf32>
    %30 = math.tanh %29 : vector<8x128xf32>
    %cst_17 = arith.constant 1.000000e+00 : f32
    %31 = vector.broadcast %cst_17 : f32 to vector<8x128xf32>
    %32 = arith.addf %30, %31 : vector<8x128xf32>
    %cst_18 = arith.constant 5.000000e-01 : f32
    %33 = vector.broadcast %cst_18 : f32 to vector<8x128xf32>
    %34 = arith.mulf %33, %32 : vector<8x128xf32>
    %35 = arith.mulf %24, %7 : vector<8x128xf32>
    %36 = arith.mulf %16, %26 : vector<8x128xf32>
    %37 = arith.addf %35, %36 : vector<8x128xf32>
    %38 = math.tanh %37 : vector<8x128xf32>
    %39 = arith.mulf %34, %38 : vector<8x128xf32>
    tpu.wait_dma2 semaphore(%arg10 : memref<!tpu.dma_semaphore, #tpu.memory_space<semaphore_mem>>) src(%arg3 : memref<256x1024xf32, #tpu.memory_space<any>>) dst(%arg9 : memref<256x1024xf32, #tpu.memory_space<vmem>>)
    %c0_19 = arith.constant 0 : index
    %c0_20 = arith.constant 0 : index
    %40 = vector.load %arg4[%c0_19, %c0_20] : memref<1x512xf32, #tpu.memory_space<vmem>>, vector<1x512xf32>
    %c1_i32 = arith.constant 1 : i32
    %41 = tpu.concatenate %39, %7 in 1 : vector<8x128xf32>, vector<8x128xf32> -> vector<8x256xf32>
    %c0_21 = arith.constant 0 : index
    %c0_22 = arith.constant 0 : index
    %42 = vector.load %arg9[%c0_21, %c0_22] : memref<256x1024xf32, #tpu.memory_space<vmem>>, vector<256x1024xf32>
    %cst_23 = arith.constant dense<0.000000e+00> : vector<8x1024xf32>
    %43 = tpu.matmul %41, %42, %cst_23 {dimension_numbers = #tpu.dot_dimension_numbers<[1], [0], [0], [1], [0, 0, 1, 1], [], []>} : vector<8x256xf32>, vector<256x1024xf32>, vector<8x1024xf32> -> vector<8x1024xf32>
    %c8_i32 = arith.constant 8 : i32
    %44 = arith.muli %c1_i32, %c8_i32 : i32
    %45 = tpu.assume_multiple %44, 8 : i32
    %46 = arith.index_cast %45 : i32 to index
    %c0_24 = arith.constant 0 : index
    %47 = vector.load %arg8[%46, %c0_24] : memref<64x512xf32, #tpu.memory_space<vmem>>, vector<8x512xf32>
    %48 = vector.extract_strided_slice %43 {offsets = [0, 0], sizes = [8, 512], strides = [1, 1]} : vector<8x1024xf32> to vector<8x512xf32>
    %49 = arith.addf %47, %48 : vector<8x512xf32>
    %50 = vector.extract_strided_slice %43 {offsets = [0, 512], sizes = [8, 512], strides = [1, 1]} : vector<8x1024xf32> to vector<8x512xf32>
    %51 = vector.broadcast %40 : vector<1x512xf32> to vector<8x512xf32>
    %52 = arith.addf %50, %51 : vector<8x512xf32>
    %53 = vector.extract_strided_slice %49 {offsets = [0, 0], sizes = [8, 128], strides = [1, 1]} : vector<8x512xf32> to vector<8x128xf32>
    %cst_25 = arith.constant 5.000000e-01 : f32
    %54 = vector.broadcast %cst_25 : f32 to vector<8x128xf32>
    %55 = arith.mulf %54, %53 : vector<8x128xf32>
    %56 = math.tanh %55 : vector<8x128xf32>
    %cst_26 = arith.constant 1.000000e+00 : f32
    %57 = vector.broadcast %cst_26 : f32 to vector<8x128xf32>
    %58 = arith.addf %56, %57 : vector<8x128xf32>
    %cst_27 = arith.constant 5.000000e-01 : f32
    %59 = vector.broadcast %cst_27 : f32 to vector<8x128xf32>
    %60 = arith.mulf %59, %58 : vector<8x128xf32>
    %61 = vector.extract_strided_slice %49 {offsets = [0, 128], sizes = [8, 128], strides = [1, 1]} : vector<8x512xf32> to vector<8x128xf32>
    %cst_28 = arith.constant 5.000000e-01 : f32
    %62 = vector.broadcast %cst_28 : f32 to vector<8x128xf32>
    %63 = arith.mulf %62, %61 : vector<8x128xf32>
    %64 = math.tanh %63 : vector<8x128xf32>
    %cst_29 = arith.constant 1.000000e+00 : f32
    %65 = vector.broadcast %cst_29 : f32 to vector<8x128xf32>
    %66 = arith.addf %64, %65 : vector<8x128xf32>
    %cst_30 = arith.constant 5.000000e-01 : f32
    %67 = vector.broadcast %cst_30 : f32 to vector<8x128xf32>
    %68 = arith.mulf %67, %66 : vector<8x128xf32>
    %69 = vector.extract_strided_slice %49 {offsets = [0, 256], sizes = [8, 128], strides = [1, 1]} : vector<8x512xf32> to vector<8x128xf32>
    %70 = math.tanh %69 : vector<8x128xf32>
    %71 = vector.extract_strided_slice %49 {offsets = [0, 384], sizes = [8, 128], strides = [1, 1]} : vector<8x512xf32> to vector<8x128xf32>
    %cst_31 = arith.constant 5.000000e-01 : f32
    %72 = vector.broadcast %cst_31 : f32 to vector<8x128xf32>
    %73 = arith.mulf %72, %71 : vector<8x128xf32>
    %74 = math.tanh %73 : vector<8x128xf32>
    %cst_32 = arith.constant 1.000000e+00 : f32
    %75 = vector.broadcast %cst_32 : f32 to vector<8x128xf32>
    %76 = arith.addf %74, %75 : vector<8x128xf32>
    %cst_33 = arith.constant 5.000000e-01 : f32
    %77 = vector.broadcast %cst_33 : f32 to vector<8x128xf32>
    %78 = arith.mulf %77, %76 : vector<8x128xf32>
    %79 = arith.mulf %68, %37 : vector<8x128xf32>
    %80 = arith.mulf %60, %70 : vector<8x128xf32>
    %81 = arith.addf %79, %80 : vector<8x128xf32>
    %82 = math.tanh %81 : vector<8x128xf32>
    %83 = arith.mulf %78, %82 : vector<8x128xf32>
    %84 = vector.extract_strided_slice %52 {offsets = [0, 0], sizes = [8, 128], strides = [1, 1]} : vector<8x512xf32> to vector<8x128xf32>
    %cst_34 = arith.constant 5.000000e-01 : f32
    %85 = vector.broadcast %cst_34 : f32 to vector<8x128xf32>
    %86 = arith.mulf %85, %84 : vector<8x128xf32>
    %87 = math.tanh %86 : vector<8x128xf32>
    %cst_35 = arith.constant 1.000000e+00 : f32
    %88 = vector.broadcast %cst_35 : f32 to vector<8x128xf32>
    %89 = arith.addf %87, %88 : vector<8x128xf32>
    %cst_36 = arith.constant 5.000000e-01 : f32
    %90 = vector.broadcast %cst_36 : f32 to vector<8x128xf32>
    %91 = arith.mulf %90, %89 : vector<8x128xf32>
    %92 = vector.extract_strided_slice %52 {offsets = [0, 128], sizes = [8, 128], strides = [1, 1]} : vector<8x512xf32> to vector<8x128xf32>
    %cst_37 = arith.constant 5.000000e-01 : f32
    %93 = vector.broadcast %cst_37 : f32 to vector<8x128xf32>
    %94 = arith.mulf %93, %92 : vector<8x128xf32>
    %95 = math.tanh %94 : vector<8x128xf32>
    %cst_38 = arith.constant 1.000000e+00 : f32
    %96 = vector.broadcast %cst_38 : f32 to vector<8x128xf32>
    %97 = arith.addf %95, %96 : vector<8x128xf32>
    %cst_39 = arith.constant 5.000000e-01 : f32
    %98 = vector.broadcast %cst_39 : f32 to vector<8x128xf32>
    %99 = arith.mulf %98, %97 : vector<8x128xf32>
    %100 = vector.extract_strided_slice %52 {offsets = [0, 256], sizes = [8, 128], strides = [1, 1]} : vector<8x512xf32> to vector<8x128xf32>
    %101 = math.tanh %100 : vector<8x128xf32>
    %102 = vector.extract_strided_slice %52 {offsets = [0, 384], sizes = [8, 128], strides = [1, 1]} : vector<8x512xf32> to vector<8x128xf32>
    %cst_40 = arith.constant 5.000000e-01 : f32
    %103 = vector.broadcast %cst_40 : f32 to vector<8x128xf32>
    %104 = arith.mulf %103, %102 : vector<8x128xf32>
    %105 = math.tanh %104 : vector<8x128xf32>
    %cst_41 = arith.constant 1.000000e+00 : f32
    %106 = vector.broadcast %cst_41 : f32 to vector<8x128xf32>
    %107 = arith.addf %105, %106 : vector<8x128xf32>
    %cst_42 = arith.constant 5.000000e-01 : f32
    %108 = vector.broadcast %cst_42 : f32 to vector<8x128xf32>
    %109 = arith.mulf %108, %107 : vector<8x128xf32>
    %110 = arith.mulf %99, %7 : vector<8x128xf32>
    %111 = arith.mulf %91, %101 : vector<8x128xf32>
    %112 = arith.addf %110, %111 : vector<8x128xf32>
    %113 = math.tanh %112 : vector<8x128xf32>
    %114 = arith.mulf %109, %113 : vector<8x128xf32>
    %c2_i32 = arith.constant 2 : i32
    %115 = tpu.concatenate %83, %114 in 1 : vector<8x128xf32>, vector<8x128xf32> -> vector<8x256xf32>
    %c0_43 = arith.constant 0 : index
    %c0_44 = arith.constant 0 : index
    %116 = vector.load %arg9[%c0_43, %c0_44] : memref<256x1024xf32, #tpu.memory_space<vmem>>, vector<256x1024xf32>
    %cst_45 = arith.constant dense<0.000000e+00> : vector<8x1024xf32>
    %117 = tpu.matmul %115, %116, %cst_45 {dimension_numbers = #tpu.dot_dimension_numbers<[1], [0], [0], [1], [0, 0, 1, 1], [], []>} : vector<8x256xf32>, vector<256x1024xf32>, vector<8x1024xf32> -> vector<8x1024xf32>
    %c8_i32_46 = arith.constant 8 : i32
    %118 = arith.muli %c2_i32, %c8_i32_46 : i32
    %119 = tpu.assume_multiple %118, 8 : i32
    %120 = arith.index_cast %119 : i32 to index
    %c0_47 = arith.constant 0 : index
    %121 = vector.load %arg8[%120, %c0_47] : memref<64x512xf32, #tpu.memory_space<vmem>>, vector<8x512xf32>
    %122 = vector.extract_strided_slice %117 {offsets = [0, 0], sizes = [8, 512], strides = [1, 1]} : vector<8x1024xf32> to vector<8x512xf32>
    %123 = arith.addf %121, %122 : vector<8x512xf32>
    %124 = vector.extract_strided_slice %117 {offsets = [0, 512], sizes = [8, 512], strides = [1, 1]} : vector<8x1024xf32> to vector<8x512xf32>
    %125 = vector.broadcast %40 : vector<1x512xf32> to vector<8x512xf32>
    %126 = arith.addf %124, %125 : vector<8x512xf32>
    %127 = vector.extract_strided_slice %123 {offsets = [0, 0], sizes = [8, 128], strides = [1, 1]} : vector<8x512xf32> to vector<8x128xf32>
    %cst_48 = arith.constant 5.000000e-01 : f32
    %128 = vector.broadcast %cst_48 : f32 to vector<8x128xf32>
    %129 = arith.mulf %128, %127 : vector<8x128xf32>
    %130 = math.tanh %129 : vector<8x128xf32>
    %cst_49 = arith.constant 1.000000e+00 : f32
    %131 = vector.broadcast %cst_49 : f32 to vector<8x128xf32>
    %132 = arith.addf %130, %131 : vector<8x128xf32>
    %cst_50 = arith.constant 5.000000e-01 : f32
    %133 = vector.broadcast %cst_50 : f32 to vector<8x128xf32>
    %134 = arith.mulf %133, %132 : vector<8x128xf32>
    %135 = vector.extract_strided_slice %123 {offsets = [0, 128], sizes = [8, 128], strides = [1, 1]} : vector<8x512xf32> to vector<8x128xf32>
    %cst_51 = arith.constant 5.000000e-01 : f32
    %136 = vector.broadcast %cst_51 : f32 to vector<8x128xf32>
    %137 = arith.mulf %136, %135 : vector<8x128xf32>
    %138 = math.tanh %137 : vector<8x128xf32>
    %cst_52 = arith.constant 1.000000e+00 : f32
    %139 = vector.broadcast %cst_52 : f32 to vector<8x128xf32>
    %140 = arith.addf %138, %139 : vector<8x128xf32>
    %cst_53 = arith.constant 5.000000e-01 : f32
    %141 = vector.broadcast %cst_53 : f32 to vector<8x128xf32>
    %142 = arith.mulf %141, %140 : vector<8x128xf32>
    %143 = vector.extract_strided_slice %123 {offsets = [0, 256], sizes = [8, 128], strides = [1, 1]} : vector<8x512xf32> to vector<8x128xf32>
    %144 = math.tanh %143 : vector<8x128xf32>
    %145 = vector.extract_strided_slice %123 {offsets = [0, 384], sizes = [8, 128], strides = [1, 1]} : vector<8x512xf32> to vector<8x128xf32>
    %cst_54 = arith.constant 5.000000e-01 : f32
    %146 = vector.broadcast %cst_54 : f32 to vector<8x128xf32>
    %147 = arith.mulf %146, %145 : vector<8x128xf32>
    %148 = math.tanh %147 : vector<8x128xf32>
    %cst_55 = arith.constant 1.000000e+00 : f32
    %149 = vector.broadcast %cst_55 : f32 to vector<8x128xf32>
    %150 = arith.addf %148, %149 : vector<8x128xf32>
    %cst_56 = arith.constant 5.000000e-01 : f32
    %151 = vector.broadcast %cst_56 : f32 to vector<8x128xf32>
    %152 = arith.mulf %151, %150 : vector<8x128xf32>
    %153 = arith.mulf %142, %81 : vector<8x128xf32>
    %154 = arith.mulf %134, %144 : vector<8x128xf32>
    %155 = arith.addf %153, %154 : vector<8x128xf32>
    %156 = math.tanh %155 : vector<8x128xf32>
    %157 = arith.mulf %152, %156 : vector<8x128xf32>
    %158 = vector.extract_strided_slice %126 {offsets = [0, 0], sizes = [8, 128], strides = [1, 1]} : vector<8x512xf32> to vector<8x128xf32>
    %cst_57 = arith.constant 5.000000e-01 : f32
    %159 = vector.broadcast %cst_57 : f32 to vector<8x128xf32>
    %160 = arith.mulf %159, %158 : vector<8x128xf32>
    %161 = math.tanh %160 : vector<8x128xf32>
    %cst_58 = arith.constant 1.000000e+00 : f32
    %162 = vector.broadcast %cst_58 : f32 to vector<8x128xf32>
    %163 = arith.addf %161, %162 : vector<8x128xf32>
    %cst_59 = arith.constant 5.000000e-01 : f32
    %164 = vector.broadcast %cst_59 : f32 to vector<8x128xf32>
    %165 = arith.mulf %164, %163 : vector<8x128xf32>
    %166 = vector.extract_strided_slice %126 {offsets = [0, 128], sizes = [8, 128], strides = [1, 1]} : vector<8x512xf32> to vector<8x128xf32>
    %cst_60 = arith.constant 5.000000e-01 : f32
    %167 = vector.broadcast %cst_60 : f32 to vector<8x128xf32>
    %168 = arith.mulf %167, %166 : vector<8x128xf32>
    %169 = math.tanh %168 : vector<8x128xf32>
    %cst_61 = arith.constant 1.000000e+00 : f32
    %170 = vector.broadcast %cst_61 : f32 to vector<8x128xf32>
    %171 = arith.addf %169, %170 : vector<8x128xf32>
    %cst_62 = arith.constant 5.000000e-01 : f32
    %172 = vector.broadcast %cst_62 : f32 to vector<8x128xf32>
    %173 = arith.mulf %172, %171 : vector<8x128xf32>
    %174 = vector.extract_strided_slice %126 {offsets = [0, 256], sizes = [8, 128], strides = [1, 1]} : vector<8x512xf32> to vector<8x128xf32>
    %175 = math.tanh %174 : vector<8x128xf32>
    %176 = vector.extract_strided_slice %126 {offsets = [0, 384], sizes = [8, 128], strides = [1, 1]} : vector<8x512xf32> to vector<8x128xf32>
    %cst_63 = arith.constant 5.000000e-01 : f32
    %177 = vector.broadcast %cst_63 : f32 to vector<8x128xf32>
    %178 = arith.mulf %177, %176 : vector<8x128xf32>
    %179 = math.tanh %178 : vector<8x128xf32>
    %cst_64 = arith.constant 1.000000e+00 : f32
    %180 = vector.broadcast %cst_64 : f32 to vector<8x128xf32>
    %181 = arith.addf %179, %180 : vector<8x128xf32>
    %cst_65 = arith.constant 5.000000e-01 : f32
    %182 = vector.broadcast %cst_65 : f32 to vector<8x128xf32>
    %183 = arith.mulf %182, %181 : vector<8x128xf32>
    %184 = arith.mulf %173, %112 : vector<8x128xf32>
    %185 = arith.mulf %165, %175 : vector<8x128xf32>
    %186 = arith.addf %184, %185 : vector<8x128xf32>
    %187 = math.tanh %186 : vector<8x128xf32>
    %188 = arith.mulf %183, %187 : vector<8x128xf32>
    %c3_i32 = arith.constant 3 : i32
    %189 = tpu.concatenate %157, %188 in 1 : vector<8x128xf32>, vector<8x128xf32> -> vector<8x256xf32>
    %c0_66 = arith.constant 0 : index
    %c0_67 = arith.constant 0 : index
    %190 = vector.load %arg9[%c0_66, %c0_67] : memref<256x1024xf32, #tpu.memory_space<vmem>>, vector<256x1024xf32>
    %cst_68 = arith.constant dense<0.000000e+00> : vector<8x1024xf32>
    %191 = tpu.matmul %189, %190, %cst_68 {dimension_numbers = #tpu.dot_dimension_numbers<[1], [0], [0], [1], [0, 0, 1, 1], [], []>} : vector<8x256xf32>, vector<256x1024xf32>, vector<8x1024xf32> -> vector<8x1024xf32>
    %c8_i32_69 = arith.constant 8 : i32
    %192 = arith.muli %c3_i32, %c8_i32_69 : i32
    %193 = tpu.assume_multiple %192, 8 : i32
    %194 = arith.index_cast %193 : i32 to index
    %c0_70 = arith.constant 0 : index
    %195 = vector.load %arg8[%194, %c0_70] : memref<64x512xf32, #tpu.memory_space<vmem>>, vector<8x512xf32>
    %196 = vector.extract_strided_slice %191 {offsets = [0, 0], sizes = [8, 512], strides = [1, 1]} : vector<8x1024xf32> to vector<8x512xf32>
    %197 = arith.addf %195, %196 : vector<8x512xf32>
    %198 = vector.extract_strided_slice %191 {offsets = [0, 512], sizes = [8, 512], strides = [1, 1]} : vector<8x1024xf32> to vector<8x512xf32>
    %199 = vector.broadcast %40 : vector<1x512xf32> to vector<8x512xf32>
    %200 = arith.addf %198, %199 : vector<8x512xf32>
    %201 = vector.extract_strided_slice %197 {offsets = [0, 0], sizes = [8, 128], strides = [1, 1]} : vector<8x512xf32> to vector<8x128xf32>
    %cst_71 = arith.constant 5.000000e-01 : f32
    %202 = vector.broadcast %cst_71 : f32 to vector<8x128xf32>
    %203 = arith.mulf %202, %201 : vector<8x128xf32>
    %204 = math.tanh %203 : vector<8x128xf32>
    %cst_72 = arith.constant 1.000000e+00 : f32
    %205 = vector.broadcast %cst_72 : f32 to vector<8x128xf32>
    %206 = arith.addf %204, %205 : vector<8x128xf32>
    %cst_73 = arith.constant 5.000000e-01 : f32
    %207 = vector.broadcast %cst_73 : f32 to vector<8x128xf32>
    %208 = arith.mulf %207, %206 : vector<8x128xf32>
    %209 = vector.extract_strided_slice %197 {offsets = [0, 128], sizes = [8, 128], strides = [1, 1]} : vector<8x512xf32> to vector<8x128xf32>
    %cst_74 = arith.constant 5.000000e-01 : f32
    %210 = vector.broadcast %cst_74 : f32 to vector<8x128xf32>
    %211 = arith.mulf %210, %209 : vector<8x128xf32>
    %212 = math.tanh %211 : vector<8x128xf32>
    %cst_75 = arith.constant 1.000000e+00 : f32
    %213 = vector.broadcast %cst_75 : f32 to vector<8x128xf32>
    %214 = arith.addf %212, %213 : vector<8x128xf32>
    %cst_76 = arith.constant 5.000000e-01 : f32
    %215 = vector.broadcast %cst_76 : f32 to vector<8x128xf32>
    %216 = arith.mulf %215, %214 : vector<8x128xf32>
    %217 = vector.extract_strided_slice %197 {offsets = [0, 256], sizes = [8, 128], strides = [1, 1]} : vector<8x512xf32> to vector<8x128xf32>
    %218 = math.tanh %217 : vector<8x128xf32>
    %219 = vector.extract_strided_slice %197 {offsets = [0, 384], sizes = [8, 128], strides = [1, 1]} : vector<8x512xf32> to vector<8x128xf32>
    %cst_77 = arith.constant 5.000000e-01 : f32
    %220 = vector.broadcast %cst_77 : f32 to vector<8x128xf32>
    %221 = arith.mulf %220, %219 : vector<8x128xf32>
    %222 = math.tanh %221 : vector<8x128xf32>
    %cst_78 = arith.constant 1.000000e+00 : f32
    %223 = vector.broadcast %cst_78 : f32 to vector<8x128xf32>
    %224 = arith.addf %222, %223 : vector<8x128xf32>
    %cst_79 = arith.constant 5.000000e-01 : f32
    %225 = vector.broadcast %cst_79 : f32 to vector<8x128xf32>
    %226 = arith.mulf %225, %224 : vector<8x128xf32>
    %227 = arith.mulf %216, %155 : vector<8x128xf32>
    %228 = arith.mulf %208, %218 : vector<8x128xf32>
    %229 = arith.addf %227, %228 : vector<8x128xf32>
    %230 = math.tanh %229 : vector<8x128xf32>
    %231 = arith.mulf %226, %230 : vector<8x128xf32>
    %232 = vector.extract_strided_slice %200 {offsets = [0, 0], sizes = [8, 128], strides = [1, 1]} : vector<8x512xf32> to vector<8x128xf32>
    %cst_80 = arith.constant 5.000000e-01 : f32
    %233 = vector.broadcast %cst_80 : f32 to vector<8x128xf32>
    %234 = arith.mulf %233, %232 : vector<8x128xf32>
    %235 = math.tanh %234 : vector<8x128xf32>
    %cst_81 = arith.constant 1.000000e+00 : f32
    %236 = vector.broadcast %cst_81 : f32 to vector<8x128xf32>
    %237 = arith.addf %235, %236 : vector<8x128xf32>
    %cst_82 = arith.constant 5.000000e-01 : f32
    %238 = vector.broadcast %cst_82 : f32 to vector<8x128xf32>
    %239 = arith.mulf %238, %237 : vector<8x128xf32>
    %240 = vector.extract_strided_slice %200 {offsets = [0, 128], sizes = [8, 128], strides = [1, 1]} : vector<8x512xf32> to vector<8x128xf32>
    %cst_83 = arith.constant 5.000000e-01 : f32
    %241 = vector.broadcast %cst_83 : f32 to vector<8x128xf32>
    %242 = arith.mulf %241, %240 : vector<8x128xf32>
    %243 = math.tanh %242 : vector<8x128xf32>
    %cst_84 = arith.constant 1.000000e+00 : f32
    %244 = vector.broadcast %cst_84 : f32 to vector<8x128xf32>
    %245 = arith.addf %243, %244 : vector<8x128xf32>
    %cst_85 = arith.constant 5.000000e-01 : f32
    %246 = vector.broadcast %cst_85 : f32 to vector<8x128xf32>
    %247 = arith.mulf %246, %245 : vector<8x128xf32>
    %248 = vector.extract_strided_slice %200 {offsets = [0, 256], sizes = [8, 128], strides = [1, 1]} : vector<8x512xf32> to vector<8x128xf32>
    %249 = math.tanh %248 : vector<8x128xf32>
    %250 = vector.extract_strided_slice %200 {offsets = [0, 384], sizes = [8, 128], strides = [1, 1]} : vector<8x512xf32> to vector<8x128xf32>
    %cst_86 = arith.constant 5.000000e-01 : f32
    %251 = vector.broadcast %cst_86 : f32 to vector<8x128xf32>
    %252 = arith.mulf %251, %250 : vector<8x128xf32>
    %253 = math.tanh %252 : vector<8x128xf32>
    %cst_87 = arith.constant 1.000000e+00 : f32
    %254 = vector.broadcast %cst_87 : f32 to vector<8x128xf32>
    %255 = arith.addf %253, %254 : vector<8x128xf32>
    %cst_88 = arith.constant 5.000000e-01 : f32
    %256 = vector.broadcast %cst_88 : f32 to vector<8x128xf32>
    %257 = arith.mulf %256, %255 : vector<8x128xf32>
    %258 = arith.mulf %247, %186 : vector<8x128xf32>
    %259 = arith.mulf %239, %249 : vector<8x128xf32>
    %260 = arith.addf %258, %259 : vector<8x128xf32>
    %261 = math.tanh %260 : vector<8x128xf32>
    %262 = arith.mulf %257, %261 : vector<8x128xf32>
    %c4_i32 = arith.constant 4 : i32
    %263 = tpu.concatenate %231, %262 in 1 : vector<8x128xf32>, vector<8x128xf32> -> vector<8x256xf32>
    %c0_89 = arith.constant 0 : index
    %c0_90 = arith.constant 0 : index
    %264 = vector.load %arg9[%c0_89, %c0_90] : memref<256x1024xf32, #tpu.memory_space<vmem>>, vector<256x1024xf32>
    %cst_91 = arith.constant dense<0.000000e+00> : vector<8x1024xf32>
    %265 = tpu.matmul %263, %264, %cst_91 {dimension_numbers = #tpu.dot_dimension_numbers<[1], [0], [0], [1], [0, 0, 1, 1], [], []>} : vector<8x256xf32>, vector<256x1024xf32>, vector<8x1024xf32> -> vector<8x1024xf32>
    %c8_i32_92 = arith.constant 8 : i32
    %266 = arith.muli %c4_i32, %c8_i32_92 : i32
    %267 = tpu.assume_multiple %266, 8 : i32
    %268 = arith.index_cast %267 : i32 to index
    %c0_93 = arith.constant 0 : index
    %269 = vector.load %arg8[%268, %c0_93] : memref<64x512xf32, #tpu.memory_space<vmem>>, vector<8x512xf32>
    %270 = vector.extract_strided_slice %265 {offsets = [0, 0], sizes = [8, 512], strides = [1, 1]} : vector<8x1024xf32> to vector<8x512xf32>
    %271 = arith.addf %269, %270 : vector<8x512xf32>
    %272 = vector.extract_strided_slice %265 {offsets = [0, 512], sizes = [8, 512], strides = [1, 1]} : vector<8x1024xf32> to vector<8x512xf32>
    %273 = vector.broadcast %40 : vector<1x512xf32> to vector<8x512xf32>
    %274 = arith.addf %272, %273 : vector<8x512xf32>
    %275 = vector.extract_strided_slice %271 {offsets = [0, 0], sizes = [8, 128], strides = [1, 1]} : vector<8x512xf32> to vector<8x128xf32>
    %cst_94 = arith.constant 5.000000e-01 : f32
    %276 = vector.broadcast %cst_94 : f32 to vector<8x128xf32>
    %277 = arith.mulf %276, %275 : vector<8x128xf32>
    %278 = math.tanh %277 : vector<8x128xf32>
    %cst_95 = arith.constant 1.000000e+00 : f32
    %279 = vector.broadcast %cst_95 : f32 to vector<8x128xf32>
    %280 = arith.addf %278, %279 : vector<8x128xf32>
    %cst_96 = arith.constant 5.000000e-01 : f32
    %281 = vector.broadcast %cst_96 : f32 to vector<8x128xf32>
    %282 = arith.mulf %281, %280 : vector<8x128xf32>
    %283 = vector.extract_strided_slice %271 {offsets = [0, 128], sizes = [8, 128], strides = [1, 1]} : vector<8x512xf32> to vector<8x128xf32>
    %cst_97 = arith.constant 5.000000e-01 : f32
    %284 = vector.broadcast %cst_97 : f32 to vector<8x128xf32>
    %285 = arith.mulf %284, %283 : vector<8x128xf32>
    %286 = math.tanh %285 : vector<8x128xf32>
    %cst_98 = arith.constant 1.000000e+00 : f32
    %287 = vector.broadcast %cst_98 : f32 to vector<8x128xf32>
    %288 = arith.addf %286, %287 : vector<8x128xf32>
    %cst_99 = arith.constant 5.000000e-01 : f32
    %289 = vector.broadcast %cst_99 : f32 to vector<8x128xf32>
    %290 = arith.mulf %289, %288 : vector<8x128xf32>
    %291 = vector.extract_strided_slice %271 {offsets = [0, 256], sizes = [8, 128], strides = [1, 1]} : vector<8x512xf32> to vector<8x128xf32>
    %292 = math.tanh %291 : vector<8x128xf32>
    %293 = vector.extract_strided_slice %271 {offsets = [0, 384], sizes = [8, 128], strides = [1, 1]} : vector<8x512xf32> to vector<8x128xf32>
    %cst_100 = arith.constant 5.000000e-01 : f32
    %294 = vector.broadcast %cst_100 : f32 to vector<8x128xf32>
    %295 = arith.mulf %294, %293 : vector<8x128xf32>
    %296 = math.tanh %295 : vector<8x128xf32>
    %cst_101 = arith.constant 1.000000e+00 : f32
    %297 = vector.broadcast %cst_101 : f32 to vector<8x128xf32>
    %298 = arith.addf %296, %297 : vector<8x128xf32>
    %cst_102 = arith.constant 5.000000e-01 : f32
    %299 = vector.broadcast %cst_102 : f32 to vector<8x128xf32>
    %300 = arith.mulf %299, %298 : vector<8x128xf32>
    %301 = arith.mulf %290, %229 : vector<8x128xf32>
    %302 = arith.mulf %282, %292 : vector<8x128xf32>
    %303 = arith.addf %301, %302 : vector<8x128xf32>
    %304 = math.tanh %303 : vector<8x128xf32>
    %305 = arith.mulf %300, %304 : vector<8x128xf32>
    %306 = vector.extract_strided_slice %274 {offsets = [0, 0], sizes = [8, 128], strides = [1, 1]} : vector<8x512xf32> to vector<8x128xf32>
    %cst_103 = arith.constant 5.000000e-01 : f32
    %307 = vector.broadcast %cst_103 : f32 to vector<8x128xf32>
    %308 = arith.mulf %307, %306 : vector<8x128xf32>
    %309 = math.tanh %308 : vector<8x128xf32>
    %cst_104 = arith.constant 1.000000e+00 : f32
    %310 = vector.broadcast %cst_104 : f32 to vector<8x128xf32>
    %311 = arith.addf %309, %310 : vector<8x128xf32>
    %cst_105 = arith.constant 5.000000e-01 : f32
    %312 = vector.broadcast %cst_105 : f32 to vector<8x128xf32>
    %313 = arith.mulf %312, %311 : vector<8x128xf32>
    %314 = vector.extract_strided_slice %274 {offsets = [0, 128], sizes = [8, 128], strides = [1, 1]} : vector<8x512xf32> to vector<8x128xf32>
    %cst_106 = arith.constant 5.000000e-01 : f32
    %315 = vector.broadcast %cst_106 : f32 to vector<8x128xf32>
    %316 = arith.mulf %315, %314 : vector<8x128xf32>
    %317 = math.tanh %316 : vector<8x128xf32>
    %cst_107 = arith.constant 1.000000e+00 : f32
    %318 = vector.broadcast %cst_107 : f32 to vector<8x128xf32>
    %319 = arith.addf %317, %318 : vector<8x128xf32>
    %cst_108 = arith.constant 5.000000e-01 : f32
    %320 = vector.broadcast %cst_108 : f32 to vector<8x128xf32>
    %321 = arith.mulf %320, %319 : vector<8x128xf32>
    %322 = vector.extract_strided_slice %274 {offsets = [0, 256], sizes = [8, 128], strides = [1, 1]} : vector<8x512xf32> to vector<8x128xf32>
    %323 = math.tanh %322 : vector<8x128xf32>
    %324 = vector.extract_strided_slice %274 {offsets = [0, 384], sizes = [8, 128], strides = [1, 1]} : vector<8x512xf32> to vector<8x128xf32>
    %cst_109 = arith.constant 5.000000e-01 : f32
    %325 = vector.broadcast %cst_109 : f32 to vector<8x128xf32>
    %326 = arith.mulf %325, %324 : vector<8x128xf32>
    %327 = math.tanh %326 : vector<8x128xf32>
    %cst_110 = arith.constant 1.000000e+00 : f32
    %328 = vector.broadcast %cst_110 : f32 to vector<8x128xf32>
    %329 = arith.addf %327, %328 : vector<8x128xf32>
    %cst_111 = arith.constant 5.000000e-01 : f32
    %330 = vector.broadcast %cst_111 : f32 to vector<8x128xf32>
    %331 = arith.mulf %330, %329 : vector<8x128xf32>
    %332 = arith.mulf %321, %260 : vector<8x128xf32>
    %333 = arith.mulf %313, %323 : vector<8x128xf32>
    %334 = arith.addf %332, %333 : vector<8x128xf32>
    %335 = math.tanh %334 : vector<8x128xf32>
    %336 = arith.mulf %331, %335 : vector<8x128xf32>
    %c5_i32 = arith.constant 5 : i32
    %337 = tpu.concatenate %305, %336 in 1 : vector<8x128xf32>, vector<8x128xf32> -> vector<8x256xf32>
    %c0_112 = arith.constant 0 : index
    %c0_113 = arith.constant 0 : index
    %338 = vector.load %arg9[%c0_112, %c0_113] : memref<256x1024xf32, #tpu.memory_space<vmem>>, vector<256x1024xf32>
    %cst_114 = arith.constant dense<0.000000e+00> : vector<8x1024xf32>
    %339 = tpu.matmul %337, %338, %cst_114 {dimension_numbers = #tpu.dot_dimension_numbers<[1], [0], [0], [1], [0, 0, 1, 1], [], []>} : vector<8x256xf32>, vector<256x1024xf32>, vector<8x1024xf32> -> vector<8x1024xf32>
    %c8_i32_115 = arith.constant 8 : i32
    %340 = arith.muli %c5_i32, %c8_i32_115 : i32
    %341 = tpu.assume_multiple %340, 8 : i32
    %342 = arith.index_cast %341 : i32 to index
    %c0_116 = arith.constant 0 : index
    %343 = vector.load %arg8[%342, %c0_116] : memref<64x512xf32, #tpu.memory_space<vmem>>, vector<8x512xf32>
    %344 = vector.extract_strided_slice %339 {offsets = [0, 0], sizes = [8, 512], strides = [1, 1]} : vector<8x1024xf32> to vector<8x512xf32>
    %345 = arith.addf %343, %344 : vector<8x512xf32>
    %346 = vector.extract_strided_slice %339 {offsets = [0, 512], sizes = [8, 512], strides = [1, 1]} : vector<8x1024xf32> to vector<8x512xf32>
    %347 = vector.broadcast %40 : vector<1x512xf32> to vector<8x512xf32>
    %348 = arith.addf %346, %347 : vector<8x512xf32>
    %349 = vector.extract_strided_slice %345 {offsets = [0, 0], sizes = [8, 128], strides = [1, 1]} : vector<8x512xf32> to vector<8x128xf32>
    %cst_117 = arith.constant 5.000000e-01 : f32
    %350 = vector.broadcast %cst_117 : f32 to vector<8x128xf32>
    %351 = arith.mulf %350, %349 : vector<8x128xf32>
    %352 = math.tanh %351 : vector<8x128xf32>
    %cst_118 = arith.constant 1.000000e+00 : f32
    %353 = vector.broadcast %cst_118 : f32 to vector<8x128xf32>
    %354 = arith.addf %352, %353 : vector<8x128xf32>
    %cst_119 = arith.constant 5.000000e-01 : f32
    %355 = vector.broadcast %cst_119 : f32 to vector<8x128xf32>
    %356 = arith.mulf %355, %354 : vector<8x128xf32>
    %357 = vector.extract_strided_slice %345 {offsets = [0, 128], sizes = [8, 128], strides = [1, 1]} : vector<8x512xf32> to vector<8x128xf32>
    %cst_120 = arith.constant 5.000000e-01 : f32
    %358 = vector.broadcast %cst_120 : f32 to vector<8x128xf32>
    %359 = arith.mulf %358, %357 : vector<8x128xf32>
    %360 = math.tanh %359 : vector<8x128xf32>
    %cst_121 = arith.constant 1.000000e+00 : f32
    %361 = vector.broadcast %cst_121 : f32 to vector<8x128xf32>
    %362 = arith.addf %360, %361 : vector<8x128xf32>
    %cst_122 = arith.constant 5.000000e-01 : f32
    %363 = vector.broadcast %cst_122 : f32 to vector<8x128xf32>
    %364 = arith.mulf %363, %362 : vector<8x128xf32>
    %365 = vector.extract_strided_slice %345 {offsets = [0, 256], sizes = [8, 128], strides = [1, 1]} : vector<8x512xf32> to vector<8x128xf32>
    %366 = math.tanh %365 : vector<8x128xf32>
    %367 = vector.extract_strided_slice %345 {offsets = [0, 384], sizes = [8, 128], strides = [1, 1]} : vector<8x512xf32> to vector<8x128xf32>
    %cst_123 = arith.constant 5.000000e-01 : f32
    %368 = vector.broadcast %cst_123 : f32 to vector<8x128xf32>
    %369 = arith.mulf %368, %367 : vector<8x128xf32>
    %370 = math.tanh %369 : vector<8x128xf32>
    %cst_124 = arith.constant 1.000000e+00 : f32
    %371 = vector.broadcast %cst_124 : f32 to vector<8x128xf32>
    %372 = arith.addf %370, %371 : vector<8x128xf32>
    %cst_125 = arith.constant 5.000000e-01 : f32
    %373 = vector.broadcast %cst_125 : f32 to vector<8x128xf32>
    %374 = arith.mulf %373, %372 : vector<8x128xf32>
    %375 = arith.mulf %364, %303 : vector<8x128xf32>
    %376 = arith.mulf %356, %366 : vector<8x128xf32>
    %377 = arith.addf %375, %376 : vector<8x128xf32>
    %378 = math.tanh %377 : vector<8x128xf32>
    %379 = arith.mulf %374, %378 : vector<8x128xf32>
    %380 = vector.extract_strided_slice %348 {offsets = [0, 0], sizes = [8, 128], strides = [1, 1]} : vector<8x512xf32> to vector<8x128xf32>
    %cst_126 = arith.constant 5.000000e-01 : f32
    %381 = vector.broadcast %cst_126 : f32 to vector<8x128xf32>
    %382 = arith.mulf %381, %380 : vector<8x128xf32>
    %383 = math.tanh %382 : vector<8x128xf32>
    %cst_127 = arith.constant 1.000000e+00 : f32
    %384 = vector.broadcast %cst_127 : f32 to vector<8x128xf32>
    %385 = arith.addf %383, %384 : vector<8x128xf32>
    %cst_128 = arith.constant 5.000000e-01 : f32
    %386 = vector.broadcast %cst_128 : f32 to vector<8x128xf32>
    %387 = arith.mulf %386, %385 : vector<8x128xf32>
    %388 = vector.extract_strided_slice %348 {offsets = [0, 128], sizes = [8, 128], strides = [1, 1]} : vector<8x512xf32> to vector<8x128xf32>
    %cst_129 = arith.constant 5.000000e-01 : f32
    %389 = vector.broadcast %cst_129 : f32 to vector<8x128xf32>
    %390 = arith.mulf %389, %388 : vector<8x128xf32>
    %391 = math.tanh %390 : vector<8x128xf32>
    %cst_130 = arith.constant 1.000000e+00 : f32
    %392 = vector.broadcast %cst_130 : f32 to vector<8x128xf32>
    %393 = arith.addf %391, %392 : vector<8x128xf32>
    %cst_131 = arith.constant 5.000000e-01 : f32
    %394 = vector.broadcast %cst_131 : f32 to vector<8x128xf32>
    %395 = arith.mulf %394, %393 : vector<8x128xf32>
    %396 = vector.extract_strided_slice %348 {offsets = [0, 256], sizes = [8, 128], strides = [1, 1]} : vector<8x512xf32> to vector<8x128xf32>
    %397 = math.tanh %396 : vector<8x128xf32>
    %398 = vector.extract_strided_slice %348 {offsets = [0, 384], sizes = [8, 128], strides = [1, 1]} : vector<8x512xf32> to vector<8x128xf32>
    %cst_132 = arith.constant 5.000000e-01 : f32
    %399 = vector.broadcast %cst_132 : f32 to vector<8x128xf32>
    %400 = arith.mulf %399, %398 : vector<8x128xf32>
    %401 = math.tanh %400 : vector<8x128xf32>
    %cst_133 = arith.constant 1.000000e+00 : f32
    %402 = vector.broadcast %cst_133 : f32 to vector<8x128xf32>
    %403 = arith.addf %401, %402 : vector<8x128xf32>
    %cst_134 = arith.constant 5.000000e-01 : f32
    %404 = vector.broadcast %cst_134 : f32 to vector<8x128xf32>
    %405 = arith.mulf %404, %403 : vector<8x128xf32>
    %406 = arith.mulf %395, %334 : vector<8x128xf32>
    %407 = arith.mulf %387, %397 : vector<8x128xf32>
    %408 = arith.addf %406, %407 : vector<8x128xf32>
    %409 = math.tanh %408 : vector<8x128xf32>
    %410 = arith.mulf %405, %409 : vector<8x128xf32>
    %c6_i32 = arith.constant 6 : i32
    %411 = tpu.concatenate %379, %410 in 1 : vector<8x128xf32>, vector<8x128xf32> -> vector<8x256xf32>
    %c0_135 = arith.constant 0 : index
    %c0_136 = arith.constant 0 : index
    %412 = vector.load %arg9[%c0_135, %c0_136] : memref<256x1024xf32, #tpu.memory_space<vmem>>, vector<256x1024xf32>
    %cst_137 = arith.constant dense<0.000000e+00> : vector<8x1024xf32>
    %413 = tpu.matmul %411, %412, %cst_137 {dimension_numbers = #tpu.dot_dimension_numbers<[1], [0], [0], [1], [0, 0, 1, 1], [], []>} : vector<8x256xf32>, vector<256x1024xf32>, vector<8x1024xf32> -> vector<8x1024xf32>
    %c8_i32_138 = arith.constant 8 : i32
    %414 = arith.muli %c6_i32, %c8_i32_138 : i32
    %415 = tpu.assume_multiple %414, 8 : i32
    %416 = arith.index_cast %415 : i32 to index
    %c0_139 = arith.constant 0 : index
    %417 = vector.load %arg8[%416, %c0_139] : memref<64x512xf32, #tpu.memory_space<vmem>>, vector<8x512xf32>
    %418 = vector.extract_strided_slice %413 {offsets = [0, 0], sizes = [8, 512], strides = [1, 1]} : vector<8x1024xf32> to vector<8x512xf32>
    %419 = arith.addf %417, %418 : vector<8x512xf32>
    %420 = vector.extract_strided_slice %413 {offsets = [0, 512], sizes = [8, 512], strides = [1, 1]} : vector<8x1024xf32> to vector<8x512xf32>
    %421 = vector.broadcast %40 : vector<1x512xf32> to vector<8x512xf32>
    %422 = arith.addf %420, %421 : vector<8x512xf32>
    %423 = vector.extract_strided_slice %419 {offsets = [0, 0], sizes = [8, 128], strides = [1, 1]} : vector<8x512xf32> to vector<8x128xf32>
    %cst_140 = arith.constant 5.000000e-01 : f32
    %424 = vector.broadcast %cst_140 : f32 to vector<8x128xf32>
    %425 = arith.mulf %424, %423 : vector<8x128xf32>
    %426 = math.tanh %425 : vector<8x128xf32>
    %cst_141 = arith.constant 1.000000e+00 : f32
    %427 = vector.broadcast %cst_141 : f32 to vector<8x128xf32>
    %428 = arith.addf %426, %427 : vector<8x128xf32>
    %cst_142 = arith.constant 5.000000e-01 : f32
    %429 = vector.broadcast %cst_142 : f32 to vector<8x128xf32>
    %430 = arith.mulf %429, %428 : vector<8x128xf32>
    %431 = vector.extract_strided_slice %419 {offsets = [0, 128], sizes = [8, 128], strides = [1, 1]} : vector<8x512xf32> to vector<8x128xf32>
    %cst_143 = arith.constant 5.000000e-01 : f32
    %432 = vector.broadcast %cst_143 : f32 to vector<8x128xf32>
    %433 = arith.mulf %432, %431 : vector<8x128xf32>
    %434 = math.tanh %433 : vector<8x128xf32>
    %cst_144 = arith.constant 1.000000e+00 : f32
    %435 = vector.broadcast %cst_144 : f32 to vector<8x128xf32>
    %436 = arith.addf %434, %435 : vector<8x128xf32>
    %cst_145 = arith.constant 5.000000e-01 : f32
    %437 = vector.broadcast %cst_145 : f32 to vector<8x128xf32>
    %438 = arith.mulf %437, %436 : vector<8x128xf32>
    %439 = vector.extract_strided_slice %419 {offsets = [0, 256], sizes = [8, 128], strides = [1, 1]} : vector<8x512xf32> to vector<8x128xf32>
    %440 = math.tanh %439 : vector<8x128xf32>
    %441 = vector.extract_strided_slice %419 {offsets = [0, 384], sizes = [8, 128], strides = [1, 1]} : vector<8x512xf32> to vector<8x128xf32>
    %cst_146 = arith.constant 5.000000e-01 : f32
    %442 = vector.broadcast %cst_146 : f32 to vector<8x128xf32>
    %443 = arith.mulf %442, %441 : vector<8x128xf32>
    %444 = math.tanh %443 : vector<8x128xf32>
    %cst_147 = arith.constant 1.000000e+00 : f32
    %445 = vector.broadcast %cst_147 : f32 to vector<8x128xf32>
    %446 = arith.addf %444, %445 : vector<8x128xf32>
    %cst_148 = arith.constant 5.000000e-01 : f32
    %447 = vector.broadcast %cst_148 : f32 to vector<8x128xf32>
    %448 = arith.mulf %447, %446 : vector<8x128xf32>
    %449 = arith.mulf %438, %377 : vector<8x128xf32>
    %450 = arith.mulf %430, %440 : vector<8x128xf32>
    %451 = arith.addf %449, %450 : vector<8x128xf32>
    %452 = math.tanh %451 : vector<8x128xf32>
    %453 = arith.mulf %448, %452 : vector<8x128xf32>
    %454 = vector.extract_strided_slice %422 {offsets = [0, 0], sizes = [8, 128], strides = [1, 1]} : vector<8x512xf32> to vector<8x128xf32>
    %cst_149 = arith.constant 5.000000e-01 : f32
    %455 = vector.broadcast %cst_149 : f32 to vector<8x128xf32>
    %456 = arith.mulf %455, %454 : vector<8x128xf32>
    %457 = math.tanh %456 : vector<8x128xf32>
    %cst_150 = arith.constant 1.000000e+00 : f32
    %458 = vector.broadcast %cst_150 : f32 to vector<8x128xf32>
    %459 = arith.addf %457, %458 : vector<8x128xf32>
    %cst_151 = arith.constant 5.000000e-01 : f32
    %460 = vector.broadcast %cst_151 : f32 to vector<8x128xf32>
    %461 = arith.mulf %460, %459 : vector<8x128xf32>
    %462 = vector.extract_strided_slice %422 {offsets = [0, 128], sizes = [8, 128], strides = [1, 1]} : vector<8x512xf32> to vector<8x128xf32>
    %cst_152 = arith.constant 5.000000e-01 : f32
    %463 = vector.broadcast %cst_152 : f32 to vector<8x128xf32>
    %464 = arith.mulf %463, %462 : vector<8x128xf32>
    %465 = math.tanh %464 : vector<8x128xf32>
    %cst_153 = arith.constant 1.000000e+00 : f32
    %466 = vector.broadcast %cst_153 : f32 to vector<8x128xf32>
    %467 = arith.addf %465, %466 : vector<8x128xf32>
    %cst_154 = arith.constant 5.000000e-01 : f32
    %468 = vector.broadcast %cst_154 : f32 to vector<8x128xf32>
    %469 = arith.mulf %468, %467 : vector<8x128xf32>
    %470 = vector.extract_strided_slice %422 {offsets = [0, 256], sizes = [8, 128], strides = [1, 1]} : vector<8x512xf32> to vector<8x128xf32>
    %471 = math.tanh %470 : vector<8x128xf32>
    %472 = vector.extract_strided_slice %422 {offsets = [0, 384], sizes = [8, 128], strides = [1, 1]} : vector<8x512xf32> to vector<8x128xf32>
    %cst_155 = arith.constant 5.000000e-01 : f32
    %473 = vector.broadcast %cst_155 : f32 to vector<8x128xf32>
    %474 = arith.mulf %473, %472 : vector<8x128xf32>
    %475 = math.tanh %474 : vector<8x128xf32>
    %cst_156 = arith.constant 1.000000e+00 : f32
    %476 = vector.broadcast %cst_156 : f32 to vector<8x128xf32>
    %477 = arith.addf %475, %476 : vector<8x128xf32>
    %cst_157 = arith.constant 5.000000e-01 : f32
    %478 = vector.broadcast %cst_157 : f32 to vector<8x128xf32>
    %479 = arith.mulf %478, %477 : vector<8x128xf32>
    %480 = arith.mulf %469, %408 : vector<8x128xf32>
    %481 = arith.mulf %461, %471 : vector<8x128xf32>
    %482 = arith.addf %480, %481 : vector<8x128xf32>
    %483 = math.tanh %482 : vector<8x128xf32>
    %484 = arith.mulf %479, %483 : vector<8x128xf32>
    %c7_i32 = arith.constant 7 : i32
    %485 = tpu.concatenate %453, %484 in 1 : vector<8x128xf32>, vector<8x128xf32> -> vector<8x256xf32>
    %c0_158 = arith.constant 0 : index
    %c0_159 = arith.constant 0 : index
    %486 = vector.load %arg9[%c0_158, %c0_159] : memref<256x1024xf32, #tpu.memory_space<vmem>>, vector<256x1024xf32>
    %cst_160 = arith.constant dense<0.000000e+00> : vector<8x1024xf32>
    %487 = tpu.matmul %485, %486, %cst_160 {dimension_numbers = #tpu.dot_dimension_numbers<[1], [0], [0], [1], [0, 0, 1, 1], [], []>} : vector<8x256xf32>, vector<256x1024xf32>, vector<8x1024xf32> -> vector<8x1024xf32>
    %c8_i32_161 = arith.constant 8 : i32
    %488 = arith.muli %c7_i32, %c8_i32_161 : i32
    %489 = tpu.assume_multiple %488, 8 : i32
    %490 = arith.index_cast %489 : i32 to index
    %c0_162 = arith.constant 0 : index
    %491 = vector.load %arg8[%490, %c0_162] : memref<64x512xf32, #tpu.memory_space<vmem>>, vector<8x512xf32>
    %492 = vector.extract_strided_slice %487 {offsets = [0, 0], sizes = [8, 512], strides = [1, 1]} : vector<8x1024xf32> to vector<8x512xf32>
    %493 = arith.addf %491, %492 : vector<8x512xf32>
    %494 = vector.extract_strided_slice %487 {offsets = [0, 512], sizes = [8, 512], strides = [1, 1]} : vector<8x1024xf32> to vector<8x512xf32>
    %495 = vector.broadcast %40 : vector<1x512xf32> to vector<8x512xf32>
    %496 = arith.addf %494, %495 : vector<8x512xf32>
    %497 = vector.extract_strided_slice %493 {offsets = [0, 0], sizes = [8, 128], strides = [1, 1]} : vector<8x512xf32> to vector<8x128xf32>
    %cst_163 = arith.constant 5.000000e-01 : f32
    %498 = vector.broadcast %cst_163 : f32 to vector<8x128xf32>
    %499 = arith.mulf %498, %497 : vector<8x128xf32>
    %500 = math.tanh %499 : vector<8x128xf32>
    %cst_164 = arith.constant 1.000000e+00 : f32
    %501 = vector.broadcast %cst_164 : f32 to vector<8x128xf32>
    %502 = arith.addf %500, %501 : vector<8x128xf32>
    %cst_165 = arith.constant 5.000000e-01 : f32
    %503 = vector.broadcast %cst_165 : f32 to vector<8x128xf32>
    %504 = arith.mulf %503, %502 : vector<8x128xf32>
    %505 = vector.extract_strided_slice %493 {offsets = [0, 128], sizes = [8, 128], strides = [1, 1]} : vector<8x512xf32> to vector<8x128xf32>
    %cst_166 = arith.constant 5.000000e-01 : f32
    %506 = vector.broadcast %cst_166 : f32 to vector<8x128xf32>
    %507 = arith.mulf %506, %505 : vector<8x128xf32>
    %508 = math.tanh %507 : vector<8x128xf32>
    %cst_167 = arith.constant 1.000000e+00 : f32
    %509 = vector.broadcast %cst_167 : f32 to vector<8x128xf32>
    %510 = arith.addf %508, %509 : vector<8x128xf32>
    %cst_168 = arith.constant 5.000000e-01 : f32
    %511 = vector.broadcast %cst_168 : f32 to vector<8x128xf32>
    %512 = arith.mulf %511, %510 : vector<8x128xf32>
    %513 = vector.extract_strided_slice %493 {offsets = [0, 256], sizes = [8, 128], strides = [1, 1]} : vector<8x512xf32> to vector<8x128xf32>
    %514 = math.tanh %513 : vector<8x128xf32>
    %515 = vector.extract_strided_slice %493 {offsets = [0, 384], sizes = [8, 128], strides = [1, 1]} : vector<8x512xf32> to vector<8x128xf32>
    %cst_169 = arith.constant 5.000000e-01 : f32
    %516 = vector.broadcast %cst_169 : f32 to vector<8x128xf32>
    %517 = arith.mulf %516, %515 : vector<8x128xf32>
    %518 = math.tanh %517 : vector<8x128xf32>
    %cst_170 = arith.constant 1.000000e+00 : f32
    %519 = vector.broadcast %cst_170 : f32 to vector<8x128xf32>
    %520 = arith.addf %518, %519 : vector<8x128xf32>
    %cst_171 = arith.constant 5.000000e-01 : f32
    %521 = vector.broadcast %cst_171 : f32 to vector<8x128xf32>
    %522 = arith.mulf %521, %520 : vector<8x128xf32>
    %523 = arith.mulf %512, %451 : vector<8x128xf32>
    %524 = arith.mulf %504, %514 : vector<8x128xf32>
    %525 = arith.addf %523, %524 : vector<8x128xf32>
    %526 = math.tanh %525 : vector<8x128xf32>
    %527 = arith.mulf %522, %526 : vector<8x128xf32>
    %528 = vector.extract_strided_slice %496 {offsets = [0, 0], sizes = [8, 128], strides = [1, 1]} : vector<8x512xf32> to vector<8x128xf32>
    %cst_172 = arith.constant 5.000000e-01 : f32
    %529 = vector.broadcast %cst_172 : f32 to vector<8x128xf32>
    %530 = arith.mulf %529, %528 : vector<8x128xf32>
    %531 = math.tanh %530 : vector<8x128xf32>
    %cst_173 = arith.constant 1.000000e+00 : f32
    %532 = vector.broadcast %cst_173 : f32 to vector<8x128xf32>
    %533 = arith.addf %531, %532 : vector<8x128xf32>
    %cst_174 = arith.constant 5.000000e-01 : f32
    %534 = vector.broadcast %cst_174 : f32 to vector<8x128xf32>
    %535 = arith.mulf %534, %533 : vector<8x128xf32>
    %536 = vector.extract_strided_slice %496 {offsets = [0, 128], sizes = [8, 128], strides = [1, 1]} : vector<8x512xf32> to vector<8x128xf32>
    %cst_175 = arith.constant 5.000000e-01 : f32
    %537 = vector.broadcast %cst_175 : f32 to vector<8x128xf32>
    %538 = arith.mulf %537, %536 : vector<8x128xf32>
    %539 = math.tanh %538 : vector<8x128xf32>
    %cst_176 = arith.constant 1.000000e+00 : f32
    %540 = vector.broadcast %cst_176 : f32 to vector<8x128xf32>
    %541 = arith.addf %539, %540 : vector<8x128xf32>
    %cst_177 = arith.constant 5.000000e-01 : f32
    %542 = vector.broadcast %cst_177 : f32 to vector<8x128xf32>
    %543 = arith.mulf %542, %541 : vector<8x128xf32>
    %544 = vector.extract_strided_slice %496 {offsets = [0, 256], sizes = [8, 128], strides = [1, 1]} : vector<8x512xf32> to vector<8x128xf32>
    %545 = math.tanh %544 : vector<8x128xf32>
    %546 = vector.extract_strided_slice %496 {offsets = [0, 384], sizes = [8, 128], strides = [1, 1]} : vector<8x512xf32> to vector<8x128xf32>
    %cst_178 = arith.constant 5.000000e-01 : f32
    %547 = vector.broadcast %cst_178 : f32 to vector<8x128xf32>
    %548 = arith.mulf %547, %546 : vector<8x128xf32>
    %549 = math.tanh %548 : vector<8x128xf32>
    %cst_179 = arith.constant 1.000000e+00 : f32
    %550 = vector.broadcast %cst_179 : f32 to vector<8x128xf32>
    %551 = arith.addf %549, %550 : vector<8x128xf32>
    %cst_180 = arith.constant 5.000000e-01 : f32
    %552 = vector.broadcast %cst_180 : f32 to vector<8x128xf32>
    %553 = arith.mulf %552, %551 : vector<8x128xf32>
    %554 = arith.mulf %543, %482 : vector<8x128xf32>
    %555 = arith.mulf %535, %545 : vector<8x128xf32>
    %556 = arith.addf %554, %555 : vector<8x128xf32>
    %557 = math.tanh %556 : vector<8x128xf32>
    %558 = arith.mulf %553, %557 : vector<8x128xf32>
    %c7_i32_181 = arith.constant 7 : i32
    %559 = tpu.concatenate %527, %558 in 1 : vector<8x128xf32>, vector<8x128xf32> -> vector<8x256xf32>
    %c0_182 = arith.constant 0 : index
    %c512 = arith.constant 512 : index
    %560 = vector.load %arg9[%c0_182, %c512] : memref<256x1024xf32, #tpu.memory_space<vmem>>, vector<256x512xf32>
    %cst_183 = arith.constant dense<0.000000e+00> : vector<8x512xf32>
    %561 = tpu.matmul %559, %560, %cst_183 {dimension_numbers = #tpu.dot_dimension_numbers<[1], [0], [0], [1], [0, 0, 1, 1], [], []>} : vector<8x256xf32>, vector<256x512xf32>, vector<8x512xf32> -> vector<8x512xf32>
    %562 = vector.broadcast %40 : vector<1x512xf32> to vector<8x512xf32>
    %563 = arith.addf %561, %562 : vector<8x512xf32>
    %564 = vector.extract_strided_slice %563 {offsets = [0, 0], sizes = [8, 128], strides = [1, 1]} : vector<8x512xf32> to vector<8x128xf32>
    %cst_184 = arith.constant 5.000000e-01 : f32
    %565 = vector.broadcast %cst_184 : f32 to vector<8x128xf32>
    %566 = arith.mulf %565, %564 : vector<8x128xf32>
    %567 = math.tanh %566 : vector<8x128xf32>
    %cst_185 = arith.constant 1.000000e+00 : f32
    %568 = vector.broadcast %cst_185 : f32 to vector<8x128xf32>
    %569 = arith.addf %567, %568 : vector<8x128xf32>
    %cst_186 = arith.constant 5.000000e-01 : f32
    %570 = vector.broadcast %cst_186 : f32 to vector<8x128xf32>
    %571 = arith.mulf %570, %569 : vector<8x128xf32>
    %572 = vector.extract_strided_slice %563 {offsets = [0, 128], sizes = [8, 128], strides = [1, 1]} : vector<8x512xf32> to vector<8x128xf32>
    %cst_187 = arith.constant 5.000000e-01 : f32
    %573 = vector.broadcast %cst_187 : f32 to vector<8x128xf32>
    %574 = arith.mulf %573, %572 : vector<8x128xf32>
    %575 = math.tanh %574 : vector<8x128xf32>
    %cst_188 = arith.constant 1.000000e+00 : f32
    %576 = vector.broadcast %cst_188 : f32 to vector<8x128xf32>
    %577 = arith.addf %575, %576 : vector<8x128xf32>
    %cst_189 = arith.constant 5.000000e-01 : f32
    %578 = vector.broadcast %cst_189 : f32 to vector<8x128xf32>
    %579 = arith.mulf %578, %577 : vector<8x128xf32>
    %580 = vector.extract_strided_slice %563 {offsets = [0, 256], sizes = [8, 128], strides = [1, 1]} : vector<8x512xf32> to vector<8x128xf32>
    %581 = math.tanh %580 : vector<8x128xf32>
    %582 = vector.extract_strided_slice %563 {offsets = [0, 384], sizes = [8, 128], strides = [1, 1]} : vector<8x512xf32> to vector<8x128xf32>
    %cst_190 = arith.constant 5.000000e-01 : f32
    %583 = vector.broadcast %cst_190 : f32 to vector<8x128xf32>
    %584 = arith.mulf %583, %582 : vector<8x128xf32>
    %585 = math.tanh %584 : vector<8x128xf32>
    %cst_191 = arith.constant 1.000000e+00 : f32
    %586 = vector.broadcast %cst_191 : f32 to vector<8x128xf32>
    %587 = arith.addf %585, %586 : vector<8x128xf32>
    %cst_192 = arith.constant 5.000000e-01 : f32
    %588 = vector.broadcast %cst_192 : f32 to vector<8x128xf32>
    %589 = arith.mulf %588, %587 : vector<8x128xf32>
    %590 = arith.mulf %579, %556 : vector<8x128xf32>
    %591 = arith.mulf %571, %581 : vector<8x128xf32>
    %592 = arith.addf %590, %591 : vector<8x128xf32>
    %593 = math.tanh %592 : vector<8x128xf32>
    %594 = arith.mulf %589, %593 : vector<8x128xf32>
    %c0_193 = arith.constant 0 : index
    %c0_194 = arith.constant 0 : index
    %595 = vector.load %arg5[%c0_193, %c0_194] : memref<128x128xf32, #tpu.memory_space<vmem>>, vector<128x128xf32>
    %cst_195 = arith.constant dense<0.000000e+00> : vector<8x128xf32>
    %596 = tpu.matmul %594, %595, %cst_195 {dimension_numbers = #tpu.dot_dimension_numbers<[1], [0], [0], [1], [0, 0, 1, 1], [], []>} : vector<8x128xf32>, vector<128x128xf32>, vector<8x128xf32> -> vector<8x128xf32>
    %c0_196 = arith.constant 0 : index
    %c0_197 = arith.constant 0 : index
    %597 = vector.load %arg6[%c0_196, %c0_197] : memref<1x128xf32, #tpu.memory_space<vmem>>, vector<1x128xf32>
    %598 = vector.broadcast %597 : vector<1x128xf32> to vector<8x128xf32>
    %599 = arith.addf %596, %598 : vector<8x128xf32>
    %c0_198 = arith.constant 0 : index
    %c0_199 = arith.constant 0 : index
    %600 = vector.load %arg7[%c0_198, %c0_199] : memref<8x128xf32, #tpu.memory_space<vmem>>, vector<8x128xf32>
    tpu.vector_store %arg7[%c0_198, %c0_199], %599 {strides = array<i32>} : memref<8x128xf32, #tpu.memory_space<vmem>>, vector<8x128xf32>,
    return
  }
}

</mosaic_0001>

<llo_original>
// kernel: qnetwork_lstm_forward.1
$region0: #{qnetwork_lstm_forward.1}
  #allocation0 [shape = 'u32[]', space=smem, size = 0x4, offset = 0x4, fixed_abs, tag = 'smem constant byte address 0x4 - core index']
  #allocation1 [shape = 'u32[72,128]{1,0:T(1,128)}', space=vmem, size = 0x9000, scoped, tag = 'internal scratch']
  #allocation2 [shape = 'f32[64,512]{1,0:T(8,128)}', space=vmem, size = 0x20000, scoped, tag = 'scratch operand']
  #allocation3 [shape = 'f32[256,1024]{1,0:T(8,128)}', space=vmem, size = 0x100000, scoped, tag = 'scratch operand']
  #allocation4 [shape = 's32[1]{0}', space=sflag, size = 0x4, scoped, tag = 'scratch operand']
  #allocation7 [shape = 's32[]', space=sflag, size = 0x4, offset = 0, fixed_abs, tag = 'sflag constant byte address 0x0 - dummy sync flag']
  #allocation8 [shape = 's32[]', space=sflag, size = 0x4, offset = 0, fixed_abs, tag = 'sflag constant byte address 0x0 - dummy sync flag']
  #allocation9 [shape = 'u32[]', space=smem, size = 0x4, offset = 0x44, fixed_abs, tag = 'smem constant byte address 0x44 - assertion arg 0']
  #allocation10 [shape = 'u32[]', space=smem, size = 0x4, offset = 0x48, fixed_abs, tag = 'smem constant byte address 0x48 - assertion arg 1']
  %s0 = inlined_call_operand.vmem [shape: f32[64,8], index: 0, kind: input, shape index: {}]
  %s1 = inlined_call_operand.vmem [shape: f32[8,512], index: 1, kind: input, shape index: {}]
  %s2 = inlined_call_operand.vmem [shape: f32[1,512], index: 2, kind: input, shape index: {}]
  %s3 = inlined_call_operand.hbm [shape: f32[256,1024], index: 3, kind: input, shape index: {}]
  %s4 = inlined_call_operand.vmem [shape: f32[1,512], index: 4, kind: input, shape index: {}]
  %s5 = inlined_call_operand.hbm [shape: f32[128,128], index: 5, kind: input, shape index: {}]
  %s6 = inlined_call_operand.vmem [shape: f32[1,128], index: 6, kind: input, shape index: {}]
  %s7 = inlined_call_operand.vmem [shape: f32[8,128], index: 7, kind: output, shape index: {}]
  %s8 = sld [smem:[#allocation0]]
  $region42: #{qnetwork_lstm_forward.1} parent=0
    _
  %s10 = ssub.s32 1, %s8
  %s11 = scalar_select 0, %s10, %s8
  $region1: #{qnetwork_lstm_forward.1} parent=0
    #allocation5 [shape = 'u8[65536]{0}', space=vmem, size = 0x10000, scoped, tag = 'input window, operand 5, single buffered']
    #allocation6 [shape = 's32[1]{0}', space=sflag, size = 0x4, scoped, tag = 'scoped memory for qnetwork_lstm_forward.1']
    %12 = vsyncpa [#allocation6], 0
    // Predicated region
    $region2: #{qnetwork_lstm_forward.1} parent=1 // pred_check
      _
    $region3: #{qnetwork_lstm_forward.1} parent=1 // pred_check_branch
      %14 = sbr.rel (0) target = $region5
    $region4: #{qnetwork_lstm_forward.1} parent=1 // pred_region
      _
    $region5: #{qnetwork_lstm_forward.1} parent=1 // pred_fallthru
      _
    // Predicated region
    $region6: #{qnetwork_lstm_forward.1} parent=1 // pred_check
      _
    $region7: #{qnetwork_lstm_forward.1} parent=1 // pred_check_branch
      %16 = sbr.rel (0) target = $region9
    $region8: #{qnetwork_lstm_forward.1} parent=1 // pred_region
      _
    $region9: #{qnetwork_lstm_forward.1} parent=1 // pred_fallthru
      _
    // Predicated region
    $region10: #{qnetwork_lstm_forward.1} parent=1 // pred_check
      _
    $region11: #{qnetwork_lstm_forward.1} parent=1 // pred_check_branch
      %18 = sbr.rel (0) target = $region13
    $region12: #{qnetwork_lstm_forward.1} parent=1 // pred_region
      _
    $region13: #{qnetwork_lstm_forward.1} parent=1 // pred_fallthru
      _
    // Predicated region
    $region14: #{qnetwork_lstm_forward.1} parent=1 // pred_check
      _
    $region15: #{qnetwork_lstm_forward.1} parent=1 // pred_check_branch
      %20 = sbr.rel (0) target = $region17
    $region16: #{qnetwork_lstm_forward.1} parent=1 // pred_region
      _
    $region17: #{qnetwork_lstm_forward.1} parent=1 // pred_fallthru
      _
    // Predicated region
    $region18: #{qnetwork_lstm_forward.1} parent=1 // pred_check
      _
    $region19: #{qnetwork_lstm_forward.1} parent=1 // pred_check_branch
      %22 = sbr.rel (0) target = $region21
    $region20: #{qnetwork_lstm_forward.1} parent=1 // pred_region
      %24 = vsyncadd [#allocation6], 0
      %s25 = sshll.u32 %s5, 4
      %s26 = int_to_ptr.hbm [resolvable:$true] %s25
      %s27 = sshll.u32 [#allocation5], 4
      %s28 = int_to_ptr.vmem [resolvable:$true] %s27
      %33 = dma.hbm_to_vmem [thread:$0]  %s26, 2048, %s28, [#allocation6], 128, 128, 8
    $region21: #{qnetwork_lstm_forward.1} parent=1 // pred_fallthru
      _
    // Predicated region
    $region22: #{qnetwork_lstm_forward.1} parent=1 // pred_check
      _
    $region23: #{qnetwork_lstm_forward.1} parent=1 // pred_check_branch
      %35 = sbr.rel (0) target = $region25
    $region24: #{qnetwork_lstm_forward.1} parent=1 // pred_region
      _
    $region25: #{qnetwork_lstm_forward.1} parent=1 // pred_fallthru
      _
    // Predicated region
    $region26: #{qnetwork_lstm_forward.1} parent=1 // pred_check
      _
    $region27: #{qnetwork_lstm_forward.1} parent=1 // pred_check_branch
      %37 = sbr.rel (0) target = $region29
    $region28: #{qnetwork_lstm_forward.1} parent=1 // pred_region
      %39 = dma.done [#allocation6], 2048
    $region29: #{qnetwork_lstm_forward.1} parent=1 // pred_fallthru
      _
    // Predicated region
    $region30: #{qnetwork_lstm_forward.1} parent=1 // pred_check
      _
    $region31: #{qnetwork_lstm_forward.1} parent=1 // pred_check_branch
      %41 = sbr.rel target = $region33
    $region32: #{qnetwork_lstm_forward.1} parent=1 // pred_region
      %42 = sst [smem:[#allocation9]] [#allocation8]
      %43 = sst [smem:[#allocation10]] [#allocation7]
    $region33: #{qnetwork_lstm_forward.1} parent=1 // pred_fallthru
      _
    %45 = shalt.err (0)
    %s47 = sshll.u32 %s3, 4
    %s48 = int_to_ptr.hbm [resolvable:$true] %s47
    %s49 = sshll.u32 [#allocation3], 4
    %s50 = int_to_ptr.vmem [resolvable:$true] %s49
    %52 = dma.hbm_to_vmem [thread:$0]  %s48, 32768, %s50, [#allocation4]
    %v53 = vld [vmem:[%s0] sm:$0xff]
    %v54 = vld [vmem:[%s0 + $0x8] sm:$0xff]
    %v55 = vld [vmem:[%s0 + $0x10] sm:$0xff]
    %v56 = vld [vmem:[%s0 + $0x18] sm:$0xff]
    %v57 = vld [vmem:[%s0 + $0x20] sm:$0xff]
    %v58 = vld [vmem:[%s0 + $0x28] sm:$0xff]
    %v59 = vld [vmem:[%s0 + $0x30] sm:$0xff]
    %v60 = vld [vmem:[%s0 + $0x38] sm:$0xff]
    %v61 = vld [vmem:[%s1] sm:$0xff]
    %v62 = vld [vmem:[%s1 + $0x8] sm:$0xff]
    %v63 = vld [vmem:[%s1 + $0x10] sm:$0xff]
    %v64 = vld [vmem:[%s1 + $0x18] sm:$0xff]
    %v65 = vld [vmem:[%s2] sm:$0xf]
    %v67 = vperm.slane %v65, 0
    %v68 = vperm.slane %v65, 1
    %v69 = vperm.slane %v65, 2
    %v70 = vperm.slane %v65, 3
    %vm75 = vcmask 64512
    %v77 = vsel %vm75, %v53, 0
    %v80 = vsel %vm75, %v54, 0
    %v83 = vsel %vm75, %v55, 0
    %v86 = vsel %vm75, %v56, 0
    %v89 = vsel %vm75, %v57, 0
    %v92 = vsel %vm75, %v58, 0
    %v95 = vsel %vm75, %v59, 0
    %v98 = vsel %vm75, %v60, 0
    %100 = vmatpush.msra.mxu0 0.0
    %101 = vmatpush.msra.mxu0 0.0
    %102 = vmatpush.msra.mxu0 0.0
    %103 = vmatpush.msra.mxu0 0.0
    %104 = vmatpush.msra.mxu0 0.0
    %105 = vmatpush.msra.mxu0 0.0
    %106 = vmatpush.msra.mxu0 0.0
    %107 = vmatpush.msra.mxu0 0.0
    %108 = vmatpush.msra.mxu0 0.0
    %109 = vmatpush.msra.mxu0 0.0
    %110 = vmatpush.msra.mxu0 0.0
    %111 = vmatpush.msra.mxu0 0.0
    %112 = vmatpush.msra.mxu0 0.0
    %113 = vmatpush.msra.mxu0 0.0
    %114 = vmatpush.msra.mxu0 0.0
    %115 = vmatpush.msra.mxu0 %v61
    %116 = vmatmul.f32.gmra.mxu0 %v77
    %v117 = vpop.f32.mrf.mxu0
    %v118 = vadd.f32 %v67, %v117
    %119 = vmatmul.f32.gmra.mxu0 %v80
    %v120 = vpop.f32.mrf.mxu0
    %v121 = vadd.f32 %v67, %v120
    %122 = vmatmul.f32.gmra.mxu0 %v83
    %v123 = vpop.f32.mrf.mxu0
    %v124 = vadd.f32 %v67, %v123
    %125 = vmatmul.f32.gmra.mxu0 %v86
    %v126 = vpop.f32.mrf.mxu0
    %v127 = vadd.f32 %v67, %v126
    %128 = vmatmul.f32.gmra.mxu0 %v89
    %v129 = vpop.f32.mrf.mxu0
    %v130 = vadd.f32 %v67, %v129
    %131 = vmatmul.f32.gmra.mxu0 %v92
    %v132 = vpop.f32.mrf.mxu0
    %v133 = vadd.f32 %v67, %v132
    %134 = vmatmul.f32.gmra.mxu0 %v95
    %v135 = vpop.f32.mrf.mxu0
    %v136 = vadd.f32 %v67, %v135
    %137 = vmatmul.f32.gmra.mxu0 %v98
    %v138 = vpop.f32.mrf.mxu0
    %v139 = vadd.f32 %v67, %v138
    %140 = vdwg.mxu0
    %141 = vmatpush.msra.mxu0 0.0
    %142 = vmatpush.msra.mxu0 0.0
    %143 = vmatpush.msra.mxu0 0.0
    %144 = vmatpush.msra.mxu0 0.0
    %145 = vmatpush.msra.mxu0 0.0
    %146 = vmatpush.msra.mxu0 0.0
    %147 = vmatpush.msra.mxu0 0.0
    %148 = vmatpush.msra.mxu0 0.0
    %149 = vmatpush.msra.mxu0 0.0
    %150 = vmatpush.msra.mxu0 0.0
    %151 = vmatpush.msra.mxu0 0.0
    %152 = vmatpush.msra.mxu0 0.0
    %153 = vmatpush.msra.mxu0 0.0
    %154 = vmatpush.msra.mxu0 0.0
    %155 = vmatpush.msra.mxu0 0.0
    %156 = vmatpush.msra.mxu0 %v62
    %157 = vmatmul.f32.gmra.mxu0 %v77
    %v158 = vpop.f32.mrf.mxu0
    %v159 = vadd.f32 %v68, %v158
    %160 = vmatmul.f32.gmra.mxu0 %v80
    %v161 = vpop.f32.mrf.mxu0
    %v162 = vadd.f32 %v68, %v161
    %163 = vmatmul.f32.gmra.mxu0 %v83
    %v164 = vpop.f32.mrf.mxu0
    %v165 = vadd.f32 %v68, %v164
    %166 = vmatmul.f32.gmra.mxu0 %v86
    %v167 = vpop.f32.mrf.mxu0
    %v168 = vadd.f32 %v68, %v167
    %169 = vmatmul.f32.gmra.mxu0 %v89
    %v170 = vpop.f32.mrf.mxu0
    %v171 = vadd.f32 %v68, %v170
    %172 = vmatmul.f32.gmra.mxu0 %v92
    %v173 = vpop.f32.mrf.mxu0
    %v174 = vadd.f32 %v68, %v173
    %175 = vmatmul.f32.gmra.mxu0 %v95
    %v176 = vpop.f32.mrf.mxu0
    %v177 = vadd.f32 %v68, %v176
    %178 = vmatmul.f32.gmra.mxu0 %v98
    %v179 = vpop.f32.mrf.mxu0
    %v180 = vadd.f32 %v68, %v179
    %181 = vdwg.mxu0
    %182 = vmatpush.msra.mxu0 0.0
    %183 = vmatpush.msra.mxu0 0.0
    %184 = vmatpush.msra.mxu0 0.0
    %185 = vmatpush.msra.mxu0 0.0
    %186 = vmatpush.msra.mxu0 0.0
    %187 = vmatpush.msra.mxu0 0.0
    %188 = vmatpush.msra.mxu0 0.0
    %189 = vmatpush.msra.mxu0 0.0
    %190 = vmatpush.msra.mxu0 0.0
    %191 = vmatpush.msra.mxu0 0.0
    %192 = vmatpush.msra.mxu0 0.0
    %193 = vmatpush.msra.mxu0 0.0
    %194 = vmatpush.msra.mxu0 0.0
    %195 = vmatpush.msra.mxu0 0.0
    %196 = vmatpush.msra.mxu0 0.0
    %197 = vmatpush.msra.mxu0 %v63
    %198 = vmatmul.f32.gmra.mxu0 %v77
    %v199 = vpop.f32.mrf.mxu0
    %v200 = vadd.f32 %v69, %v199
    %201 = vmatmul.f32.gmra.mxu0 %v80
    %v202 = vpop.f32.mrf.mxu0
    %v203 = vadd.f32 %v69, %v202
    %204 = vmatmul.f32.gmra.mxu0 %v83
    %v205 = vpop.f32.mrf.mxu0
    %v206 = vadd.f32 %v69, %v205
    %207 = vmatmul.f32.gmra.mxu0 %v86
    %v208 = vpop.f32.mrf.mxu0
    %v209 = vadd.f32 %v69, %v208
    %210 = vmatmul.f32.gmra.mxu0 %v89
    %v211 = vpop.f32.mrf.mxu0
    %v212 = vadd.f32 %v69, %v211
    %213 = vmatmul.f32.gmra.mxu0 %v92
    %v214 = vpop.f32.mrf.mxu0
    %v215 = vadd.f32 %v69, %v214
    %216 = vmatmul.f32.gmra.mxu0 %v95
    %v217 = vpop.f32.mrf.mxu0
    %v218 = vadd.f32 %v69, %v217
    %219 = vmatmul.f32.gmra.mxu0 %v98
    %v220 = vpop.f32.mrf.mxu0
    %v221 = vadd.f32 %v69, %v220
    %222 = vdwg.mxu0
    %223 = vmatpush.msra.mxu0 0.0
    %224 = vmatpush.msra.mxu0 0.0
    %225 = vmatpush.msra.mxu0 0.0
    %226 = vmatpush.msra.mxu0 0.0
    %227 = vmatpush.msra.mxu0 0.0
    %228 = vmatpush.msra.mxu0 0.0
    %229 = vmatpush.msra.mxu0 0.0
    %230 = vmatpush.msra.mxu0 0.0
    %231 = vmatpush.msra.mxu0 0.0
    %232 = vmatpush.msra.mxu0 0.0
    %233 = vmatpush.msra.mxu0 0.0
    %234 = vmatpush.msra.mxu0 0.0
    %235 = vmatpush.msra.mxu0 0.0
    %236 = vmatpush.msra.mxu0 0.0
    %237 = vmatpush.msra.mxu0 0.0
    %238 = vmatpush.msra.mxu0 %v64
    %239 = vmatmul.f32.gmra.mxu0 %v77
    %v240 = vpop.f32.mrf.mxu0
    %v241 = vadd.f32 %v70, %v240
    %242 = vmatmul.f32.gmra.mxu0 %v80
    %v243 = vpop.f32.mrf.mxu0
    %v244 = vadd.f32 %v70, %v243
    %245 = vmatmul.f32.gmra.mxu0 %v83
    %v246 = vpop.f32.mrf.mxu0
    %v247 = vadd.f32 %v70, %v246
    %248 = vmatmul.f32.gmra.mxu0 %v86
    %v249 = vpop.f32.mrf.mxu0
    %v250 = vadd.f32 %v70, %v249
    %251 = vmatmul.f32.gmra.mxu0 %v89
    %v252 = vpop.f32.mrf.mxu0
    %v253 = vadd.f32 %v70, %v252
    %254 = vmatmul.f32.gmra.mxu0 %v92
    %v255 = vpop.f32.mrf.mxu0
    %v256 = vadd.f32 %v70, %v255
    %257 = vmatmul.f32.gmra.mxu0 %v95
    %v258 = vpop.f32.mrf.mxu0
    %v259 = vadd.f32 %v70, %v258
    %260 = vmatmul.f32.gmra.mxu0 %v98
    %v261 = vpop.f32.mrf.mxu0
    %v262 = vadd.f32 %v70, %v261
    %263 = vdwg.mxu0
    %264 = vst [vmem:[#allocation2] sm:$0xff] %v118
    %265 = vst [vmem:[#allocation2 + $0x8] sm:$0xff] %v159
    %266 = vst [vmem:[#allocation2 + $0x10] sm:$0xff] %v200
    %267 = vst [vmem:[#allocation2 + $0x18] sm:$0xff] %v241
    %268 = vst [vmem:[#allocation2 + $0x20] sm:$0xff] %v121
    %269 = vst [vmem:[#allocation2 + $0x28] sm:$0xff] %v162
    %270 = vst [vmem:[#allocation2 + $0x30] sm:$0xff] %v203
    %271 = vst [vmem:[#allocation2 + $0x38] sm:$0xff] %v244
    %272 = vst [vmem:[#allocation2 + $0x40] sm:$0xff] %v124
    %273 = vst [vmem:[#allocation2 + $0x48] sm:$0xff] %v165
    %274 = vst [vmem:[#allocation2 + $0x50] sm:$0xff] %v206
    %275 = vst [vmem:[#allocation2 + $0x58] sm:$0xff] %v247
    %276 = vst [vmem:[#allocation2 + $0x60] sm:$0xff] %v127
    %277 = vst [vmem:[#allocation2 + $0x68] sm:$0xff] %v168
    %278 = vst [vmem:[#allocation2 + $0x70] sm:$0xff] %v209
    %279 = vst [vmem:[#allocation2 + $0x78] sm:$0xff] %v250
    %280 = vst [vmem:[#allocation2 + $0x80] sm:$0xff] %v130
    %281 = vst [vmem:[#allocation2 + $0x88] sm:$0xff] %v171
    %282 = vst [vmem:[#allocation2 + $0x90] sm:$0xff] %v212
    %283 = vst [vmem:[#allocation2 + $0x98] sm:$0xff] %v253
    %284 = vst [vmem:[#allocation2 + $0xa0] sm:$0xff] %v133
    %285 = vst [vmem:[#allocation2 + $0xa8] sm:$0xff] %v174
    %286 = vst [vmem:[#allocation2 + $0xb0] sm:$0xff] %v215
    %287 = vst [vmem:[#allocation2 + $0xb8] sm:$0xff] %v256
    %288 = vst [vmem:[#allocation2 + $0xc0] sm:$0xff] %v136
    %289 = vst [vmem:[#allocation2 + $0xc8] sm:$0xff] %v177
    %290 = vst [vmem:[#allocation2 + $0xd0] sm:$0xff] %v218
    %291 = vst [vmem:[#allocation2 + $0xd8] sm:$0xff] %v259
    %292 = vst [vmem:[#allocation2 + $0xe0] sm:$0xff] %v139
    %293 = vst [vmem:[#allocation2 + $0xe8] sm:$0xff] %v180
    %294 = vst [vmem:[#allocation2 + $0xf0] sm:$0xff] %v221
    %295 = vst [vmem:[#allocation2 + $0xf8] sm:$0xff] %v262
    %v296 = vld [vmem:[#allocation2] sm:$0xff]
    %v297 = vld [vmem:[#allocation2 + $0x8] sm:$0xff]
    %v298 = vld [vmem:[#allocation2 + $0x10] sm:$0xff]
    %v299 = vld [vmem:[#allocation2 + $0x18] sm:$0xff]
    %v300 = vmul.f32 %v296, 0.5
    %v301 = vtanh.pop %v300
    %v302 = vadd.f32 %v301, 1.0
    %v303 = vmul.f32 %v302, 0.5
    %v304 = vmul.f32 %v297, 0.5
    %v305 = vtanh.pop %v304
    %v306 = vadd.f32 %v305, 1.0
    %v307 = vmul.f32 %v306, 0.5
    %v308 = vtanh.pop %v298
    %v309 = vmul.f32 %v299, 0.5
    %v310 = vtanh.pop %v309
    %v311 = vadd.f32 %v310, 1.0
    %v312 = vmul.f32 %v311, 0.5
    %v313 = vmul.f32 %v307, 0.0
    %v314 = vmul.f32 %v303, %v308
    %v315 = vadd.f32 %v313, %v314
    %v316 = vtanh.pop %v315
    %v317 = vmul.f32 %v312, %v316
    %s318 = smul.u32 8, 32
    %s319 = smul.u32 %s318, 8
    %s320 = sshll.u32 %s319, 4
    %321 = dma.done [#allocation4], %s320
    %v322 = vld [vmem:[%s4] sm:$0xf]
    %v323 = vld [vmem:[#allocation3] sm:$0xff]
    %v324 = vld [vmem:[#allocation3 + $0x8] sm:$0xff]
    %v325 = vld [vmem:[#allocation3 + $0x10] sm:$0xff]
    %v326 = vld [vmem:[#allocation3 + $0x18] sm:$0xff]
    %v327 = vld [vmem:[#allocation3 + $0x20] sm:$0xff]
    %v328 = vld [vmem:[#allocation3 + $0x28] sm:$0xff]
    %v329 = vld [vmem:[#allocation3 + $0x30] sm:$0xff]
    %v330 = vld [vmem:[#allocation3 + $0x38] sm:$0xff]
    %v331 = vld [vmem:[#allocation3 + $0x40] sm:$0xff]
    %v332 = vld [vmem:[#allocation3 + $0x48] sm:$0xff]
    %v333 = vld [vmem:[#allocation3 + $0x50] sm:$0xff]
    %v334 = vld [vmem:[#allocation3 + $0x58] sm:$0xff]
    %v335 = vld [vmem:[#allocation3 + $0x60] sm:$0xff]
    %v336 = vld [vmem:[#allocation3 + $0x68] sm:$0xff]
    %v337 = vld [vmem:[#allocation3 + $0x70] sm:$0xff]
    %v338 = vld [vmem:[#allocation3 + $0x78] sm:$0xff]
    %v339 = vld [vmem:[#allocation3 + $0x80] sm:$0xff]
    %v340 = vld [vmem:[#allocation3 + $0x88] sm:$0xff]
    %v341 = vld [vmem:[#allocation3 + $0x90] sm:$0xff]
    %v342 = vld [vmem:[#allocation3 + $0x98] sm:$0xff]
    %v343 = vld [vmem:[#allocation3 + $0xa0] sm:$0xff]
    %v344 = vld [vmem:[#allocation3 + $0xa8] sm:$0xff]
    %v345 = vld [vmem:[#allocation3 + $0xb0] sm:$0xff]
    %v346 = vld [vmem:[#allocation3 + $0xb8] sm:$0xff]
    %v347 = vld [vmem:[#allocation3 + $0xc0] sm:$0xff]
    %v348 = vld [vmem:[#allocation3 + $0xc8] sm:$0xff]
    %v349 = vld [vmem:[#allocation3 + $0xd0] sm:$0xff]
    %v350 = vld [vmem:[#allocation3 + $0xd8] sm:$0xff]
    %v351 = vld [vmem:[#allocation3 + $0xe0] sm:$0xff]
    %v352 = vld [vmem:[#allocation3 + $0xe8] sm:$0xff]
    %v353 = vld [vmem:[#allocation3 + $0xf0] sm:$0xff]
    %v354 = vld [vmem:[#allocation3 + $0xf8] sm:$0xff]
    %v355 = vld [vmem:[#allocation3 + $0x100] sm:$0xff]
    %v356 = vld [vmem:[#allocation3 + $0x108] sm:$0xff]
    %v357 = vld [vmem:[#allocation3 + $0x110] sm:$0xff]
    %v358 = vld [vmem:[#allocation3 + $0x118] sm:$0xff]
    %v359 = vld [vmem:[#allocation3 + $0x120] sm:$0xff]
    %v360 = vld [vmem:[#allocation3 + $0x128] sm:$0xff]
    %v361 = vld [vmem:[#allocation3 + $0x130] sm:$0xff]
    %v362 = vld [vmem:[#allocation3 + $0x138] sm:$0xff]
    %v363 = vld [vmem:[#allocation3 + $0x140] sm:$0xff]
    %v364 = vld [vmem:[#allocation3 + $0x148] sm:$0xff]
    %v365 = vld [vmem:[#allocation3 + $0x150] sm:$0xff]
    %v366 = vld [vmem:[#allocation3 + $0x158] sm:$0xff]
    %v367 = vld [vmem:[#allocation3 + $0x160] sm:$0xff]
    %v368 = vld [vmem:[#allocation3 + $0x168] sm:$0xff]
    %v369 = vld [vmem:[#allocation3 + $0x170] sm:$0xff]
    %v370 = vld [vmem:[#allocation3 + $0x178] sm:$0xff]
    %v371 = vld [vmem:[#allocation3 + $0x180] sm:$0xff]
    %v372 = vld [vmem:[#allocation3 + $0x188] sm:$0xff]
    %v373 = vld [vmem:[#allocation3 + $0x190] sm:$0xff]
    %v374 = vld [vmem:[#allocation3 + $0x198] sm:$0xff]
    %v375 = vld [vmem:[#allocation3 + $0x1a0] sm:$0xff]
    %v376 = vld [vmem:[#allocation3 + $0x1a8] sm:$0xff]
    %v377 = vld [vmem:[#allocation3 + $0x1b0] sm:$0xff]
    %v378 = vld [vmem:[#allocation3 + $0x1b8] sm:$0xff]
    %v379 = vld [vmem:[#allocation3 + $0x1c0] sm:$0xff]
    %v380 = vld [vmem:[#allocation3 + $0x1c8] sm:$0xff]
    %v381 = vld [vmem:[#allocation3 + $0x1d0] sm:$0xff]
    %v382 = vld [vmem:[#allocation3 + $0x1d8] sm:$0xff]
    %v383 = vld [vmem:[#allocation3 + $0x1e0] sm:$0xff]
    %v384 = vld [vmem:[#allocation3 + $0x1e8] sm:$0xff]
    %v385 = vld [vmem:[#allocation3 + $0x1f0] sm:$0xff]
    %v386 = vld [vmem:[#allocation3 + $0x1f8] sm:$0xff]
    %v387 = vld [vmem:[#allocation3 + $0x200] sm:$0xff]
    %v388 = vld [vmem:[#allocation3 + $0x208] sm:$0xff]
    %v389 = vld [vmem:[#allocation3 + $0x210] sm:$0xff]
    %v390 = vld [vmem:[#allocation3 + $0x218] sm:$0xff]
    %v391 = vld [vmem:[#allocation3 + $0x220] sm:$0xff]
    %v392 = vld [vmem:[#allocation3 + $0x228] sm:$0xff]
    %v393 = vld [vmem:[#allocation3 + $0x230] sm:$0xff]
    %v394 = vld [vmem:[#allocation3 + $0x238] sm:$0xff]
    %v395 = vld [vmem:[#allocation3 + $0x240] sm:$0xff]
    %v396 = vld [vmem:[#allocation3 + $0x248] sm:$0xff]
    %v397 = vld [vmem:[#allocation3 + $0x250] sm:$0xff]
    %v398 = vld [vmem:[#allocation3 + $0x258] sm:$0xff]
    %v399 = vld [vmem:[#allocation3 + $0x260] sm:$0xff]
    %v400 = vld [vmem:[#allocation3 + $0x268] sm:$0xff]
    %v401 = vld [vmem:[#allocation3 + $0x270] sm:$0xff]
    %v402 = vld [vmem:[#allocation3 + $0x278] sm:$0xff]
    %v403 = vld [vmem:[#allocation3 + $0x280] sm:$0xff]
    %v404 = vld [vmem:[#allocation3 + $0x288] sm:$0xff]
    %v405 = vld [vmem:[#allocation3 + $0x290] sm:$0xff]
    %v406 = vld [vmem:[#allocation3 + $0x298] sm:$0xff]
    %v407 = vld [vmem:[#allocation3 + $0x2a0] sm:$0xff]
    %v408 = vld [vmem:[#allocation3 + $0x2a8] sm:$0xff]
    %v409 = vld [vmem:[#allocation3 + $0x2b0] sm:$0xff]
    %v410 = vld [vmem:[#allocation3 + $0x2b8] sm:$0xff]
    %v411 = vld [vmem:[#allocation3 + $0x2c0] sm:$0xff]
    %v412 = vld [vmem:[#allocation3 + $0x2c8] sm:$0xff]
    %v413 = vld [vmem:[#allocation3 + $0x2d0] sm:$0xff]
    %v414 = vld [vmem:[#allocation3 + $0x2d8] sm:$0xff]
    %v415 = vld [vmem:[#allocation3 + $0x2e0] sm:$0xff]
    %v416 = vld [vmem:[#allocation3 + $0x2e8] sm:$0xff]
    %v417 = vld [vmem:[#allocation3 + $0x2f0] sm:$0xff]
    %v418 = vld [vmem:[#allocation3 + $0x2f8] sm:$0xff]
    %v419 = vld [vmem:[#allocation3 + $0x300] sm:$0xff]
    %v420 = vld [vmem:[#allocation3 + $0x308] sm:$0xff]
    %v421 = vld [vmem:[#allocation3 + $0x310] sm:$0xff]
    %v422 = vld [vmem:[#allocation3 + $0x318] sm:$0xff]
    %v423 = vld [vmem:[#allocation3 + $0x320] sm:$0xff]
    %v424 = vld [vmem:[#allocation3 + $0x328] sm:$0xff]
    %v425 = vld [vmem:[#allocation3 + $0x330] sm:$0xff]
    %v426 = vld [vmem:[#allocation3 + $0x338] sm:$0xff]
    %v427 = vld [vmem:[#allocation3 + $0x340] sm:$0xff]
    %v428 = vld [vmem:[#allocation3 + $0x348] sm:$0xff]
    %v429 = vld [vmem:[#allocation3 + $0x350] sm:$0xff]
    %v430 = vld [vmem:[#allocation3 + $0x358] sm:$0xff]
    %v431 = vld [vmem:[#allocation3 + $0x360] sm:$0xff]
    %v432 = vld [vmem:[#allocation3 + $0x368] sm:$0xff]
    %v433 = vld [vmem:[#allocation3 + $0x370] sm:$0xff]
    %v434 = vld [vmem:[#allocation3 + $0x378] sm:$0xff]
    %v435 = vld [vmem:[#allocation3 + $0x380] sm:$0xff]
    %v436 = vld [vmem:[#allocation3 + $0x388] sm:$0xff]
    %v437 = vld [vmem:[#allocation3 + $0x390] sm:$0xff]
    %v438 = vld [vmem:[#allocation3 + $0x398] sm:$0xff]
    %v439 = vld [vmem:[#allocation3 + $0x3a0] sm:$0xff]
    %v440 = vld [vmem:[#allocation3 + $0x3a8] sm:$0xff]
    %v441 = vld [vmem:[#allocation3 + $0x3b0] sm:$0xff]
    %v442 = vld [vmem:[#allocation3 + $0x3b8] sm:$0xff]
    %v443 = vld [vmem:[#allocation3 + $0x3c0] sm:$0xff]
    %v444 = vld [vmem:[#allocation3 + $0x3c8] sm:$0xff]
    %v445 = vld [vmem:[#allocation3 + $0x3d0] sm:$0xff]
    %v446 = vld [vmem:[#allocation3 + $0x3d8] sm:$0xff]
    %v447 = vld [vmem:[#allocation3 + $0x3e0] sm:$0xff]
    %v448 = vld [vmem:[#allocation3 + $0x3e8] sm:$0xff]
    %v449 = vld [vmem:[#allocation3 + $0x3f0] sm:$0xff]
    %v450 = vld [vmem:[#allocation3 + $0x3f8] sm:$0xff]
    %v451 = vld [vmem:[#allocation3 + $0x400] sm:$0xff]
    %v452 = vld [vmem:[#allocation3 + $0x408] sm:$0xff]
    %v453 = vld [vmem:[#allocation3 + $0x410] sm:$0xff]
    %v454 = vld [vmem:[#allocation3 + $0x418] sm:$0xff]
    %v455 = vld [vmem:[#allocation3 + $0x420] sm:$0xff]
    %v456 = vld [vmem:[#allocation3 + $0x428] sm:$0xff]
    %v457 = vld [vmem:[#allocation3 + $0x430] sm:$0xff]
    %v458 = vld [vmem:[#allocation3 + $0x438] sm:$0xff]
    %v459 = vld [vmem:[#allocation3 + $0x440] sm:$0xff]
    %v460 = vld [vmem:[#allocation3 + $0x448] sm:$0xff]
    %v461 = vld [vmem:[#allocation3 + $0x450] sm:$0xff]
    %v462 = vld [vmem:[#allocation3 + $0x458] sm:$0xff]
    %v463 = vld [vmem:[#allocation3 + $0x460] sm:$0xff]
    %v464 = vld [vmem:[#allocation3 + $0x468] sm:$0xff]
    %v465 = vld [vmem:[#allocation3 + $0x470] sm:$0xff]
    %v466 = vld [vmem:[#allocation3 + $0x478] sm:$0xff]
    %v467 = vld [vmem:[#allocation3 + $0x480] sm:$0xff]
    %v468 = vld [vmem:[#allocation3 + $0x488] sm:$0xff]
    %v469 = vld [vmem:[#allocation3 + $0x490] sm:$0xff]
    %v470 = vld [vmem:[#allocation3 + $0x498] sm:$0xff]
    %v471 = vld [vmem:[#allocation3 + $0x4a0] sm:$0xff]
    %v472 = vld [vmem:[#allocation3 + $0x4a8] sm:$0xff]
    %v473 = vld [vmem:[#allocation3 + $0x4b0] sm:$0xff]
    %v474 = vld [vmem:[#allocation3 + $0x4b8] sm:$0xff]
    %v475 = vld [vmem:[#allocation3 + $0x4c0] sm:$0xff]
    %v476 = vld [vmem:[#allocation3 + $0x4c8] sm:$0xff]
    %v477 = vld [vmem:[#allocation3 + $0x4d0] sm:$0xff]
    %v478 = vld [vmem:[#allocation3 + $0x4d8] sm:$0xff]
    %v479 = vld [vmem:[#allocation3 + $0x4e0] sm:$0xff]
    %v480 = vld [vmem:[#allocation3 + $0x4e8] sm:$0xff]
    %v481 = vld [vmem:[#allocation3 + $0x4f0] sm:$0xff]
    %v482 = vld [vmem:[#allocation3 + $0x4f8] sm:$0xff]
    %v483 = vld [vmem:[#allocation3 + $0x500] sm:$0xff]
    %v484 = vld [vmem:[#allocation3 + $0x508] sm:$0xff]
    %v485 = vld [vmem:[#allocation3 + $0x510] sm:$0xff]
    %v486 = vld [vmem:[#allocation3 + $0x518] sm:$0xff]
    %v487 = vld [vmem:[#allocation3 + $0x520] sm:$0xff]
    %v488 = vld [vmem:[#allocation3 + $0x528] sm:$0xff]
    %v489 = vld [vmem:[#allocation3 + $0x530] sm:$0xff]
    %v490 = vld [vmem:[#allocation3 + $0x538] sm:$0xff]
    %v491 = vld [vmem:[#allocation3 + $0x540] sm:$0xff]
    %v492 = vld [vmem:[#allocation3 + $0x548] sm:$0xff]
    %v493 = vld [vmem:[#allocation3 + $0x550] sm:$0xff]
    %v494 = vld [vmem:[#allocation3 + $0x558] sm:$0xff]
    %v495 = vld [vmem:[#allocation3 + $0x560] sm:$0xff]
    %v496 = vld [vmem:[#allocation3 + $0x568] sm:$0xff]
    %v497 = vld [vmem:[#allocation3 + $0x570] sm:$0xff]
    %v498 = vld [vmem:[#allocation3 + $0x578] sm:$0xff]
    %v499 = vld [vmem:[#allocation3 + $0x580] sm:$0xff]
    %v500 = vld [vmem:[#allocation3 + $0x588] sm:$0xff]
    %v501 = vld [vmem:[#allocation3 + $0x590] sm:$0xff]
    %v502 = vld [vmem:[#allocation3 + $0x598] sm:$0xff]
    %v503 = vld [vmem:[#allocation3 + $0x5a0] sm:$0xff]
    %v504 = vld [vmem:[#allocation3 + $0x5a8] sm:$0xff]
    %v505 = vld [vmem:[#allocation3 + $0x5b0] sm:$0xff]
    %v506 = vld [vmem:[#allocation3 + $0x5b8] sm:$0xff]
    %v507 = vld [vmem:[#allocation3 + $0x5c0] sm:$0xff]
    %v508 = vld [vmem:[#allocation3 + $0x5c8] sm:$0xff]
    %v509 = vld [vmem:[#allocation3 + $0x5d0] sm:$0xff]
    %v510 = vld [vmem:[#allocation3 + $0x5d8] sm:$0xff]
    %v511 = vld [vmem:[#allocation3 + $0x5e0] sm:$0xff]
    %v512 = vld [vmem:[#allocation3 + $0x5e8] sm:$0xff]
    %v513 = vld [vmem:[#allocation3 + $0x5f0] sm:$0xff]
    %v514 = vld [vmem:[#allocation3 + $0x5f8] sm:$0xff]
    %v515 = vld [vmem:[#allocation3 + $0x600] sm:$0xff]
    %v516 = vld [vmem:[#allocation3 + $0x608] sm:$0xff]
    %v517 = vld [vmem:[#allocation3 + $0x610] sm:$0xff]
    %v518 = vld [vmem:[#allocation3 + $0x618] sm:$0xff]
    %v519 = vld [vmem:[#allocation3 + $0x620] sm:$0xff]
    %v520 = vld [vmem:[#allocation3 + $0x628] sm:$0xff]
    %v521 = vld [vmem:[#allocation3 + $0x630] sm:$0xff]
    %v522 = vld [vmem:[#allocation3 + $0x638] sm:$0xff]
    %v523 = vld [vmem:[#allocation3 + $0x640] sm:$0xff]
    %v524 = vld [vmem:[#allocation3 + $0x648] sm:$0xff]
    %v525 = vld [vmem:[#allocation3 + $0x650] sm:$0xff]
    %v526 = vld [vmem:[#allocation3 + $0x658] sm:$0xff]
    %v527 = vld [vmem:[#allocation3 + $0x660] sm:$0xff]
    %v528 = vld [vmem:[#allocation3 + $0x668] sm:$0xff]
    %v529 = vld [vmem:[#allocation3 + $0x670] sm:$0xff]
    %v530 = vld [vmem:[#allocation3 + $0x678] sm:$0xff]
    %v531 = vld [vmem:[#allocation3 + $0x680] sm:$0xff]
    %v532 = vld [vmem:[#allocation3 + $0x688] sm:$0xff]
    %v533 = vld [vmem:[#allocation3 + $0x690] sm:$0xff]
    %v534 = vld [vmem:[#allocation3 + $0x698] sm:$0xff]
    %v535 = vld [vmem:[#allocation3 + $0x6a0] sm:$0xff]
    %v536 = vld [vmem:[#allocation3 + $0x6a8] sm:$0xff]
    %v537 = vld [vmem:[#allocation3 + $0x6b0] sm:$0xff]
    %v538 = vld [vmem:[#allocation3 + $0x6b8] sm:$0xff]
    %v539 = vld [vmem:[#allocation3 + $0x6c0] sm:$0xff]
    %v540 = vld [vmem:[#allocation3 + $0x6c8] sm:$0xff]
    %v541 = vld [vmem:[#allocation3 + $0x6d0] sm:$0xff]
    %v542 = vld [vmem:[#allocation3 + $0x6d8] sm:$0xff]
    %v543 = vld [vmem:[#allocation3 + $0x6e0] sm:$0xff]
    %v544 = vld [vmem:[#allocation3 + $0x6e8] sm:$0xff]
    %v545 = vld [vmem:[#allocation3 + $0x6f0] sm:$0xff]
    %v546 = vld [vmem:[#allocation3 + $0x6f8] sm:$0xff]
    %v547 = vld [vmem:[#allocation3 + $0x700] sm:$0xff]
    %v548 = vld [vmem:[#allocation3 + $0x708] sm:$0xff]
    %v549 = vld [vmem:[#allocation3 + $0x710] sm:$0xff]
    %v550 = vld [vmem:[#allocation3 + $0x718] sm:$0xff]
    %v551 = vld [vmem:[#allocation3 + $0x720] sm:$0xff]
    %v552 = vld [vmem:[#allocation3 + $0x728] sm:$0xff]
    %v553 = vld [vmem:[#allocation3 + $0x730] sm:$0xff]
    %v554 = vld [vmem:[#allocation3 + $0x738] sm:$0xff]
    %v555 = vld [vmem:[#allocation3 + $0x740] sm:$0xff]
    %v556 = vld [vmem:[#allocation3 + $0x748] sm:$0xff]
    %v557 = vld [vmem:[#allocation3 + $0x750] sm:$0xff]
    %v558 = vld [vmem:[#allocation3 + $0x758] sm:$0xff]
    %v559 = vld [vmem:[#allocation3 + $0x760] sm:$0xff]
    %v560 = vld [vmem:[#allocation3 + $0x768] sm:$0xff]
    %v561 = vld [vmem:[#allocation3 + $0x770] sm:$0xff]
    %v562 = vld [vmem:[#allocation3 + $0x778] sm:$0xff]
    %v563 = vld [vmem:[#allocation3 + $0x780] sm:$0xff]
    %v564 = vld [vmem:[#allocation3 + $0x788] sm:$0xff]
    %v565 = vld [vmem:[#allocation3 + $0x790] sm:$0xff]
    %v566 = vld [vmem:[#allocation3 + $0x798] sm:$0xff]
    %v567 = vld [vmem:[#allocation3 + $0x7a0] sm:$0xff]
    %v568 = vld [vmem:[#allocation3 + $0x7a8] sm:$0xff]
    %v569 = vld [vmem:[#allocation3 + $0x7b0] sm:$0xff]
    %v570 = vld [vmem:[#allocation3 + $0x7b8] sm:$0xff]
    %v571 = vld [vmem:[#allocation3 + $0x7c0] sm:$0xff]
    %v572 = vld [vmem:[#allocation3 + $0x7c8] sm:$0xff]
    %v573 = vld [vmem:[#allocation3 + $0x7d0] sm:$0xff]
    %v574 = vld [vmem:[#allocation3 + $0x7d8] sm:$0xff]
    %v575 = vld [vmem:[#allocation3 + $0x7e0] sm:$0xff]
    %v576 = vld [vmem:[#allocation3 + $0x7e8] sm:$0xff]
    %v577 = vld [vmem:[#allocation3 + $0x7f0] sm:$0xff]
    %v578 = vld [vmem:[#allocation3 + $0x7f8] sm:$0xff]
    %579 = vmatpush.msra.mxu0 %v443
    %580 = vmatpush.msra.mxu0 %v435
    %581 = vmatpush.msra.mxu0 %v427
    %582 = vmatpush.msra.mxu0 %v419
    %583 = vmatpush.msra.mxu0 %v411
    %584 = vmatpush.msra.mxu0 %v403
    %585 = vmatpush.msra.mxu0 %v395
    %586 = vmatpush.msra.mxu0 %v387
    %587 = vmatpush.msra.mxu0 %v379
    %588 = vmatpush.msra.mxu0 %v371
    %589 = vmatpush.msra.mxu0 %v363
    %590 = vmatpush.msra.mxu0 %v355
    %591 = vmatpush.msra.mxu0 %v347
    %592 = vmatpush.msra.mxu0 %v339
    %593 = vmatpush.msra.mxu0 %v331
    %594 = vmatpush.msra.mxu0 %v323
    %595 = vmatmul.f32.gmra.mxu0 %v317
    %v596 = vpop.f32.mrf.mxu0
    %v597 = vadd.f32 0.0, %v596
    %598 = vdwg.mxu0
    %599 = vmatpush.msra.mxu0 %v571
    %600 = vmatpush.msra.mxu0 %v563
    %601 = vmatpush.msra.mxu0 %v555
    %602 = vmatpush.msra.mxu0 %v547
    %603 = vmatpush.msra.mxu0 %v539
    %604 = vmatpush.msra.mxu0 %v531
    %605 = vmatpush.msra.mxu0 %v523
    %606 = vmatpush.msra.mxu0 %v515
    %607 = vmatpush.msra.mxu0 %v507
    %608 = vmatpush.msra.mxu0 %v499
    %609 = vmatpush.msra.mxu0 %v491
    %610 = vmatpush.msra.mxu0 %v483
    %611 = vmatpush.msra.mxu0 %v475
    %612 = vmatpush.msra.mxu0 %v467
    %613 = vmatpush.msra.mxu0 %v459
    %614 = vmatpush.msra.mxu0 %v451
    %615 = vmatmul.f32.gmra.mxu0 0.0
    %v616 = vpop.f32.mrf.mxu0
    %v617 = vadd.f32 %v597, %v616
    %618 = vdwg.mxu0
    %619 = vmatpush.msra.mxu0 %v444
    %620 = vmatpush.msra.mxu0 %v436
    %621 = vmatpush.msra.mxu0 %v428
    %622 = vmatpush.msra.mxu0 %v420
    %623 = vmatpush.msra.mxu0 %v412
    %624 = vmatpush.msra.mxu0 %v404
    %625 = vmatpush.msra.mxu0 %v396
    %626 = vmatpush.msra.mxu0 %v388
    %627 = vmatpush.msra.mxu0 %v380
    %628 = vmatpush.msra.mxu0 %v372
    %629 = vmatpush.msra.mxu0 %v364
    %630 = vmatpush.msra.mxu0 %v356
    %631 = vmatpush.msra.mxu0 %v348
    %632 = vmatpush.msra.mxu0 %v340
    %633 = vmatpush.msra.mxu0 %v332
    %634 = vmatpush.msra.mxu0 %v324
    %635 = vmatmul.f32.gmra.mxu0 %v317
    %v636 = vpop.f32.mrf.mxu0
    %v637 = vadd.f32 0.0, %v636
    %638 = vdwg.mxu0
    %639 = vmatpush.msra.mxu0 %v572
    %640 = vmatpush.msra.mxu0 %v564
    %641 = vmatpush.msra.mxu0 %v556
    %642 = vmatpush.msra.mxu0 %v548
    %643 = vmatpush.msra.mxu0 %v540
    %644 = vmatpush.msra.mxu0 %v532
    %645 = vmatpush.msra.mxu0 %v524
    %646 = vmatpush.msra.mxu0 %v516
    %647 = vmatpush.msra.mxu0 %v508
    %648 = vmatpush.msra.mxu0 %v500
    %649 = vmatpush.msra.mxu0 %v492
    %650 = vmatpush.msra.mxu0 %v484
    %651 = vmatpush.msra.mxu0 %v476
    %652 = vmatpush.msra.mxu0 %v468
    %653 = vmatpush.msra.mxu0 %v460
    %654 = vmatpush.msra.mxu0 %v452
    %655 = vmatmul.f32.gmra.mxu0 0.0
    %v656 = vpop.f32.mrf.mxu0
    %v657 = vadd.f32 %v637, %v656
    %658 = vdwg.mxu0
    %659 = vmatpush.msra.mxu0 %v445
    %660 = vmatpush.msra.mxu0 %v437
    %661 = vmatpush.msra.mxu0 %v429
    %662 = vmatpush.msra.mxu0 %v421
    %663 = vmatpush.msra.mxu0 %v413
    %664 = vmatpush.msra.mxu0 %v405
    %665 = vmatpush.msra.mxu0 %v397
    %666 = vmatpush.msra.mxu0 %v389
    %667 = vmatpush.msra.mxu0 %v381
    %668 = vmatpush.msra.mxu0 %v373
    %669 = vmatpush.msra.mxu0 %v365
    %670 = vmatpush.msra.mxu0 %v357
    %671 = vmatpush.msra.mxu0 %v349
    %672 = vmatpush.msra.mxu0 %v341
    %673 = vmatpush.msra.mxu0 %v333
    %674 = vmatpush.msra.mxu0 %v325
    %675 = vmatmul.f32.gmra.mxu0 %v317
    %v676 = vpop.f32.mrf.mxu0
    %v677 = vadd.f32 0.0, %v676
    %678 = vdwg.mxu0
    %679 = vmatpush.msra.mxu0 %v573
    %680 = vmatpush.msra.mxu0 %v565
    %681 = vmatpush.msra.mxu0 %v557
    %682 = vmatpush.msra.mxu0 %v549
    %683 = vmatpush.msra.mxu0 %v541
    %684 = vmatpush.msra.mxu0 %v533
    %685 = vmatpush.msra.mxu0 %v525
    %686 = vmatpush.msra.mxu0 %v517
    %687 = vmatpush.msra.mxu0 %v509
    %688 = vmatpush.msra.mxu0 %v501
    %689 = vmatpush.msra.mxu0 %v493
    %690 = vmatpush.msra.mxu0 %v485
    %691 = vmatpush.msra.mxu0 %v477
    %692 = vmatpush.msra.mxu0 %v469
    %693 = vmatpush.msra.mxu0 %v461
    %694 = vmatpush.msra.mxu0 %v453
    %695 = vmatmul.f32.gmra.mxu0 0.0
    %v696 = vpop.f32.mrf.mxu0
    %v697 = vadd.f32 %v677, %v696
    %698 = vdwg.mxu0
    %699 = vmatpush.msra.mxu0 %v446
    %700 = vmatpush.msra.mxu0 %v438
    %701 = vmatpush.msra.mxu0 %v430
    %702 = vmatpush.msra.mxu0 %v422
    %703 = vmatpush.msra.mxu0 %v414
    %704 = vmatpush.msra.mxu0 %v406
    %705 = vmatpush.msra.mxu0 %v398
    %706 = vmatpush.msra.mxu0 %v390
    %707 = vmatpush.msra.mxu0 %v382
    %708 = vmatpush.msra.mxu0 %v374
    %709 = vmatpush.msra.mxu0 %v366
    %710 = vmatpush.msra.mxu0 %v358
    %711 = vmatpush.msra.mxu0 %v350
    %712 = vmatpush.msra.mxu0 %v342
    %713 = vmatpush.msra.mxu0 %v334
    %714 = vmatpush.msra.mxu0 %v326
    %715 = vmatmul.f32.gmra.mxu0 %v317
    %v716 = vpop.f32.mrf.mxu0
    %v717 = vadd.f32 0.0, %v716
    %718 = vdwg.mxu0
    %719 = vmatpush.msra.mxu0 %v574
    %720 = vmatpush.msra.mxu0 %v566
    %721 = vmatpush.msra.mxu0 %v558
    %722 = vmatpush.msra.mxu0 %v550
    %723 = vmatpush.msra.mxu0 %v542
    %724 = vmatpush.msra.mxu0 %v534
    %725 = vmatpush.msra.mxu0 %v526
    %726 = vmatpush.msra.mxu0 %v518
    %727 = vmatpush.msra.mxu0 %v510
    %728 = vmatpush.msra.mxu0 %v502
    %729 = vmatpush.msra.mxu0 %v494
    %730 = vmatpush.msra.mxu0 %v486
    %731 = vmatpush.msra.mxu0 %v478
    %732 = vmatpush.msra.mxu0 %v470
    %733 = vmatpush.msra.mxu0 %v462
    %734 = vmatpush.msra.mxu0 %v454
    %735 = vmatmul.f32.gmra.mxu0 0.0
    %v736 = vpop.f32.mrf.mxu0
    %v737 = vadd.f32 %v717, %v736
    %738 = vdwg.mxu0
    %739 = vmatpush.msra.mxu0 %v447
    %740 = vmatpush.msra.mxu0 %v439
    %741 = vmatpush.msra.mxu0 %v431
    %742 = vmatpush.msra.mxu0 %v423
    %743 = vmatpush.msra.mxu0 %v415
    %744 = vmatpush.msra.mxu0 %v407
    %745 = vmatpush.msra.mxu0 %v399
    %746 = vmatpush.msra.mxu0 %v391
    %747 = vmatpush.msra.mxu0 %v383
    %748 = vmatpush.msra.mxu0 %v375
    %749 = vmatpush.msra.mxu0 %v367
    %750 = vmatpush.msra.mxu0 %v359
    %751 = vmatpush.msra.mxu0 %v351
    %752 = vmatpush.msra.mxu0 %v343
    %753 = vmatpush.msra.mxu0 %v335
    %754 = vmatpush.msra.mxu0 %v327
    %755 = vmatmul.f32.gmra.mxu0 %v317
    %v756 = vpop.f32.mrf.mxu0
    %v757 = vadd.f32 0.0, %v756
    %758 = vdwg.mxu0
    %759 = vmatpush.msra.mxu0 %v575
    %760 = vmatpush.msra.mxu0 %v567
    %761 = vmatpush.msra.mxu0 %v559
    %762 = vmatpush.msra.mxu0 %v551
    %763 = vmatpush.msra.mxu0 %v543
    %764 = vmatpush.msra.mxu0 %v535
    %765 = vmatpush.msra.mxu0 %v527
    %766 = vmatpush.msra.mxu0 %v519
    %767 = vmatpush.msra.mxu0 %v511
    %768 = vmatpush.msra.mxu0 %v503
    %769 = vmatpush.msra.mxu0 %v495
    %770 = vmatpush.msra.mxu0 %v487
    %771 = vmatpush.msra.mxu0 %v479
    %772 = vmatpush.msra.mxu0 %v471
    %773 = vmatpush.msra.mxu0 %v463
    %774 = vmatpush.msra.mxu0 %v455
    %775 = vmatmul.f32.gmra.mxu0 0.0
    %v776 = vpop.f32.mrf.mxu0
    %v777 = vadd.f32 %v757, %v776
    %778 = vdwg.mxu0
    %779 = vmatpush.msra.mxu0 %v448
    %780 = vmatpush.msra.mxu0 %v440
    %781 = vmatpush.msra.mxu0 %v432
    %782 = vmatpush.msra.mxu0 %v424
    %783 = vmatpush.msra.mxu0 %v416
    %784 = vmatpush.msra.mxu0 %v408
    %785 = vmatpush.msra.mxu0 %v400
    %786 = vmatpush.msra.mxu0 %v392
    %787 = vmatpush.msra.mxu0 %v384
    %788 = vmatpush.msra.mxu0 %v376
    %789 = vmatpush.msra.mxu0 %v368
    %790 = vmatpush.msra.mxu0 %v360
    %791 = vmatpush.msra.mxu0 %v352
    %792 = vmatpush.msra.mxu0 %v344
    %793 = vmatpush.msra.mxu0 %v336
    %794 = vmatpush.msra.mxu0 %v328
    %795 = vmatmul.f32.gmra.mxu0 %v317
    %v796 = vpop.f32.mrf.mxu0
    %v797 = vadd.f32 0.0, %v796
    %798 = vdwg.mxu0
    %799 = vmatpush.msra.mxu0 %v576
    %800 = vmatpush.msra.mxu0 %v568
    %801 = vmatpush.msra.mxu0 %v560
    %802 = vmatpush.msra.mxu0 %v552
    %803 = vmatpush.msra.mxu0 %v544
    %804 = vmatpush.msra.mxu0 %v536
    %805 = vmatpush.msra.mxu0 %v528
    %806 = vmatpush.msra.mxu0 %v520
    %807 = vmatpush.msra.mxu0 %v512
    %808 = vmatpush.msra.mxu0 %v504
    %809 = vmatpush.msra.mxu0 %v496
    %810 = vmatpush.msra.mxu0 %v488
    %811 = vmatpush.msra.mxu0 %v480
    %812 = vmatpush.msra.mxu0 %v472
    %813 = vmatpush.msra.mxu0 %v464
    %814 = vmatpush.msra.mxu0 %v456
    %815 = vmatmul.f32.gmra.mxu0 0.0
    %v816 = vpop.f32.mrf.mxu0
    %v817 = vadd.f32 %v797, %v816
    %818 = vdwg.mxu0
    %819 = vmatpush.msra.mxu0 %v449
    %820 = vmatpush.msra.mxu0 %v441
    %821 = vmatpush.msra.mxu0 %v433
    %822 = vmatpush.msra.mxu0 %v425
    %823 = vmatpush.msra.mxu0 %v417
    %824 = vmatpush.msra.mxu0 %v409
    %825 = vmatpush.msra.mxu0 %v401
    %826 = vmatpush.msra.mxu0 %v393
    %827 = vmatpush.msra.mxu0 %v385
    %828 = vmatpush.msra.mxu0 %v377
    %829 = vmatpush.msra.mxu0 %v369
    %830 = vmatpush.msra.mxu0 %v361
    %831 = vmatpush.msra.mxu0 %v353
    %832 = vmatpush.msra.mxu0 %v345
    %833 = vmatpush.msra.mxu0 %v337
    %834 = vmatpush.msra.mxu0 %v329
    %835 = vmatmul.f32.gmra.mxu0 %v317
    %v836 = vpop.f32.mrf.mxu0
    %v837 = vadd.f32 0.0, %v836
    %838 = vdwg.mxu0
    %839 = vmatpush.msra.mxu0 %v577
    %840 = vmatpush.msra.mxu0 %v569
    %841 = vmatpush.msra.mxu0 %v561
    %842 = vmatpush.msra.mxu0 %v553
    %843 = vmatpush.msra.mxu0 %v545
    %844 = vmatpush.msra.mxu0 %v537
    %845 = vmatpush.msra.mxu0 %v529
    %846 = vmatpush.msra.mxu0 %v521
    %847 = vmatpush.msra.mxu0 %v513
    %848 = vmatpush.msra.mxu0 %v505
    %849 = vmatpush.msra.mxu0 %v497
    %850 = vmatpush.msra.mxu0 %v489
    %851 = vmatpush.msra.mxu0 %v481
    %852 = vmatpush.msra.mxu0 %v473
    %853 = vmatpush.msra.mxu0 %v465
    %854 = vmatpush.msra.mxu0 %v457
    %855 = vmatmul.f32.gmra.mxu0 0.0
    %v856 = vpop.f32.mrf.mxu0
    %v857 = vadd.f32 %v837, %v856
    %858 = vdwg.mxu0
    %859 = vmatpush.msra.mxu0 %v450
    %860 = vmatpush.msra.mxu0 %v442
    %861 = vmatpush.msra.mxu0 %v434
    %862 = vmatpush.msra.mxu0 %v426
    %863 = vmatpush.msra.mxu0 %v418
    %864 = vmatpush.msra.mxu0 %v410
    %865 = vmatpush.msra.mxu0 %v402
    %866 = vmatpush.msra.mxu0 %v394
    %867 = vmatpush.msra.mxu0 %v386
    %868 = vmatpush.msra.mxu0 %v378
    %869 = vmatpush.msra.mxu0 %v370
    %870 = vmatpush.msra.mxu0 %v362
    %871 = vmatpush.msra.mxu0 %v354
    %872 = vmatpush.msra.mxu0 %v346
    %873 = vmatpush.msra.mxu0 %v338
    %874 = vmatpush.msra.mxu0 %v330
    %875 = vmatmul.f32.gmra.mxu0 %v317
    %v876 = vpop.f32.mrf.mxu0
    %v877 = vadd.f32 0.0, %v876
    %878 = vdwg.mxu0
    %879 = vmatpush.msra.mxu0 %v578
    %880 = vmatpush.msra.mxu0 %v570
    %881 = vmatpush.msra.mxu0 %v562
    %882 = vmatpush.msra.mxu0 %v554
    %883 = vmatpush.msra.mxu0 %v546
    %884 = vmatpush.msra.mxu0 %v538
    %885 = vmatpush.msra.mxu0 %v530
    %886 = vmatpush.msra.mxu0 %v522
    %887 = vmatpush.msra.mxu0 %v514
    %888 = vmatpush.msra.mxu0 %v506
    %889 = vmatpush.msra.mxu0 %v498
    %890 = vmatpush.msra.mxu0 %v490
    %891 = vmatpush.msra.mxu0 %v482
    %892 = vmatpush.msra.mxu0 %v474
    %893 = vmatpush.msra.mxu0 %v466
    %894 = vmatpush.msra.mxu0 %v458
    %895 = vmatmul.f32.gmra.mxu0 0.0
    %v896 = vpop.f32.mrf.mxu0
    %v897 = vadd.f32 %v877, %v896
    %898 = vdwg.mxu0
    %s899 = smul.u32 1, 4
    %s900 = smul.addr %s899, 8
    %s901 = scalar_lea.vmem [#allocation2], %s900
    %v902 = vld [vmem:[%s901] sm:$0xff]
    %v903 = vld [vmem:[%s901 + $0x8] sm:$0xff]
    %v904 = vld [vmem:[%s901 + $0x10] sm:$0xff]
    %v905 = vld [vmem:[%s901 + $0x18] sm:$0xff]
    %v906 = vadd.f32 %v902, %v617
    %v907 = vadd.f32 %v903, %v657
    %v908 = vadd.f32 %v904, %v697
    %v909 = vadd.f32 %v905, %v737
    %v911 = vperm.slane %v322, 0
    %v912 = vperm.slane %v322, 1
    %v913 = vperm.slane %v322, 2
    %v914 = vperm.slane %v322, 3
    %v919 = vadd.f32 %v777, %v911
    %v920 = vadd.f32 %v817, %v912
    %v921 = vadd.f32 %v857, %v913
    %v922 = vadd.f32 %v897, %v914
    %v923 = vmul.f32 %v906, 0.5
    %v924 = vtanh.pop %v923
    %v925 = vadd.f32 %v924, 1.0
    %v926 = vmul.f32 %v925, 0.5
    %v927 = vmul.f32 %v907, 0.5
    %v928 = vtanh.pop %v927
    %v929 = vadd.f32 %v928, 1.0
    %v930 = vmul.f32 %v929, 0.5
    %v931 = vtanh.pop %v908
    %v932 = vmul.f32 %v909, 0.5
    %v933 = vtanh.pop %v932
    %v934 = vadd.f32 %v933, 1.0
    %v935 = vmul.f32 %v934, 0.5
    %v936 = vmul.f32 %v930, %v315
    %v937 = vmul.f32 %v926, %v931
    %v938 = vadd.f32 %v936, %v937
    %v939 = vtanh.pop %v938
    %v940 = vmul.f32 %v935, %v939
    %v941 = vmul.f32 %v919, 0.5
    %v942 = vtanh.pop %v941
    %v943 = vadd.f32 %v942, 1.0
    %v944 = vmul.f32 %v943, 0.5
    %v945 = vmul.f32 %v920, 0.5
    %v946 = vtanh.pop %v945
    %v947 = vadd.f32 %v946, 1.0
    %v948 = vmul.f32 %v947, 0.5
    %v949 = vtanh.pop %v921
    %v950 = vmul.f32 %v922, 0.5
    %v951 = vtanh.pop %v950
    %v952 = vadd.f32 %v951, 1.0
    %v953 = vmul.f32 %v952, 0.5
    %v954 = vmul.f32 %v948, 0.0
    %v955 = vmul.f32 %v944, %v949
    %v956 = vadd.f32 %v954, %v955
    %v957 = vtanh.pop %v956
    %v958 = vmul.f32 %v953, %v957
    %959 = vmatpush.msra.mxu0 %v443
    %960 = vmatpush.msra.mxu0 %v435
    %961 = vmatpush.msra.mxu0 %v427
    %962 = vmatpush.msra.mxu0 %v419
    %963 = vmatpush.msra.mxu0 %v411
    %964 = vmatpush.msra.mxu0 %v403
    %965 = vmatpush.msra.mxu0 %v395
    %966 = vmatpush.msra.mxu0 %v387
    %967 = vmatpush.msra.mxu0 %v379
    %968 = vmatpush.msra.mxu0 %v371
    %969 = vmatpush.msra.mxu0 %v363
    %970 = vmatpush.msra.mxu0 %v355
    %971 = vmatpush.msra.mxu0 %v347
    %972 = vmatpush.msra.mxu0 %v339
    %973 = vmatpush.msra.mxu0 %v331
    %974 = vmatpush.msra.mxu0 %v323
    %975 = vmatmul.f32.gmra.mxu0 %v940
    %v976 = vpop.f32.mrf.mxu0
    %v977 = vadd.f32 0.0, %v976
    %978 = vdwg.mxu0
    %979 = vmatpush.msra.mxu0 %v571
    %980 = vmatpush.msra.mxu0 %v563
    %981 = vmatpush.msra.mxu0 %v555
    %982 = vmatpush.msra.mxu0 %v547
    %983 = vmatpush.msra.mxu0 %v539
    %984 = vmatpush.msra.mxu0 %v531
    %985 = vmatpush.msra.mxu0 %v523
    %986 = vmatpush.msra.mxu0 %v515
    %987 = vmatpush.msra.mxu0 %v507
    %988 = vmatpush.msra.mxu0 %v499
    %989 = vmatpush.msra.mxu0 %v491
    %990 = vmatpush.msra.mxu0 %v483
    %991 = vmatpush.msra.mxu0 %v475
    %992 = vmatpush.msra.mxu0 %v467
    %993 = vmatpush.msra.mxu0 %v459
    %994 = vmatpush.msra.mxu0 %v451
    %995 = vmatmul.f32.gmra.mxu0 %v958
    %v996 = vpop.f32.mrf.mxu0
    %v997 = vadd.f32 %v977, %v996
    %998 = vdwg.mxu0
    %999 = vmatpush.msra.mxu0 %v444
    %1000 = vmatpush.msra.mxu0 %v436
    %1001 = vmatpush.msra.mxu0 %v428
    %1002 = vmatpush.msra.mxu0 %v420
    %1003 = vmatpush.msra.mxu0 %v412
    %1004 = vmatpush.msra.mxu0 %v404
    %1005 = vmatpush.msra.mxu0 %v396
    %1006 = vmatpush.msra.mxu0 %v388
    %1007 = vmatpush.msra.mxu0 %v380
    %1008 = vmatpush.msra.mxu0 %v372
    %1009 = vmatpush.msra.mxu0 %v364
    %1010 = vmatpush.msra.mxu0 %v356
    %1011 = vmatpush.msra.mxu0 %v348
    %1012 = vmatpush.msra.mxu0 %v340
    %1013 = vmatpush.msra.mxu0 %v332
    %1014 = vmatpush.msra.mxu0 %v324
    %1015 = vmatmul.f32.gmra.mxu0 %v940
    %v1016 = vpop.f32.mrf.mxu0
    %v1017 = vadd.f32 0.0, %v1016
    %1018 = vdwg.mxu0
    %1019 = vmatpush.msra.mxu0 %v572
    %1020 = vmatpush.msra.mxu0 %v564
    %1021 = vmatpush.msra.mxu0 %v556
    %1022 = vmatpush.msra.mxu0 %v548
    %1023 = vmatpush.msra.mxu0 %v540
    %1024 = vmatpush.msra.mxu0 %v532
    %1025 = vmatpush.msra.mxu0 %v524
    %1026 = vmatpush.msra.mxu0 %v516
    %1027 = vmatpush.msra.mxu0 %v508
    %1028 = vmatpush.msra.mxu0 %v500
    %1029 = vmatpush.msra.mxu0 %v492
    %1030 = vmatpush.msra.mxu0 %v484
    %1031 = vmatpush.msra.mxu0 %v476
    %1032 = vmatpush.msra.mxu0 %v468
    %1033 = vmatpush.msra.mxu0 %v460
    %1034 = vmatpush.msra.mxu0 %v452
    %1035 = vmatmul.f32.gmra.mxu0 %v958
    %v1036 = vpop.f32.mrf.mxu0
    %v1037 = vadd.f32 %v1017, %v1036
    %1038 = vdwg.mxu0
    %1039 = vmatpush.msra.mxu0 %v445
    %1040 = vmatpush.msra.mxu0 %v437
    %1041 = vmatpush.msra.mxu0 %v429
    %1042 = vmatpush.msra.mxu0 %v421
    %1043 = vmatpush.msra.mxu0 %v413
    %1044 = vmatpush.msra.mxu0 %v405
    %1045 = vmatpush.msra.mxu0 %v397
    %1046 = vmatpush.msra.mxu0 %v389
    %1047 = vmatpush.msra.mxu0 %v381
    %1048 = vmatpush.msra.mxu0 %v373
    %1049 = vmatpush.msra.mxu0 %v365
    %1050 = vmatpush.msra.mxu0 %v357
    %1051 = vmatpush.msra.mxu0 %v349
    %1052 = vmatpush.msra.mxu0 %v341
    %1053 = vmatpush.msra.mxu0 %v333
    %1054 = vmatpush.msra.mxu0 %v325
    %1055 = vmatmul.f32.gmra.mxu0 %v940
    %v1056 = vpop.f32.mrf.mxu0
    %v1057 = vadd.f32 0.0, %v1056
    %1058 = vdwg.mxu0
    %1059 = vmatpush.msra.mxu0 %v573
    %1060 = vmatpush.msra.mxu0 %v565
    %1061 = vmatpush.msra.mxu0 %v557
    %1062 = vmatpush.msra.mxu0 %v549
    %1063 = vmatpush.msra.mxu0 %v541
    %1064 = vmatpush.msra.mxu0 %v533
    %1065 = vmatpush.msra.mxu0 %v525
    %1066 = vmatpush.msra.mxu0 %v517
    %1067 = vmatpush.msra.mxu0 %v509
    %1068 = vmatpush.msra.mxu0 %v501
    %1069 = vmatpush.msra.mxu0 %v493
    %1070 = vmatpush.msra.mxu0 %v485
    %1071 = vmatpush.msra.mxu0 %v477
    %1072 = vmatpush.msra.mxu0 %v469
    %1073 = vmatpush.msra.mxu0 %v461
    %1074 = vmatpush.msra.mxu0 %v453
    %1075 = vmatmul.f32.gmra.mxu0 %v958
    %v1076 = vpop.f32.mrf.mxu0
    %v1077 = vadd.f32 %v1057, %v1076
    %1078 = vdwg.mxu0
    %1079 = vmatpush.msra.mxu0 %v446
    %1080 = vmatpush.msra.mxu0 %v438
    %1081 = vmatpush.msra.mxu0 %v430
    %1082 = vmatpush.msra.mxu0 %v422
    %1083 = vmatpush.msra.mxu0 %v414
    %1084 = vmatpush.msra.mxu0 %v406
    %1085 = vmatpush.msra.mxu0 %v398
    %1086 = vmatpush.msra.mxu0 %v390
    %1087 = vmatpush.msra.mxu0 %v382
    %1088 = vmatpush.msra.mxu0 %v374
    %1089 = vmatpush.msra.mxu0 %v366
    %1090 = vmatpush.msra.mxu0 %v358
    %1091 = vmatpush.msra.mxu0 %v350
    %1092 = vmatpush.msra.mxu0 %v342
    %1093 = vmatpush.msra.mxu0 %v334
    %1094 = vmatpush.msra.mxu0 %v326
    %1095 = vmatmul.f32.gmra.mxu0 %v940
    %v1096 = vpop.f32.mrf.mxu0
    %v1097 = vadd.f32 0.0, %v1096
    %1098 = vdwg.mxu0
    %1099 = vmatpush.msra.mxu0 %v574
    %1100 = vmatpush.msra.mxu0 %v566
    %1101 = vmatpush.msra.mxu0 %v558
    %1102 = vmatpush.msra.mxu0 %v550
    %1103 = vmatpush.msra.mxu0 %v542
    %1104 = vmatpush.msra.mxu0 %v534
    %1105 = vmatpush.msra.mxu0 %v526
    %1106 = vmatpush.msra.mxu0 %v518
    %1107 = vmatpush.msra.mxu0 %v510
    %1108 = vmatpush.msra.mxu0 %v502
    %1109 = vmatpush.msra.mxu0 %v494
    %1110 = vmatpush.msra.mxu0 %v486
    %1111 = vmatpush.msra.mxu0 %v478
    %1112 = vmatpush.msra.mxu0 %v470
    %1113 = vmatpush.msra.mxu0 %v462
    %1114 = vmatpush.msra.mxu0 %v454
    %1115 = vmatmul.f32.gmra.mxu0 %v958
    %v1116 = vpop.f32.mrf.mxu0
    %v1117 = vadd.f32 %v1097, %v1116
    %1118 = vdwg.mxu0
    %1119 = vmatpush.msra.mxu0 %v447
    %1120 = vmatpush.msra.mxu0 %v439
    %1121 = vmatpush.msra.mxu0 %v431
    %1122 = vmatpush.msra.mxu0 %v423
    %1123 = vmatpush.msra.mxu0 %v415
    %1124 = vmatpush.msra.mxu0 %v407
    %1125 = vmatpush.msra.mxu0 %v399
    %1126 = vmatpush.msra.mxu0 %v391
    %1127 = vmatpush.msra.mxu0 %v383
    %1128 = vmatpush.msra.mxu0 %v375
    %1129 = vmatpush.msra.mxu0 %v367
    %1130 = vmatpush.msra.mxu0 %v359
    %1131 = vmatpush.msra.mxu0 %v351
    %1132 = vmatpush.msra.mxu0 %v343
    %1133 = vmatpush.msra.mxu0 %v335
    %1134 = vmatpush.msra.mxu0 %v327
    %1135 = vmatmul.f32.gmra.mxu0 %v940
    %v1136 = vpop.f32.mrf.mxu0
    %v1137 = vadd.f32 0.0, %v1136
    %1138 = vdwg.mxu0
    %1139 = vmatpush.msra.mxu0 %v575
    %1140 = vmatpush.msra.mxu0 %v567
    %1141 = vmatpush.msra.mxu0 %v559
    %1142 = vmatpush.msra.mxu0 %v551
    %1143 = vmatpush.msra.mxu0 %v543
    %1144 = vmatpush.msra.mxu0 %v535
    %1145 = vmatpush.msra.mxu0 %v527
    %1146 = vmatpush.msra.mxu0 %v519
    %1147 = vmatpush.msra.mxu0 %v511
    %1148 = vmatpush.msra.mxu0 %v503
    %1149 = vmatpush.msra.mxu0 %v495
    %1150 = vmatpush.msra.mxu0 %v487
    %1151 = vmatpush.msra.mxu0 %v479
    %1152 = vmatpush.msra.mxu0 %v471
    %1153 = vmatpush.msra.mxu0 %v463
    %1154 = vmatpush.msra.mxu0 %v455
    %1155 = vmatmul.f32.gmra.mxu0 %v958
    %v1156 = vpop.f32.mrf.mxu0
    %v1157 = vadd.f32 %v1137, %v1156
    %1158 = vdwg.mxu0
    %1159 = vmatpush.msra.mxu0 %v448
    %1160 = vmatpush.msra.mxu0 %v440
    %1161 = vmatpush.msra.mxu0 %v432
    %1162 = vmatpush.msra.mxu0 %v424
    %1163 = vmatpush.msra.mxu0 %v416
    %1164 = vmatpush.msra.mxu0 %v408
    %1165 = vmatpush.msra.mxu0 %v400
    %1166 = vmatpush.msra.mxu0 %v392
    %1167 = vmatpush.msra.mxu0 %v384
    %1168 = vmatpush.msra.mxu0 %v376
    %1169 = vmatpush.msra.mxu0 %v368
    %1170 = vmatpush.msra.mxu0 %v360
    %1171 = vmatpush.msra.mxu0 %v352
    %1172 = vmatpush.msra.mxu0 %v344
    %1173 = vmatpush.msra.mxu0 %v336
    %1174 = vmatpush.msra.mxu0 %v328
    %1175 = vmatmul.f32.gmra.mxu0 %v940
    %v1176 = vpop.f32.mrf.mxu0
    %v1177 = vadd.f32 0.0, %v1176
    %1178 = vdwg.mxu0
    %1179 = vmatpush.msra.mxu0 %v576
    %1180 = vmatpush.msra.mxu0 %v568
    %1181 = vmatpush.msra.mxu0 %v560
    %1182 = vmatpush.msra.mxu0 %v552
    %1183 = vmatpush.msra.mxu0 %v544
    %1184 = vmatpush.msra.mxu0 %v536
    %1185 = vmatpush.msra.mxu0 %v528
    %1186 = vmatpush.msra.mxu0 %v520
    %1187 = vmatpush.msra.mxu0 %v512
    %1188 = vmatpush.msra.mxu0 %v504
    %1189 = vmatpush.msra.mxu0 %v496
    %1190 = vmatpush.msra.mxu0 %v488
    %1191 = vmatpush.msra.mxu0 %v480
    %1192 = vmatpush.msra.mxu0 %v472
    %1193 = vmatpush.msra.mxu0 %v464
    %1194 = vmatpush.msra.mxu0 %v456
    %1195 = vmatmul.f32.gmra.mxu0 %v958
    %v1196 = vpop.f32.mrf.mxu0
    %v1197 = vadd.f32 %v1177, %v1196
    %1198 = vdwg.mxu0
    %1199 = vmatpush.msra.mxu0 %v449
    %1200 = vmatpush.msra.mxu0 %v441
    %1201 = vmatpush.msra.mxu0 %v433
    %1202 = vmatpush.msra.mxu0 %v425
    %1203 = vmatpush.msra.mxu0 %v417
    %1204 = vmatpush.msra.mxu0 %v409
    %1205 = vmatpush.msra.mxu0 %v401
    %1206 = vmatpush.msra.mxu0 %v393
    %1207 = vmatpush.msra.mxu0 %v385
    %1208 = vmatpush.msra.mxu0 %v377
    %1209 = vmatpush.msra.mxu0 %v369
    %1210 = vmatpush.msra.mxu0 %v361
    %1211 = vmatpush.msra.mxu0 %v353
    %1212 = vmatpush.msra.mxu0 %v345
    %1213 = vmatpush.msra.mxu0 %v337
    %1214 = vmatpush.msra.mxu0 %v329
    %1215 = vmatmul.f32.gmra.mxu0 %v940
    %v1216 = vpop.f32.mrf.mxu0
    %v1217 = vadd.f32 0.0, %v1216
    %1218 = vdwg.mxu0
    %1219 = vmatpush.msra.mxu0 %v577
    %1220 = vmatpush.msra.mxu0 %v569
    %1221 = vmatpush.msra.mxu0 %v561
    %1222 = vmatpush.msra.mxu0 %v553
    %1223 = vmatpush.msra.mxu0 %v545
    %1224 = vmatpush.msra.mxu0 %v537
    %1225 = vmatpush.msra.mxu0 %v529
    %1226 = vmatpush.msra.mxu0 %v521
    %1227 = vmatpush.msra.mxu0 %v513
    %1228 = vmatpush.msra.mxu0 %v505
    %1229 = vmatpush.msra.mxu0 %v497
    %1230 = vmatpush.msra.mxu0 %v489
    %1231 = vmatpush.msra.mxu0 %v481
    %1232 = vmatpush.msra.mxu0 %v473
    %1233 = vmatpush.msra.mxu0 %v465
    %1234 = vmatpush.msra.mxu0 %v457
    %1235 = vmatmul.f32.gmra.mxu0 %v958
    %v1236 = vpop.f32.mrf.mxu0
    %v1237 = vadd.f32 %v1217, %v1236
    %1238 = vdwg.mxu0
    %1239 = vmatpush.msra.mxu0 %v450
    %1240 = vmatpush.msra.mxu0 %v442
    %1241 = vmatpush.msra.mxu0 %v434
    %1242 = vmatpush.msra.mxu0 %v426
    %1243 = vmatpush.msra.mxu0 %v418
    %1244 = vmatpush.msra.mxu0 %v410
    %1245 = vmatpush.msra.mxu0 %v402
    %1246 = vmatpush.msra.mxu0 %v394
    %1247 = vmatpush.msra.mxu0 %v386
    %1248 = vmatpush.msra.mxu0 %v378
    %1249 = vmatpush.msra.mxu0 %v370
    %1250 = vmatpush.msra.mxu0 %v362
    %1251 = vmatpush.msra.mxu0 %v354
    %1252 = vmatpush.msra.mxu0 %v346
    %1253 = vmatpush.msra.mxu0 %v338
    %1254 = vmatpush.msra.mxu0 %v330
    %1255 = vmatmul.f32.gmra.mxu0 %v940
    %v1256 = vpop.f32.mrf.mxu0
    %v1257 = vadd.f32 0.0, %v1256
    %1258 = vdwg.mxu0
    %1259 = vmatpush.msra.mxu0 %v578
    %1260 = vmatpush.msra.mxu0 %v570
    %1261 = vmatpush.msra.mxu0 %v562
    %1262 = vmatpush.msra.mxu0 %v554
    %1263 = vmatpush.msra.mxu0 %v546
    %1264 = vmatpush.msra.mxu0 %v538
    %1265 = vmatpush.msra.mxu0 %v530
    %1266 = vmatpush.msra.mxu0 %v522
    %1267 = vmatpush.msra.mxu0 %v514
    %1268 = vmatpush.msra.mxu0 %v506
    %1269 = vmatpush.msra.mxu0 %v498
    %1270 = vmatpush.msra.mxu0 %v490
    %1271 = vmatpush.msra.mxu0 %v482
    %1272 = vmatpush.msra.mxu0 %v474
    %1273 = vmatpush.msra.mxu0 %v466
    %1274 = vmatpush.msra.mxu0 %v458
    %1275 = vmatmul.f32.gmra.mxu0 %v958
    %v1276 = vpop.f32.mrf.mxu0
    %v1277 = vadd.f32 %v1257, %v1276
    %1278 = vdwg.mxu0
    %s1279 = smul.u32 2, 4
    %s1280 = smul.addr %s1279, 8
    %s1281 = scalar_lea.vmem [#allocation2], %s1280
    %v1282 = vld [vmem:[%s1281] sm:$0xff]
    %v1283 = vld [vmem:[%s1281 + $0x8] sm:$0xff]
    %v1284 = vld [vmem:[%s1281 + $0x10] sm:$0xff]
    %v1285 = vld [vmem:[%s1281 + $0x18] sm:$0xff]
    %v1286 = vadd.f32 %v1282, %v997
    %v1287 = vadd.f32 %v1283, %v1037
    %v1288 = vadd.f32 %v1284, %v1077
    %v1289 = vadd.f32 %v1285, %v1117
    %v1290 = vadd.f32 %v1157, %v911
    %v1291 = vadd.f32 %v1197, %v912
    %v1292 = vadd.f32 %v1237, %v913
    %v1293 = vadd.f32 %v1277, %v914
    %v1294 = vmul.f32 %v1286, 0.5
    %v1295 = vtanh.pop %v1294
    %v1296 = vadd.f32 %v1295, 1.0
    %v1297 = vmul.f32 %v1296, 0.5
    %v1298 = vmul.f32 %v1287, 0.5
    %v1299 = vtanh.pop %v1298
    %v1300 = vadd.f32 %v1299, 1.0
    %v1301 = vmul.f32 %v1300, 0.5
    %v1302 = vtanh.pop %v1288
    %v1303 = vmul.f32 %v1289, 0.5
    %v1304 = vtanh.pop %v1303
    %v1305 = vadd.f32 %v1304, 1.0
    %v1306 = vmul.f32 %v1305, 0.5
    %v1307 = vmul.f32 %v1301, %v938
    %v1308 = vmul.f32 %v1297, %v1302
    %v1309 = vadd.f32 %v1307, %v1308
    %v1310 = vtanh.pop %v1309
    %v1311 = vmul.f32 %v1306, %v1310
    %v1312 = vmul.f32 %v1290, 0.5
    %v1313 = vtanh.pop %v1312
    %v1314 = vadd.f32 %v1313, 1.0
    %v1315 = vmul.f32 %v1314, 0.5
    %v1316 = vmul.f32 %v1291, 0.5
    %v1317 = vtanh.pop %v1316
    %v1318 = vadd.f32 %v1317, 1.0
    %v1319 = vmul.f32 %v1318, 0.5
    %v1320 = vtanh.pop %v1292
    %v1321 = vmul.f32 %v1293, 0.5
    %v1322 = vtanh.pop %v1321
    %v1323 = vadd.f32 %v1322, 1.0
    %v1324 = vmul.f32 %v1323, 0.5
    %v1325 = vmul.f32 %v1319, %v956
    %v1326 = vmul.f32 %v1315, %v1320
    %v1327 = vadd.f32 %v1325, %v1326
    %v1328 = vtanh.pop %v1327
    %v1329 = vmul.f32 %v1324, %v1328
    %1330 = vmatpush.msra.mxu0 %v443
    %1331 = vmatpush.msra.mxu0 %v435
    %1332 = vmatpush.msra.mxu0 %v427
    %1333 = vmatpush.msra.mxu0 %v419
    %1334 = vmatpush.msra.mxu0 %v411
    %1335 = vmatpush.msra.mxu0 %v403
    %1336 = vmatpush.msra.mxu0 %v395
    %1337 = vmatpush.msra.mxu0 %v387
    %1338 = vmatpush.msra.mxu0 %v379
    %1339 = vmatpush.msra.mxu0 %v371
    %1340 = vmatpush.msra.mxu0 %v363
    %1341 = vmatpush.msra.mxu0 %v355
    %1342 = vmatpush.msra.mxu0 %v347
    %1343 = vmatpush.msra.mxu0 %v339
    %1344 = vmatpush.msra.mxu0 %v331
    %1345 = vmatpush.msra.mxu0 %v323
    %1346 = vmatmul.f32.gmra.mxu0 %v1311
    %v1347 = vpop.f32.mrf.mxu0
    %v1348 = vadd.f32 0.0, %v1347
    %1349 = vdwg.mxu0
    %1350 = vmatpush.msra.mxu0 %v571
    %1351 = vmatpush.msra.mxu0 %v563
    %1352 = vmatpush.msra.mxu0 %v555
    %1353 = vmatpush.msra.mxu0 %v547
    %1354 = vmatpush.msra.mxu0 %v539
    %1355 = vmatpush.msra.mxu0 %v531
    %1356 = vmatpush.msra.mxu0 %v523
    %1357 = vmatpush.msra.mxu0 %v515
    %1358 = vmatpush.msra.mxu0 %v507
    %1359 = vmatpush.msra.mxu0 %v499
    %1360 = vmatpush.msra.mxu0 %v491
    %1361 = vmatpush.msra.mxu0 %v483
    %1362 = vmatpush.msra.mxu0 %v475
    %1363 = vmatpush.msra.mxu0 %v467
    %1364 = vmatpush.msra.mxu0 %v459
    %1365 = vmatpush.msra.mxu0 %v451
    %1366 = vmatmul.f32.gmra.mxu0 %v1329
    %v1367 = vpop.f32.mrf.mxu0
    %v1368 = vadd.f32 %v1348, %v1367
    %1369 = vdwg.mxu0
    %1370 = vmatpush.msra.mxu0 %v444
    %1371 = vmatpush.msra.mxu0 %v436
    %1372 = vmatpush.msra.mxu0 %v428
    %1373 = vmatpush.msra.mxu0 %v420
    %1374 = vmatpush.msra.mxu0 %v412
    %1375 = vmatpush.msra.mxu0 %v404
    %1376 = vmatpush.msra.mxu0 %v396
    %1377 = vmatpush.msra.mxu0 %v388
    %1378 = vmatpush.msra.mxu0 %v380
    %1379 = vmatpush.msra.mxu0 %v372
    %1380 = vmatpush.msra.mxu0 %v364
    %1381 = vmatpush.msra.mxu0 %v356
    %1382 = vmatpush.msra.mxu0 %v348
    %1383 = vmatpush.msra.mxu0 %v340
    %1384 = vmatpush.msra.mxu0 %v332
    %1385 = vmatpush.msra.mxu0 %v324
    %1386 = vmatmul.f32.gmra.mxu0 %v1311
    %v1387 = vpop.f32.mrf.mxu0
    %v1388 = vadd.f32 0.0, %v1387
    %1389 = vdwg.mxu0
    %1390 = vmatpush.msra.mxu0 %v572
    %1391 = vmatpush.msra.mxu0 %v564
    %1392 = vmatpush.msra.mxu0 %v556
    %1393 = vmatpush.msra.mxu0 %v548
    %1394 = vmatpush.msra.mxu0 %v540
    %1395 = vmatpush.msra.mxu0 %v532
    %1396 = vmatpush.msra.mxu0 %v524
    %1397 = vmatpush.msra.mxu0 %v516
    %1398 = vmatpush.msra.mxu0 %v508
    %1399 = vmatpush.msra.mxu0 %v500
    %1400 = vmatpush.msra.mxu0 %v492
    %1401 = vmatpush.msra.mxu0 %v484
    %1402 = vmatpush.msra.mxu0 %v476
    %1403 = vmatpush.msra.mxu0 %v468
    %1404 = vmatpush.msra.mxu0 %v460
    %1405 = vmatpush.msra.mxu0 %v452
    %1406 = vmatmul.f32.gmra.mxu0 %v1329
    %v1407 = vpop.f32.mrf.mxu0
    %v1408 = vadd.f32 %v1388, %v1407
    %1409 = vdwg.mxu0
    %1410 = vmatpush.msra.mxu0 %v445
    %1411 = vmatpush.msra.mxu0 %v437
    %1412 = vmatpush.msra.mxu0 %v429
    %1413 = vmatpush.msra.mxu0 %v421
    %1414 = vmatpush.msra.mxu0 %v413
    %1415 = vmatpush.msra.mxu0 %v405
    %1416 = vmatpush.msra.mxu0 %v397
    %1417 = vmatpush.msra.mxu0 %v389
    %1418 = vmatpush.msra.mxu0 %v381
    %1419 = vmatpush.msra.mxu0 %v373
    %1420 = vmatpush.msra.mxu0 %v365
    %1421 = vmatpush.msra.mxu0 %v357
    %1422 = vmatpush.msra.mxu0 %v349
    %1423 = vmatpush.msra.mxu0 %v341
    %1424 = vmatpush.msra.mxu0 %v333
    %1425 = vmatpush.msra.mxu0 %v325
    %1426 = vmatmul.f32.gmra.mxu0 %v1311
    %v1427 = vpop.f32.mrf.mxu0
    %v1428 = vadd.f32 0.0, %v1427
    %1429 = vdwg.mxu0
    %1430 = vmatpush.msra.mxu0 %v573
    %1431 = vmatpush.msra.mxu0 %v565
    %1432 = vmatpush.msra.mxu0 %v557
    %1433 = vmatpush.msra.mxu0 %v549
    %1434 = vmatpush.msra.mxu0 %v541
    %1435 = vmatpush.msra.mxu0 %v533
    %1436 = vmatpush.msra.mxu0 %v525
    %1437 = vmatpush.msra.mxu0 %v517
    %1438 = vmatpush.msra.mxu0 %v509
    %1439 = vmatpush.msra.mxu0 %v501
    %1440 = vmatpush.msra.mxu0 %v493
    %1441 = vmatpush.msra.mxu0 %v485
    %1442 = vmatpush.msra.mxu0 %v477
    %1443 = vmatpush.msra.mxu0 %v469
    %1444 = vmatpush.msra.mxu0 %v461
    %1445 = vmatpush.msra.mxu0 %v453
    %1446 = vmatmul.f32.gmra.mxu0 %v1329
    %v1447 = vpop.f32.mrf.mxu0
    %v1448 = vadd.f32 %v1428, %v1447
    %1449 = vdwg.mxu0
    %1450 = vmatpush.msra.mxu0 %v446
    %1451 = vmatpush.msra.mxu0 %v438
    %1452 = vmatpush.msra.mxu0 %v430
    %1453 = vmatpush.msra.mxu0 %v422
    %1454 = vmatpush.msra.mxu0 %v414
    %1455 = vmatpush.msra.mxu0 %v406
    %1456 = vmatpush.msra.mxu0 %v398
    %1457 = vmatpush.msra.mxu0 %v390
    %1458 = vmatpush.msra.mxu0 %v382
    %1459 = vmatpush.msra.mxu0 %v374
    %1460 = vmatpush.msra.mxu0 %v366
    %1461 = vmatpush.msra.mxu0 %v358
    %1462 = vmatpush.msra.mxu0 %v350
    %1463 = vmatpush.msra.mxu0 %v342
    %1464 = vmatpush.msra.mxu0 %v334
    %1465 = vmatpush.msra.mxu0 %v326
    %1466 = vmatmul.f32.gmra.mxu0 %v1311
    %v1467 = vpop.f32.mrf.mxu0
    %v1468 = vadd.f32 0.0, %v1467
    %1469 = vdwg.mxu0
    %1470 = vmatpush.msra.mxu0 %v574
    %1471 = vmatpush.msra.mxu0 %v566
    %1472 = vmatpush.msra.mxu0 %v558
    %1473 = vmatpush.msra.mxu0 %v550
    %1474 = vmatpush.msra.mxu0 %v542
    %1475 = vmatpush.msra.mxu0 %v534
    %1476 = vmatpush.msra.mxu0 %v526
    %1477 = vmatpush.msra.mxu0 %v518
    %1478 = vmatpush.msra.mxu0 %v510
    %1479 = vmatpush.msra.mxu0 %v502
    %1480 = vmatpush.msra.mxu0 %v494
    %1481 = vmatpush.msra.mxu0 %v486
    %1482 = vmatpush.msra.mxu0 %v478
    %1483 = vmatpush.msra.mxu0 %v470
    %1484 = vmatpush.msra.mxu0 %v462
    %1485 = vmatpush.msra.mxu0 %v454
    %1486 = vmatmul.f32.gmra.mxu0 %v1329
    %v1487 = vpop.f32.mrf.mxu0
    %v1488 = vadd.f32 %v1468, %v1487
    %1489 = vdwg.mxu0
    %1490 = vmatpush.msra.mxu0 %v447
    %1491 = vmatpush.msra.mxu0 %v439
    %1492 = vmatpush.msra.mxu0 %v431
    %1493 = vmatpush.msra.mxu0 %v423
    %1494 = vmatpush.msra.mxu0 %v415
    %1495 = vmatpush.msra.mxu0 %v407
    %1496 = vmatpush.msra.mxu0 %v399
    %1497 = vmatpush.msra.mxu0 %v391
    %1498 = vmatpush.msra.mxu0 %v383
    %1499 = vmatpush.msra.mxu0 %v375
    %1500 = vmatpush.msra.mxu0 %v367
    %1501 = vmatpush.msra.mxu0 %v359
    %1502 = vmatpush.msra.mxu0 %v351
    %1503 = vmatpush.msra.mxu0 %v343
    %1504 = vmatpush.msra.mxu0 %v335
    %1505 = vmatpush.msra.mxu0 %v327
    %1506 = vmatmul.f32.gmra.mxu0 %v1311
    %v1507 = vpop.f32.mrf.mxu0
    %v1508 = vadd.f32 0.0, %v1507
    %1509 = vdwg.mxu0
    %1510 = vmatpush.msra.mxu0 %v575
    %1511 = vmatpush.msra.mxu0 %v567
    %1512 = vmatpush.msra.mxu0 %v559
    %1513 = vmatpush.msra.mxu0 %v551
    %1514 = vmatpush.msra.mxu0 %v543
    %1515 = vmatpush.msra.mxu0 %v535
    %1516 = vmatpush.msra.mxu0 %v527
    %1517 = vmatpush.msra.mxu0 %v519
    %1518 = vmatpush.msra.mxu0 %v511
    %1519 = vmatpush.msra.mxu0 %v503
    %1520 = vmatpush.msra.mxu0 %v495
    %1521 = vmatpush.msra.mxu0 %v487
    %1522 = vmatpush.msra.mxu0 %v479
    %1523 = vmatpush.msra.mxu0 %v471
    %1524 = vmatpush.msra.mxu0 %v463
    %1525 = vmatpush.msra.mxu0 %v455
    %1526 = vmatmul.f32.gmra.mxu0 %v1329
    %v1527 = vpop.f32.mrf.mxu0
    %v1528 = vadd.f32 %v1508, %v1527
    %1529 = vdwg.mxu0
    %1530 = vmatpush.msra.mxu0 %v448
    %1531 = vmatpush.msra.mxu0 %v440
    %1532 = vmatpush.msra.mxu0 %v432
    %1533 = vmatpush.msra.mxu0 %v424
    %1534 = vmatpush.msra.mxu0 %v416
    %1535 = vmatpush.msra.mxu0 %v408
    %1536 = vmatpush.msra.mxu0 %v400
    %1537 = vmatpush.msra.mxu0 %v392
    %1538 = vmatpush.msra.mxu0 %v384
    %1539 = vmatpush.msra.mxu0 %v376
    %1540 = vmatpush.msra.mxu0 %v368
    %1541 = vmatpush.msra.mxu0 %v360
    %1542 = vmatpush.msra.mxu0 %v352
    %1543 = vmatpush.msra.mxu0 %v344
    %1544 = vmatpush.msra.mxu0 %v336
    %1545 = vmatpush.msra.mxu0 %v328
    %1546 = vmatmul.f32.gmra.mxu0 %v1311
    %v1547 = vpop.f32.mrf.mxu0
    %v1548 = vadd.f32 0.0, %v1547
    %1549 = vdwg.mxu0
    %1550 = vmatpush.msra.mxu0 %v576
    %1551 = vmatpush.msra.mxu0 %v568
    %1552 = vmatpush.msra.mxu0 %v560
    %1553 = vmatpush.msra.mxu0 %v552
    %1554 = vmatpush.msra.mxu0 %v544
    %1555 = vmatpush.msra.mxu0 %v536
    %1556 = vmatpush.msra.mxu0 %v528
    %1557 = vmatpush.msra.mxu0 %v520
    %1558 = vmatpush.msra.mxu0 %v512
    %1559 = vmatpush.msra.mxu0 %v504
    %1560 = vmatpush.msra.mxu0 %v496
    %1561 = vmatpush.msra.mxu0 %v488
    %1562 = vmatpush.msra.mxu0 %v480
    %1563 = vmatpush.msra.mxu0 %v472
    %1564 = vmatpush.msra.mxu0 %v464
    %1565 = vmatpush.msra.mxu0 %v456
    %1566 = vmatmul.f32.gmra.mxu0 %v1329
    %v1567 = vpop.f32.mrf.mxu0
    %v1568 = vadd.f32 %v1548, %v1567
    %1569 = vdwg.mxu0
    %1570 = vmatpush.msra.mxu0 %v449
    %1571 = vmatpush.msra.mxu0 %v441
    %1572 = vmatpush.msra.mxu0 %v433
    %1573 = vmatpush.msra.mxu0 %v425
    %1574 = vmatpush.msra.mxu0 %v417
    %1575 = vmatpush.msra.mxu0 %v409
    %1576 = vmatpush.msra.mxu0 %v401
    %1577 = vmatpush.msra.mxu0 %v393
    %1578 = vmatpush.msra.mxu0 %v385
    %1579 = vmatpush.msra.mxu0 %v377
    %1580 = vmatpush.msra.mxu0 %v369
    %1581 = vmatpush.msra.mxu0 %v361
    %1582 = vmatpush.msra.mxu0 %v353
    %1583 = vmatpush.msra.mxu0 %v345
    %1584 = vmatpush.msra.mxu0 %v337
    %1585 = vmatpush.msra.mxu0 %v329
    %1586 = vmatmul.f32.gmra.mxu0 %v1311
    %v1587 = vpop.f32.mrf.mxu0
    %v1588 = vadd.f32 0.0, %v1587
    %1589 = vdwg.mxu0
    %1590 = vmatpush.msra.mxu0 %v577
    %1591 = vmatpush.msra.mxu0 %v569
    %1592 = vmatpush.msra.mxu0 %v561
    %1593 = vmatpush.msra.mxu0 %v553
    %1594 = vmatpush.msra.mxu0 %v545
    %1595 = vmatpush.msra.mxu0 %v537
    %1596 = vmatpush.msra.mxu0 %v529
    %1597 = vmatpush.msra.mxu0 %v521
    %1598 = vmatpush.msra.mxu0 %v513
    %1599 = vmatpush.msra.mxu0 %v505
    %1600 = vmatpush.msra.mxu0 %v497
    %1601 = vmatpush.msra.mxu0 %v489
    %1602 = vmatpush.msra.mxu0 %v481
    %1603 = vmatpush.msra.mxu0 %v473
    %1604 = vmatpush.msra.mxu0 %v465
    %1605 = vmatpush.msra.mxu0 %v457
    %1606 = vmatmul.f32.gmra.mxu0 %v1329
    %v1607 = vpop.f32.mrf.mxu0
    %v1608 = vadd.f32 %v1588, %v1607
    %1609 = vdwg.mxu0
    %1610 = vmatpush.msra.mxu0 %v450
    %1611 = vmatpush.msra.mxu0 %v442
    %1612 = vmatpush.msra.mxu0 %v434
    %1613 = vmatpush.msra.mxu0 %v426
    %1614 = vmatpush.msra.mxu0 %v418
    %1615 = vmatpush.msra.mxu0 %v410
    %1616 = vmatpush.msra.mxu0 %v402
    %1617 = vmatpush.msra.mxu0 %v394
    %1618 = vmatpush.msra.mxu0 %v386
    %1619 = vmatpush.msra.mxu0 %v378
    %1620 = vmatpush.msra.mxu0 %v370
    %1621 = vmatpush.msra.mxu0 %v362
    %1622 = vmatpush.msra.mxu0 %v354
    %1623 = vmatpush.msra.mxu0 %v346
    %1624 = vmatpush.msra.mxu0 %v338
    %1625 = vmatpush.msra.mxu0 %v330
    %1626 = vmatmul.f32.gmra.mxu0 %v1311
    %v1627 = vpop.f32.mrf.mxu0
    %v1628 = vadd.f32 0.0, %v1627
    %1629 = vdwg.mxu0
    %1630 = vmatpush.msra.mxu0 %v578
    %1631 = vmatpush.msra.mxu0 %v570
    %1632 = vmatpush.msra.mxu0 %v562
    %1633 = vmatpush.msra.mxu0 %v554
    %1634 = vmatpush.msra.mxu0 %v546
    %1635 = vmatpush.msra.mxu0 %v538
    %1636 = vmatpush.msra.mxu0 %v530
    %1637 = vmatpush.msra.mxu0 %v522
    %1638 = vmatpush.msra.mxu0 %v514
    %1639 = vmatpush.msra.mxu0 %v506
    %1640 = vmatpush.msra.mxu0 %v498
    %1641 = vmatpush.msra.mxu0 %v490
    %1642 = vmatpush.msra.mxu0 %v482
    %1643 = vmatpush.msra.mxu0 %v474
    %1644 = vmatpush.msra.mxu0 %v466
    %1645 = vmatpush.msra.mxu0 %v458
    %1646 = vmatmul.f32.gmra.mxu0 %v1329
    %v1647 = vpop.f32.mrf.mxu0
    %v1648 = vadd.f32 %v1628, %v1647
    %1649 = vdwg.mxu0
    %s1650 = smul.u32 3, 4
    %s1651 = smul.addr %s1650, 8
    %s1652 = scalar_lea.vmem [#allocation2], %s1651
    %v1653 = vld [vmem:[%s1652] sm:$0xff]
    %v1654 = vld [vmem:[%s1652 + $0x8] sm:$0xff]
    %v1655 = vld [vmem:[%s1652 + $0x10] sm:$0xff]
    %v1656 = vld [vmem:[%s1652 + $0x18] sm:$0xff]
    %v1657 = vadd.f32 %v1653, %v1368
    %v1658 = vadd.f32 %v1654, %v1408
    %v1659 = vadd.f32 %v1655, %v1448
    %v1660 = vadd.f32 %v1656, %v1488
    %v1661 = vadd.f32 %v1528, %v911
    %v1662 = vadd.f32 %v1568, %v912
    %v1663 = vadd.f32 %v1608, %v913
    %v1664 = vadd.f32 %v1648, %v914
    %v1665 = vmul.f32 %v1657, 0.5
    %v1666 = vtanh.pop %v1665
    %v1667 = vadd.f32 %v1666, 1.0
    %v1668 = vmul.f32 %v1667, 0.5
    %v1669 = vmul.f32 %v1658, 0.5
    %v1670 = vtanh.pop %v1669
    %v1671 = vadd.f32 %v1670, 1.0
    %v1672 = vmul.f32 %v1671, 0.5
    %v1673 = vtanh.pop %v1659
    %v1674 = vmul.f32 %v1660, 0.5
    %v1675 = vtanh.pop %v1674
    %v1676 = vadd.f32 %v1675, 1.0
    %v1677 = vmul.f32 %v1676, 0.5
    %v1678 = vmul.f32 %v1672, %v1309
    %v1679 = vmul.f32 %v1668, %v1673
    %v1680 = vadd.f32 %v1678, %v1679
    %v1681 = vtanh.pop %v1680
    %v1682 = vmul.f32 %v1677, %v1681
    %v1683 = vmul.f32 %v1661, 0.5
    %v1684 = vtanh.pop %v1683
    %v1685 = vadd.f32 %v1684, 1.0
    %v1686 = vmul.f32 %v1685, 0.5
    %v1687 = vmul.f32 %v1662, 0.5
    %v1688 = vtanh.pop %v1687
    %v1689 = vadd.f32 %v1688, 1.0
    %v1690 = vmul.f32 %v1689, 0.5
    %v1691 = vtanh.pop %v1663
    %v1692 = vmul.f32 %v1664, 0.5
    %v1693 = vtanh.pop %v1692
    %v1694 = vadd.f32 %v1693, 1.0
    %v1695 = vmul.f32 %v1694, 0.5
    %v1696 = vmul.f32 %v1690, %v1327
    %v1697 = vmul.f32 %v1686, %v1691
    %v1698 = vadd.f32 %v1696, %v1697
    %v1699 = vtanh.pop %v1698
    %v1700 = vmul.f32 %v1695, %v1699
    %1701 = vmatpush.msra.mxu0 %v443
    %1702 = vmatpush.msra.mxu0 %v435
    %1703 = vmatpush.msra.mxu0 %v427
    %1704 = vmatpush.msra.mxu0 %v419
    %1705 = vmatpush.msra.mxu0 %v411
    %1706 = vmatpush.msra.mxu0 %v403
    %1707 = vmatpush.msra.mxu0 %v395
    %1708 = vmatpush.msra.mxu0 %v387
    %1709 = vmatpush.msra.mxu0 %v379
    %1710 = vmatpush.msra.mxu0 %v371
    %1711 = vmatpush.msra.mxu0 %v363
    %1712 = vmatpush.msra.mxu0 %v355
    %1713 = vmatpush.msra.mxu0 %v347
    %1714 = vmatpush.msra.mxu0 %v339
    %1715 = vmatpush.msra.mxu0 %v331
    %1716 = vmatpush.msra.mxu0 %v323
    %1717 = vmatmul.f32.gmra.mxu0 %v1682
    %v1718 = vpop.f32.mrf.mxu0
    %v1719 = vadd.f32 0.0, %v1718
    %1720 = vdwg.mxu0
    %1721 = vmatpush.msra.mxu0 %v571
    %1722 = vmatpush.msra.mxu0 %v563
    %1723 = vmatpush.msra.mxu0 %v555
    %1724 = vmatpush.msra.mxu0 %v547
    %1725 = vmatpush.msra.mxu0 %v539
    %1726 = vmatpush.msra.mxu0 %v531
    %1727 = vmatpush.msra.mxu0 %v523
    %1728 = vmatpush.msra.mxu0 %v515
    %1729 = vmatpush.msra.mxu0 %v507
    %1730 = vmatpush.msra.mxu0 %v499
    %1731 = vmatpush.msra.mxu0 %v491
    %1732 = vmatpush.msra.mxu0 %v483
    %1733 = vmatpush.msra.mxu0 %v475
    %1734 = vmatpush.msra.mxu0 %v467
    %1735 = vmatpush.msra.mxu0 %v459
    %1736 = vmatpush.msra.mxu0 %v451
    %1737 = vmatmul.f32.gmra.mxu0 %v1700
    %v1738 = vpop.f32.mrf.mxu0
    %v1739 = vadd.f32 %v1719, %v1738
    %1740 = vdwg.mxu0
    %1741 = vmatpush.msra.mxu0 %v444
    %1742 = vmatpush.msra.mxu0 %v436
    %1743 = vmatpush.msra.mxu0 %v428
    %1744 = vmatpush.msra.mxu0 %v420
    %1745 = vmatpush.msra.mxu0 %v412
    %1746 = vmatpush.msra.mxu0 %v404
    %1747 = vmatpush.msra.mxu0 %v396
    %1748 = vmatpush.msra.mxu0 %v388
    %1749 = vmatpush.msra.mxu0 %v380
    %1750 = vmatpush.msra.mxu0 %v372
    %1751 = vmatpush.msra.mxu0 %v364
    %1752 = vmatpush.msra.mxu0 %v356
    %1753 = vmatpush.msra.mxu0 %v348
    %1754 = vmatpush.msra.mxu0 %v340
    %1755 = vmatpush.msra.mxu0 %v332
    %1756 = vmatpush.msra.mxu0 %v324
    %1757 = vmatmul.f32.gmra.mxu0 %v1682
    %v1758 = vpop.f32.mrf.mxu0
    %v1759 = vadd.f32 0.0, %v1758
    %1760 = vdwg.mxu0
    %1761 = vmatpush.msra.mxu0 %v572
    %1762 = vmatpush.msra.mxu0 %v564
    %1763 = vmatpush.msra.mxu0 %v556
    %1764 = vmatpush.msra.mxu0 %v548
    %1765 = vmatpush.msra.mxu0 %v540
    %1766 = vmatpush.msra.mxu0 %v532
    %1767 = vmatpush.msra.mxu0 %v524
    %1768 = vmatpush.msra.mxu0 %v516
    %1769 = vmatpush.msra.mxu0 %v508
    %1770 = vmatpush.msra.mxu0 %v500
    %1771 = vmatpush.msra.mxu0 %v492
    %1772 = vmatpush.msra.mxu0 %v484
    %1773 = vmatpush.msra.mxu0 %v476
    %1774 = vmatpush.msra.mxu0 %v468
    %1775 = vmatpush.msra.mxu0 %v460
    %1776 = vmatpush.msra.mxu0 %v452
    %1777 = vmatmul.f32.gmra.mxu0 %v1700
    %v1778 = vpop.f32.mrf.mxu0
    %v1779 = vadd.f32 %v1759, %v1778
    %1780 = vdwg.mxu0
    %1781 = vmatpush.msra.mxu0 %v445
    %1782 = vmatpush.msra.mxu0 %v437
    %1783 = vmatpush.msra.mxu0 %v429
    %1784 = vmatpush.msra.mxu0 %v421
    %1785 = vmatpush.msra.mxu0 %v413
    %1786 = vmatpush.msra.mxu0 %v405
    %1787 = vmatpush.msra.mxu0 %v397
    %1788 = vmatpush.msra.mxu0 %v389
    %1789 = vmatpush.msra.mxu0 %v381
    %1790 = vmatpush.msra.mxu0 %v373
    %1791 = vmatpush.msra.mxu0 %v365
    %1792 = vmatpush.msra.mxu0 %v357
    %1793 = vmatpush.msra.mxu0 %v349
    %1794 = vmatpush.msra.mxu0 %v341
    %1795 = vmatpush.msra.mxu0 %v333
    %1796 = vmatpush.msra.mxu0 %v325
    %1797 = vmatmul.f32.gmra.mxu0 %v1682
    %v1798 = vpop.f32.mrf.mxu0
    %v1799 = vadd.f32 0.0, %v1798
    %1800 = vdwg.mxu0
    %1801 = vmatpush.msra.mxu0 %v573
    %1802 = vmatpush.msra.mxu0 %v565
    %1803 = vmatpush.msra.mxu0 %v557
    %1804 = vmatpush.msra.mxu0 %v549
    %1805 = vmatpush.msra.mxu0 %v541
    %1806 = vmatpush.msra.mxu0 %v533
    %1807 = vmatpush.msra.mxu0 %v525
    %1808 = vmatpush.msra.mxu0 %v517
    %1809 = vmatpush.msra.mxu0 %v509
    %1810 = vmatpush.msra.mxu0 %v501
    %1811 = vmatpush.msra.mxu0 %v493
    %1812 = vmatpush.msra.mxu0 %v485
    %1813 = vmatpush.msra.mxu0 %v477
    %1814 = vmatpush.msra.mxu0 %v469
    %1815 = vmatpush.msra.mxu0 %v461
    %1816 = vmatpush.msra.mxu0 %v453
    %1817 = vmatmul.f32.gmra.mxu0 %v1700
    %v1818 = vpop.f32.mrf.mxu0
    %v1819 = vadd.f32 %v1799, %v1818
    %1820 = vdwg.mxu0
    %1821 = vmatpush.msra.mxu0 %v446
    %1822 = vmatpush.msra.mxu0 %v438
    %1823 = vmatpush.msra.mxu0 %v430
    %1824 = vmatpush.msra.mxu0 %v422
    %1825 = vmatpush.msra.mxu0 %v414
    %1826 = vmatpush.msra.mxu0 %v406
    %1827 = vmatpush.msra.mxu0 %v398
    %1828 = vmatpush.msra.mxu0 %v390
    %1829 = vmatpush.msra.mxu0 %v382
    %1830 = vmatpush.msra.mxu0 %v374
    %1831 = vmatpush.msra.mxu0 %v366
    %1832 = vmatpush.msra.mxu0 %v358
    %1833 = vmatpush.msra.mxu0 %v350
    %1834 = vmatpush.msra.mxu0 %v342
    %1835 = vmatpush.msra.mxu0 %v334
    %1836 = vmatpush.msra.mxu0 %v326
    %1837 = vmatmul.f32.gmra.mxu0 %v1682
    %v1838 = vpop.f32.mrf.mxu0
    %v1839 = vadd.f32 0.0, %v1838
    %1840 = vdwg.mxu0
    %1841 = vmatpush.msra.mxu0 %v574
    %1842 = vmatpush.msra.mxu0 %v566
    %1843 = vmatpush.msra.mxu0 %v558
    %1844 = vmatpush.msra.mxu0 %v550
    %1845 = vmatpush.msra.mxu0 %v542
    %1846 = vmatpush.msra.mxu0 %v534
    %1847 = vmatpush.msra.mxu0 %v526
    %1848 = vmatpush.msra.mxu0 %v518
    %1849 = vmatpush.msra.mxu0 %v510
    %1850 = vmatpush.msra.mxu0 %v502
    %1851 = vmatpush.msra.mxu0 %v494
    %1852 = vmatpush.msra.mxu0 %v486
    %1853 = vmatpush.msra.mxu0 %v478
    %1854 = vmatpush.msra.mxu0 %v470
    %1855 = vmatpush.msra.mxu0 %v462
    %1856 = vmatpush.msra.mxu0 %v454
    %1857 = vmatmul.f32.gmra.mxu0 %v1700
    %v1858 = vpop.f32.mrf.mxu0
    %v1859 = vadd.f32 %v1839, %v1858
    %1860 = vdwg.mxu0
    %1861 = vmatpush.msra.mxu0 %v447
    %1862 = vmatpush.msra.mxu0 %v439
    %1863 = vmatpush.msra.mxu0 %v431
    %1864 = vmatpush.msra.mxu0 %v423
    %1865 = vmatpush.msra.mxu0 %v415
    %1866 = vmatpush.msra.mxu0 %v407
    %1867 = vmatpush.msra.mxu0 %v399
    %1868 = vmatpush.msra.mxu0 %v391
    %1869 = vmatpush.msra.mxu0 %v383
    %1870 = vmatpush.msra.mxu0 %v375
    %1871 = vmatpush.msra.mxu0 %v367
    %1872 = vmatpush.msra.mxu0 %v359
    %1873 = vmatpush.msra.mxu0 %v351
    %1874 = vmatpush.msra.mxu0 %v343
    %1875 = vmatpush.msra.mxu0 %v335
    %1876 = vmatpush.msra.mxu0 %v327
    %1877 = vmatmul.f32.gmra.mxu0 %v1682
    %v1878 = vpop.f32.mrf.mxu0
    %v1879 = vadd.f32 0.0, %v1878
    %1880 = vdwg.mxu0
    %1881 = vmatpush.msra.mxu0 %v575
    %1882 = vmatpush.msra.mxu0 %v567
    %1883 = vmatpush.msra.mxu0 %v559
    %1884 = vmatpush.msra.mxu0 %v551
    %1885 = vmatpush.msra.mxu0 %v543
    %1886 = vmatpush.msra.mxu0 %v535
    %1887 = vmatpush.msra.mxu0 %v527
    %1888 = vmatpush.msra.mxu0 %v519
    %1889 = vmatpush.msra.mxu0 %v511
    %1890 = vmatpush.msra.mxu0 %v503
    %1891 = vmatpush.msra.mxu0 %v495
    %1892 = vmatpush.msra.mxu0 %v487
    %1893 = vmatpush.msra.mxu0 %v479
    %1894 = vmatpush.msra.mxu0 %v471
    %1895 = vmatpush.msra.mxu0 %v463
    %1896 = vmatpush.msra.mxu0 %v455
    %1897 = vmatmul.f32.gmra.mxu0 %v1700
    %v1898 = vpop.f32.mrf.mxu0
    %v1899 = vadd.f32 %v1879, %v1898
    %1900 = vdwg.mxu0
    %1901 = vmatpush.msra.mxu0 %v448
    %1902 = vmatpush.msra.mxu0 %v440
    %1903 = vmatpush.msra.mxu0 %v432
    %1904 = vmatpush.msra.mxu0 %v424
    %1905 = vmatpush.msra.mxu0 %v416
    %1906 = vmatpush.msra.mxu0 %v408
    %1907 = vmatpush.msra.mxu0 %v400
    %1908 = vmatpush.msra.mxu0 %v392
    %1909 = vmatpush.msra.mxu0 %v384
    %1910 = vmatpush.msra.mxu0 %v376
    %1911 = vmatpush.msra.mxu0 %v368
    %1912 = vmatpush.msra.mxu0 %v360
    %1913 = vmatpush.msra.mxu0 %v352
    %1914 = vmatpush.msra.mxu0 %v344
    %1915 = vmatpush.msra.mxu0 %v336
    %1916 = vmatpush.msra.mxu0 %v328
    %1917 = vmatmul.f32.gmra.mxu0 %v1682
    %v1918 = vpop.f32.mrf.mxu0
    %v1919 = vadd.f32 0.0, %v1918
    %1920 = vdwg.mxu0
    %1921 = vmatpush.msra.mxu0 %v576
    %1922 = vmatpush.msra.mxu0 %v568
    %1923 = vmatpush.msra.mxu0 %v560
    %1924 = vmatpush.msra.mxu0 %v552
    %1925 = vmatpush.msra.mxu0 %v544
    %1926 = vmatpush.msra.mxu0 %v536
    %1927 = vmatpush.msra.mxu0 %v528
    %1928 = vmatpush.msra.mxu0 %v520
    %1929 = vmatpush.msra.mxu0 %v512
    %1930 = vmatpush.msra.mxu0 %v504
    %1931 = vmatpush.msra.mxu0 %v496
    %1932 = vmatpush.msra.mxu0 %v488
    %1933 = vmatpush.msra.mxu0 %v480
    %1934 = vmatpush.msra.mxu0 %v472
    %1935 = vmatpush.msra.mxu0 %v464
    %1936 = vmatpush.msra.mxu0 %v456
    %1937 = vmatmul.f32.gmra.mxu0 %v1700
    %v1938 = vpop.f32.mrf.mxu0
    %v1939 = vadd.f32 %v1919, %v1938
    %1940 = vdwg.mxu0
    %1941 = vmatpush.msra.mxu0 %v449
    %1942 = vmatpush.msra.mxu0 %v441
    %1943 = vmatpush.msra.mxu0 %v433
    %1944 = vmatpush.msra.mxu0 %v425
    %1945 = vmatpush.msra.mxu0 %v417
    %1946 = vmatpush.msra.mxu0 %v409
    %1947 = vmatpush.msra.mxu0 %v401
    %1948 = vmatpush.msra.mxu0 %v393
    %1949 = vmatpush.msra.mxu0 %v385
    %1950 = vmatpush.msra.mxu0 %v377
    %1951 = vmatpush.msra.mxu0 %v369
    %1952 = vmatpush.msra.mxu0 %v361
    %1953 = vmatpush.msra.mxu0 %v353
    %1954 = vmatpush.msra.mxu0 %v345
    %1955 = vmatpush.msra.mxu0 %v337
    %1956 = vmatpush.msra.mxu0 %v329
    %1957 = vmatmul.f32.gmra.mxu0 %v1682
    %v1958 = vpop.f32.mrf.mxu0
    %v1959 = vadd.f32 0.0, %v1958
    %1960 = vdwg.mxu0
    %1961 = vmatpush.msra.mxu0 %v577
    %1962 = vmatpush.msra.mxu0 %v569
    %1963 = vmatpush.msra.mxu0 %v561
    %1964 = vmatpush.msra.mxu0 %v553
    %1965 = vmatpush.msra.mxu0 %v545
    %1966 = vmatpush.msra.mxu0 %v537
    %1967 = vmatpush.msra.mxu0 %v529
    %1968 = vmatpush.msra.mxu0 %v521
    %1969 = vmatpush.msra.mxu0 %v513
    %1970 = vmatpush.msra.mxu0 %v505
    %1971 = vmatpush.msra.mxu0 %v497
    %1972 = vmatpush.msra.mxu0 %v489
    %1973 = vmatpush.msra.mxu0 %v481
    %1974 = vmatpush.msra.mxu0 %v473
    %1975 = vmatpush.msra.mxu0 %v465
    %1976 = vmatpush.msra.mxu0 %v457
    %1977 = vmatmul.f32.gmra.mxu0 %v1700
    %v1978 = vpop.f32.mrf.mxu0
    %v1979 = vadd.f32 %v1959, %v1978
    %1980 = vdwg.mxu0
    %1981 = vmatpush.msra.mxu0 %v450
    %1982 = vmatpush.msra.mxu0 %v442
    %1983 = vmatpush.msra.mxu0 %v434
    %1984 = vmatpush.msra.mxu0 %v426
    %1985 = vmatpush.msra.mxu0 %v418
    %1986 = vmatpush.msra.mxu0 %v410
    %1987 = vmatpush.msra.mxu0 %v402
    %1988 = vmatpush.msra.mxu0 %v394
    %1989 = vmatpush.msra.mxu0 %v386
    %1990 = vmatpush.msra.mxu0 %v378
    %1991 = vmatpush.msra.mxu0 %v370
    %1992 = vmatpush.msra.mxu0 %v362
    %1993 = vmatpush.msra.mxu0 %v354
    %1994 = vmatpush.msra.mxu0 %v346
    %1995 = vmatpush.msra.mxu0 %v338
    %1996 = vmatpush.msra.mxu0 %v330
    %1997 = vmatmul.f32.gmra.mxu0 %v1682
    %v1998 = vpop.f32.mrf.mxu0
    %v1999 = vadd.f32 0.0, %v1998
    %2000 = vdwg.mxu0
    %2001 = vmatpush.msra.mxu0 %v578
    %2002 = vmatpush.msra.mxu0 %v570
    %2003 = vmatpush.msra.mxu0 %v562
    %2004 = vmatpush.msra.mxu0 %v554
    %2005 = vmatpush.msra.mxu0 %v546
    %2006 = vmatpush.msra.mxu0 %v538
    %2007 = vmatpush.msra.mxu0 %v530
    %2008 = vmatpush.msra.mxu0 %v522
    %2009 = vmatpush.msra.mxu0 %v514
    %2010 = vmatpush.msra.mxu0 %v506
    %2011 = vmatpush.msra.mxu0 %v498
    %2012 = vmatpush.msra.mxu0 %v490
    %2013 = vmatpush.msra.mxu0 %v482
    %2014 = vmatpush.msra.mxu0 %v474
    %2015 = vmatpush.msra.mxu0 %v466
    %2016 = vmatpush.msra.mxu0 %v458
    %2017 = vmatmul.f32.gmra.mxu0 %v1700
    %v2018 = vpop.f32.mrf.mxu0
    %v2019 = vadd.f32 %v1999, %v2018
    %2020 = vdwg.mxu0
    %s2021 = smul.u32 4, 4
    %s2022 = smul.addr %s2021, 8
    %s2023 = scalar_lea.vmem [#allocation2], %s2022
    %v2024 = vld [vmem:[%s2023] sm:$0xff]
    %v2025 = vld [vmem:[%s2023 + $0x8] sm:$0xff]
    %v2026 = vld [vmem:[%s2023 + $0x10] sm:$0xff]
    %v2027 = vld [vmem:[%s2023 + $0x18] sm:$0xff]
    %v2028 = vadd.f32 %v2024, %v1739
    %v2029 = vadd.f32 %v2025, %v1779
    %v2030 = vadd.f32 %v2026, %v1819
    %v2031 = vadd.f32 %v2027, %v1859
    %v2032 = vadd.f32 %v1899, %v911
    %v2033 = vadd.f32 %v1939, %v912
    %v2034 = vadd.f32 %v1979, %v913
    %v2035 = vadd.f32 %v2019, %v914
    %v2036 = vmul.f32 %v2028, 0.5
    %v2037 = vtanh.pop %v2036
    %v2038 = vadd.f32 %v2037, 1.0
    %v2039 = vmul.f32 %v2038, 0.5
    %v2040 = vmul.f32 %v2029, 0.5
    %v2041 = vtanh.pop %v2040
    %v2042 = vadd.f32 %v2041, 1.0
    %v2043 = vmul.f32 %v2042, 0.5
    %v2044 = vtanh.pop %v2030
    %v2045 = vmul.f32 %v2031, 0.5
    %v2046 = vtanh.pop %v2045
    %v2047 = vadd.f32 %v2046, 1.0
    %v2048 = vmul.f32 %v2047, 0.5
    %v2049 = vmul.f32 %v2043, %v1680
    %v2050 = vmul.f32 %v2039, %v2044
    %v2051 = vadd.f32 %v2049, %v2050
    %v2052 = vtanh.pop %v2051
    %v2053 = vmul.f32 %v2048, %v2052
    %v2054 = vmul.f32 %v2032, 0.5
    %v2055 = vtanh.pop %v2054
    %v2056 = vadd.f32 %v2055, 1.0
    %v2057 = vmul.f32 %v2056, 0.5
    %v2058 = vmul.f32 %v2033, 0.5
    %v2059 = vtanh.pop %v2058
    %v2060 = vadd.f32 %v2059, 1.0
    %v2061 = vmul.f32 %v2060, 0.5
    %v2062 = vtanh.pop %v2034
    %v2063 = vmul.f32 %v2035, 0.5
    %v2064 = vtanh.pop %v2063
    %v2065 = vadd.f32 %v2064, 1.0
    %v2066 = vmul.f32 %v2065, 0.5
    %v2067 = vmul.f32 %v2061, %v1698
    %v2068 = vmul.f32 %v2057, %v2062
    %v2069 = vadd.f32 %v2067, %v2068
    %v2070 = vtanh.pop %v2069
    %v2071 = vmul.f32 %v2066, %v2070
    %2072 = vmatpush.msra.mxu0 %v443
    %2073 = vmatpush.msra.mxu0 %v435
    %2074 = vmatpush.msra.mxu0 %v427
    %2075 = vmatpush.msra.mxu0 %v419
    %2076 = vmatpush.msra.mxu0 %v411
    %2077 = vmatpush.msra.mxu0 %v403
    %2078 = vmatpush.msra.mxu0 %v395
    %2079 = vmatpush.msra.mxu0 %v387
    %2080 = vmatpush.msra.mxu0 %v379
    %2081 = vmatpush.msra.mxu0 %v371
    %2082 = vmatpush.msra.mxu0 %v363
    %2083 = vmatpush.msra.mxu0 %v355
    %2084 = vmatpush.msra.mxu0 %v347
    %2085 = vmatpush.msra.mxu0 %v339
    %2086 = vmatpush.msra.mxu0 %v331
    %2087 = vmatpush.msra.mxu0 %v323
    %2088 = vmatmul.f32.gmra.mxu0 %v2053
    %v2089 = vpop.f32.mrf.mxu0
    %v2090 = vadd.f32 0.0, %v2089
    %2091 = vdwg.mxu0
    %2092 = vmatpush.msra.mxu0 %v571
    %2093 = vmatpush.msra.mxu0 %v563
    %2094 = vmatpush.msra.mxu0 %v555
    %2095 = vmatpush.msra.mxu0 %v547
    %2096 = vmatpush.msra.mxu0 %v539
    %2097 = vmatpush.msra.mxu0 %v531
    %2098 = vmatpush.msra.mxu0 %v523
    %2099 = vmatpush.msra.mxu0 %v515
    %2100 = vmatpush.msra.mxu0 %v507
    %2101 = vmatpush.msra.mxu0 %v499
    %2102 = vmatpush.msra.mxu0 %v491
    %2103 = vmatpush.msra.mxu0 %v483
    %2104 = vmatpush.msra.mxu0 %v475
    %2105 = vmatpush.msra.mxu0 %v467
    %2106 = vmatpush.msra.mxu0 %v459
    %2107 = vmatpush.msra.mxu0 %v451
    %2108 = vmatmul.f32.gmra.mxu0 %v2071
    %v2109 = vpop.f32.mrf.mxu0
    %v2110 = vadd.f32 %v2090, %v2109
    %2111 = vdwg.mxu0
    %2112 = vmatpush.msra.mxu0 %v444
    %2113 = vmatpush.msra.mxu0 %v436
    %2114 = vmatpush.msra.mxu0 %v428
    %2115 = vmatpush.msra.mxu0 %v420
    %2116 = vmatpush.msra.mxu0 %v412
    %2117 = vmatpush.msra.mxu0 %v404
    %2118 = vmatpush.msra.mxu0 %v396
    %2119 = vmatpush.msra.mxu0 %v388
    %2120 = vmatpush.msra.mxu0 %v380
    %2121 = vmatpush.msra.mxu0 %v372
    %2122 = vmatpush.msra.mxu0 %v364
    %2123 = vmatpush.msra.mxu0 %v356
    %2124 = vmatpush.msra.mxu0 %v348
    %2125 = vmatpush.msra.mxu0 %v340
    %2126 = vmatpush.msra.mxu0 %v332
    %2127 = vmatpush.msra.mxu0 %v324
    %2128 = vmatmul.f32.gmra.mxu0 %v2053
    %v2129 = vpop.f32.mrf.mxu0
    %v2130 = vadd.f32 0.0, %v2129
    %2131 = vdwg.mxu0
    %2132 = vmatpush.msra.mxu0 %v572
    %2133 = vmatpush.msra.mxu0 %v564
    %2134 = vmatpush.msra.mxu0 %v556
    %2135 = vmatpush.msra.mxu0 %v548
    %2136 = vmatpush.msra.mxu0 %v540
    %2137 = vmatpush.msra.mxu0 %v532
    %2138 = vmatpush.msra.mxu0 %v524
    %2139 = vmatpush.msra.mxu0 %v516
    %2140 = vmatpush.msra.mxu0 %v508
    %2141 = vmatpush.msra.mxu0 %v500
    %2142 = vmatpush.msra.mxu0 %v492
    %2143 = vmatpush.msra.mxu0 %v484
    %2144 = vmatpush.msra.mxu0 %v476
    %2145 = vmatpush.msra.mxu0 %v468
    %2146 = vmatpush.msra.mxu0 %v460
    %2147 = vmatpush.msra.mxu0 %v452
    %2148 = vmatmul.f32.gmra.mxu0 %v2071
    %v2149 = vpop.f32.mrf.mxu0
    %v2150 = vadd.f32 %v2130, %v2149
    %2151 = vdwg.mxu0
    %2152 = vmatpush.msra.mxu0 %v445
    %2153 = vmatpush.msra.mxu0 %v437
    %2154 = vmatpush.msra.mxu0 %v429
    %2155 = vmatpush.msra.mxu0 %v421
    %2156 = vmatpush.msra.mxu0 %v413
    %2157 = vmatpush.msra.mxu0 %v405
    %2158 = vmatpush.msra.mxu0 %v397
    %2159 = vmatpush.msra.mxu0 %v389
    %2160 = vmatpush.msra.mxu0 %v381
    %2161 = vmatpush.msra.mxu0 %v373
    %2162 = vmatpush.msra.mxu0 %v365
    %2163 = vmatpush.msra.mxu0 %v357
    %2164 = vmatpush.msra.mxu0 %v349
    %2165 = vmatpush.msra.mxu0 %v341
    %2166 = vmatpush.msra.mxu0 %v333
    %2167 = vmatpush.msra.mxu0 %v325
    %2168 = vmatmul.f32.gmra.mxu0 %v2053
    %v2169 = vpop.f32.mrf.mxu0
    %v2170 = vadd.f32 0.0, %v2169
    %2171 = vdwg.mxu0
    %2172 = vmatpush.msra.mxu0 %v573
    %2173 = vmatpush.msra.mxu0 %v565
    %2174 = vmatpush.msra.mxu0 %v557
    %2175 = vmatpush.msra.mxu0 %v549
    %2176 = vmatpush.msra.mxu0 %v541
    %2177 = vmatpush.msra.mxu0 %v533
    %2178 = vmatpush.msra.mxu0 %v525
    %2179 = vmatpush.msra.mxu0 %v517
    %2180 = vmatpush.msra.mxu0 %v509
    %2181 = vmatpush.msra.mxu0 %v501
    %2182 = vmatpush.msra.mxu0 %v493
    %2183 = vmatpush.msra.mxu0 %v485
    %2184 = vmatpush.msra.mxu0 %v477
    %2185 = vmatpush.msra.mxu0 %v469
    %2186 = vmatpush.msra.mxu0 %v461
    %2187 = vmatpush.msra.mxu0 %v453
    %2188 = vmatmul.f32.gmra.mxu0 %v2071
    %v2189 = vpop.f32.mrf.mxu0
    %v2190 = vadd.f32 %v2170, %v2189
    %2191 = vdwg.mxu0
    %2192 = vmatpush.msra.mxu0 %v446
    %2193 = vmatpush.msra.mxu0 %v438
    %2194 = vmatpush.msra.mxu0 %v430
    %2195 = vmatpush.msra.mxu0 %v422
    %2196 = vmatpush.msra.mxu0 %v414
    %2197 = vmatpush.msra.mxu0 %v406
    %2198 = vmatpush.msra.mxu0 %v398
    %2199 = vmatpush.msra.mxu0 %v390
    %2200 = vmatpush.msra.mxu0 %v382
    %2201 = vmatpush.msra.mxu0 %v374
    %2202 = vmatpush.msra.mxu0 %v366
    %2203 = vmatpush.msra.mxu0 %v358
    %2204 = vmatpush.msra.mxu0 %v350
    %2205 = vmatpush.msra.mxu0 %v342
    %2206 = vmatpush.msra.mxu0 %v334
    %2207 = vmatpush.msra.mxu0 %v326
    %2208 = vmatmul.f32.gmra.mxu0 %v2053
    %v2209 = vpop.f32.mrf.mxu0
    %v2210 = vadd.f32 0.0, %v2209
    %2211 = vdwg.mxu0
    %2212 = vmatpush.msra.mxu0 %v574
    %2213 = vmatpush.msra.mxu0 %v566
    %2214 = vmatpush.msra.mxu0 %v558
    %2215 = vmatpush.msra.mxu0 %v550
    %2216 = vmatpush.msra.mxu0 %v542
    %2217 = vmatpush.msra.mxu0 %v534
    %2218 = vmatpush.msra.mxu0 %v526
    %2219 = vmatpush.msra.mxu0 %v518
    %2220 = vmatpush.msra.mxu0 %v510
    %2221 = vmatpush.msra.mxu0 %v502
    %2222 = vmatpush.msra.mxu0 %v494
    %2223 = vmatpush.msra.mxu0 %v486
    %2224 = vmatpush.msra.mxu0 %v478
    %2225 = vmatpush.msra.mxu0 %v470
    %2226 = vmatpush.msra.mxu0 %v462
    %2227 = vmatpush.msra.mxu0 %v454
    %2228 = vmatmul.f32.gmra.mxu0 %v2071
    %v2229 = vpop.f32.mrf.mxu0
    %v2230 = vadd.f32 %v2210, %v2229
    %2231 = vdwg.mxu0
    %2232 = vmatpush.msra.mxu0 %v447
    %2233 = vmatpush.msra.mxu0 %v439
    %2234 = vmatpush.msra.mxu0 %v431
    %2235 = vmatpush.msra.mxu0 %v423
    %2236 = vmatpush.msra.mxu0 %v415
    %2237 = vmatpush.msra.mxu0 %v407
    %2238 = vmatpush.msra.mxu0 %v399
    %2239 = vmatpush.msra.mxu0 %v391
    %2240 = vmatpush.msra.mxu0 %v383
    %2241 = vmatpush.msra.mxu0 %v375
    %2242 = vmatpush.msra.mxu0 %v367
    %2243 = vmatpush.msra.mxu0 %v359
    %2244 = vmatpush.msra.mxu0 %v351
    %2245 = vmatpush.msra.mxu0 %v343
    %2246 = vmatpush.msra.mxu0 %v335
    %2247 = vmatpush.msra.mxu0 %v327
    %2248 = vmatmul.f32.gmra.mxu0 %v2053
    %v2249 = vpop.f32.mrf.mxu0
    %v2250 = vadd.f32 0.0, %v2249
    %2251 = vdwg.mxu0
    %2252 = vmatpush.msra.mxu0 %v575
    %2253 = vmatpush.msra.mxu0 %v567
    %2254 = vmatpush.msra.mxu0 %v559
    %2255 = vmatpush.msra.mxu0 %v551
    %2256 = vmatpush.msra.mxu0 %v543
    %2257 = vmatpush.msra.mxu0 %v535
    %2258 = vmatpush.msra.mxu0 %v527
    %2259 = vmatpush.msra.mxu0 %v519
    %2260 = vmatpush.msra.mxu0 %v511
    %2261 = vmatpush.msra.mxu0 %v503
    %2262 = vmatpush.msra.mxu0 %v495
    %2263 = vmatpush.msra.mxu0 %v487
    %2264 = vmatpush.msra.mxu0 %v479
    %2265 = vmatpush.msra.mxu0 %v471
    %2266 = vmatpush.msra.mxu0 %v463
    %2267 = vmatpush.msra.mxu0 %v455
    %2268 = vmatmul.f32.gmra.mxu0 %v2071
    %v2269 = vpop.f32.mrf.mxu0
    %v2270 = vadd.f32 %v2250, %v2269
    %2271 = vdwg.mxu0
    %2272 = vmatpush.msra.mxu0 %v448
    %2273 = vmatpush.msra.mxu0 %v440
    %2274 = vmatpush.msra.mxu0 %v432
    %2275 = vmatpush.msra.mxu0 %v424
    %2276 = vmatpush.msra.mxu0 %v416
    %2277 = vmatpush.msra.mxu0 %v408
    %2278 = vmatpush.msra.mxu0 %v400
    %2279 = vmatpush.msra.mxu0 %v392
    %2280 = vmatpush.msra.mxu0 %v384
    %2281 = vmatpush.msra.mxu0 %v376
    %2282 = vmatpush.msra.mxu0 %v368
    %2283 = vmatpush.msra.mxu0 %v360
    %2284 = vmatpush.msra.mxu0 %v352
    %2285 = vmatpush.msra.mxu0 %v344
    %2286 = vmatpush.msra.mxu0 %v336
    %2287 = vmatpush.msra.mxu0 %v328
    %2288 = vmatmul.f32.gmra.mxu0 %v2053
    %v2289 = vpop.f32.mrf.mxu0
    %v2290 = vadd.f32 0.0, %v2289
    %2291 = vdwg.mxu0
    %2292 = vmatpush.msra.mxu0 %v576
    %2293 = vmatpush.msra.mxu0 %v568
    %2294 = vmatpush.msra.mxu0 %v560
    %2295 = vmatpush.msra.mxu0 %v552
    %2296 = vmatpush.msra.mxu0 %v544
    %2297 = vmatpush.msra.mxu0 %v536
    %2298 = vmatpush.msra.mxu0 %v528
    %2299 = vmatpush.msra.mxu0 %v520
    %2300 = vmatpush.msra.mxu0 %v512
    %2301 = vmatpush.msra.mxu0 %v504
    %2302 = vmatpush.msra.mxu0 %v496
    %2303 = vmatpush.msra.mxu0 %v488
    %2304 = vmatpush.msra.mxu0 %v480
    %2305 = vmatpush.msra.mxu0 %v472
    %2306 = vmatpush.msra.mxu0 %v464
    %2307 = vmatpush.msra.mxu0 %v456
    %2308 = vmatmul.f32.gmra.mxu0 %v2071
    %v2309 = vpop.f32.mrf.mxu0
    %v2310 = vadd.f32 %v2290, %v2309
    %2311 = vdwg.mxu0
    %2312 = vmatpush.msra.mxu0 %v449
    %2313 = vmatpush.msra.mxu0 %v441
    %2314 = vmatpush.msra.mxu0 %v433
    %2315 = vmatpush.msra.mxu0 %v425
    %2316 = vmatpush.msra.mxu0 %v417
    %2317 = vmatpush.msra.mxu0 %v409
    %2318 = vmatpush.msra.mxu0 %v401
    %2319 = vmatpush.msra.mxu0 %v393
    %2320 = vmatpush.msra.mxu0 %v385
    %2321 = vmatpush.msra.mxu0 %v377
    %2322 = vmatpush.msra.mxu0 %v369
    %2323 = vmatpush.msra.mxu0 %v361
    %2324 = vmatpush.msra.mxu0 %v353
    %2325 = vmatpush.msra.mxu0 %v345
    %2326 = vmatpush.msra.mxu0 %v337
    %2327 = vmatpush.msra.mxu0 %v329
    %2328 = vmatmul.f32.gmra.mxu0 %v2053
    %v2329 = vpop.f32.mrf.mxu0
    %v2330 = vadd.f32 0.0, %v2329
    %2331 = vdwg.mxu0
    %2332 = vmatpush.msra.mxu0 %v577
    %2333 = vmatpush.msra.mxu0 %v569
    %2334 = vmatpush.msra.mxu0 %v561
    %2335 = vmatpush.msra.mxu0 %v553
    %2336 = vmatpush.msra.mxu0 %v545
    %2337 = vmatpush.msra.mxu0 %v537
    %2338 = vmatpush.msra.mxu0 %v529
    %2339 = vmatpush.msra.mxu0 %v521
    %2340 = vmatpush.msra.mxu0 %v513
    %2341 = vmatpush.msra.mxu0 %v505
    %2342 = vmatpush.msra.mxu0 %v497
    %2343 = vmatpush.msra.mxu0 %v489
    %2344 = vmatpush.msra.mxu0 %v481
    %2345 = vmatpush.msra.mxu0 %v473
    %2346 = vmatpush.msra.mxu0 %v465
    %2347 = vmatpush.msra.mxu0 %v457
    %2348 = vmatmul.f32.gmra.mxu0 %v2071
    %v2349 = vpop.f32.mrf.mxu0
    %v2350 = vadd.f32 %v2330, %v2349
    %2351 = vdwg.mxu0
    %2352 = vmatpush.msra.mxu0 %v450
    %2353 = vmatpush.msra.mxu0 %v442
    %2354 = vmatpush.msra.mxu0 %v434
    %2355 = vmatpush.msra.mxu0 %v426
    %2356 = vmatpush.msra.mxu0 %v418
    %2357 = vmatpush.msra.mxu0 %v410
    %2358 = vmatpush.msra.mxu0 %v402
    %2359 = vmatpush.msra.mxu0 %v394
    %2360 = vmatpush.msra.mxu0 %v386
    %2361 = vmatpush.msra.mxu0 %v378
    %2362 = vmatpush.msra.mxu0 %v370
    %2363 = vmatpush.msra.mxu0 %v362
    %2364 = vmatpush.msra.mxu0 %v354
    %2365 = vmatpush.msra.mxu0 %v346
    %2366 = vmatpush.msra.mxu0 %v338
    %2367 = vmatpush.msra.mxu0 %v330
    %2368 = vmatmul.f32.gmra.mxu0 %v2053
    %v2369 = vpop.f32.mrf.mxu0
    %v2370 = vadd.f32 0.0, %v2369
    %2371 = vdwg.mxu0
    %2372 = vmatpush.msra.mxu0 %v578
    %2373 = vmatpush.msra.mxu0 %v570
    %2374 = vmatpush.msra.mxu0 %v562
    %2375 = vmatpush.msra.mxu0 %v554
    %2376 = vmatpush.msra.mxu0 %v546
    %2377 = vmatpush.msra.mxu0 %v538
    %2378 = vmatpush.msra.mxu0 %v530
    %2379 = vmatpush.msra.mxu0 %v522
    %2380 = vmatpush.msra.mxu0 %v514
    %2381 = vmatpush.msra.mxu0 %v506
    %2382 = vmatpush.msra.mxu0 %v498
    %2383 = vmatpush.msra.mxu0 %v490
    %2384 = vmatpush.msra.mxu0 %v482
    %2385 = vmatpush.msra.mxu0 %v474
    %2386 = vmatpush.msra.mxu0 %v466
    %2387 = vmatpush.msra.mxu0 %v458
    %2388 = vmatmul.f32.gmra.mxu0 %v2071
    %v2389 = vpop.f32.mrf.mxu0
    %v2390 = vadd.f32 %v2370, %v2389
    %2391 = vdwg.mxu0
    %s2392 = smul.u32 5, 4
    %s2393 = smul.addr %s2392, 8
    %s2394 = scalar_lea.vmem [#allocation2], %s2393
    %v2395 = vld [vmem:[%s2394] sm:$0xff]
    %v2396 = vld [vmem:[%s2394 + $0x8] sm:$0xff]
    %v2397 = vld [vmem:[%s2394 + $0x10] sm:$0xff]
    %v2398 = vld [vmem:[%s2394 + $0x18] sm:$0xff]
    %v2399 = vadd.f32 %v2395, %v2110
    %v2400 = vadd.f32 %v2396, %v2150
    %v2401 = vadd.f32 %v2397, %v2190
    %v2402 = vadd.f32 %v2398, %v2230
    %v2403 = vadd.f32 %v2270, %v911
    %v2404 = vadd.f32 %v2310, %v912
    %v2405 = vadd.f32 %v2350, %v913
    %v2406 = vadd.f32 %v2390, %v914
    %v2407 = vmul.f32 %v2399, 0.5
    %v2408 = vtanh.pop %v2407
    %v2409 = vadd.f32 %v2408, 1.0
    %v2410 = vmul.f32 %v2409, 0.5
    %v2411 = vmul.f32 %v2400, 0.5
    %v2412 = vtanh.pop %v2411
    %v2413 = vadd.f32 %v2412, 1.0
    %v2414 = vmul.f32 %v2413, 0.5
    %v2415 = vtanh.pop %v2401
    %v2416 = vmul.f32 %v2402, 0.5
    %v2417 = vtanh.pop %v2416
    %v2418 = vadd.f32 %v2417, 1.0
    %v2419 = vmul.f32 %v2418, 0.5
    %v2420 = vmul.f32 %v2414, %v2051
    %v2421 = vmul.f32 %v2410, %v2415
    %v2422 = vadd.f32 %v2420, %v2421
    %v2423 = vtanh.pop %v2422
    %v2424 = vmul.f32 %v2419, %v2423
    %v2425 = vmul.f32 %v2403, 0.5
    %v2426 = vtanh.pop %v2425
    %v2427 = vadd.f32 %v2426, 1.0
    %v2428 = vmul.f32 %v2427, 0.5
    %v2429 = vmul.f32 %v2404, 0.5
    %v2430 = vtanh.pop %v2429
    %v2431 = vadd.f32 %v2430, 1.0
    %v2432 = vmul.f32 %v2431, 0.5
    %v2433 = vtanh.pop %v2405
    %v2434 = vmul.f32 %v2406, 0.5
    %v2435 = vtanh.pop %v2434
    %v2436 = vadd.f32 %v2435, 1.0
    %v2437 = vmul.f32 %v2436, 0.5
    %v2438 = vmul.f32 %v2432, %v2069
    %v2439 = vmul.f32 %v2428, %v2433
    %v2440 = vadd.f32 %v2438, %v2439
    %v2441 = vtanh.pop %v2440
    %v2442 = vmul.f32 %v2437, %v2441
    %2443 = vmatpush.msra.mxu0 %v443
    %2444 = vmatpush.msra.mxu0 %v435
    %2445 = vmatpush.msra.mxu0 %v427
    %2446 = vmatpush.msra.mxu0 %v419
    %2447 = vmatpush.msra.mxu0 %v411
    %2448 = vmatpush.msra.mxu0 %v403
    %2449 = vmatpush.msra.mxu0 %v395
    %2450 = vmatpush.msra.mxu0 %v387
    %2451 = vmatpush.msra.mxu0 %v379
    %2452 = vmatpush.msra.mxu0 %v371
    %2453 = vmatpush.msra.mxu0 %v363
    %2454 = vmatpush.msra.mxu0 %v355
    %2455 = vmatpush.msra.mxu0 %v347
    %2456 = vmatpush.msra.mxu0 %v339
    %2457 = vmatpush.msra.mxu0 %v331
    %2458 = vmatpush.msra.mxu0 %v323
    %2459 = vmatmul.f32.gmra.mxu0 %v2424
    %v2460 = vpop.f32.mrf.mxu0
    %v2461 = vadd.f32 0.0, %v2460
    %2462 = vdwg.mxu0
    %2463 = vmatpush.msra.mxu0 %v571
    %2464 = vmatpush.msra.mxu0 %v563
    %2465 = vmatpush.msra.mxu0 %v555
    %2466 = vmatpush.msra.mxu0 %v547
    %2467 = vmatpush.msra.mxu0 %v539
    %2468 = vmatpush.msra.mxu0 %v531
    %2469 = vmatpush.msra.mxu0 %v523
    %2470 = vmatpush.msra.mxu0 %v515
    %2471 = vmatpush.msra.mxu0 %v507
    %2472 = vmatpush.msra.mxu0 %v499
    %2473 = vmatpush.msra.mxu0 %v491
    %2474 = vmatpush.msra.mxu0 %v483
    %2475 = vmatpush.msra.mxu0 %v475
    %2476 = vmatpush.msra.mxu0 %v467
    %2477 = vmatpush.msra.mxu0 %v459
    %2478 = vmatpush.msra.mxu0 %v451
    %2479 = vmatmul.f32.gmra.mxu0 %v2442
    %v2480 = vpop.f32.mrf.mxu0
    %v2481 = vadd.f32 %v2461, %v2480
    %2482 = vdwg.mxu0
    %2483 = vmatpush.msra.mxu0 %v444
    %2484 = vmatpush.msra.mxu0 %v436
    %2485 = vmatpush.msra.mxu0 %v428
    %2486 = vmatpush.msra.mxu0 %v420
    %2487 = vmatpush.msra.mxu0 %v412
    %2488 = vmatpush.msra.mxu0 %v404
    %2489 = vmatpush.msra.mxu0 %v396
    %2490 = vmatpush.msra.mxu0 %v388
    %2491 = vmatpush.msra.mxu0 %v380
    %2492 = vmatpush.msra.mxu0 %v372
    %2493 = vmatpush.msra.mxu0 %v364
    %2494 = vmatpush.msra.mxu0 %v356
    %2495 = vmatpush.msra.mxu0 %v348
    %2496 = vmatpush.msra.mxu0 %v340
    %2497 = vmatpush.msra.mxu0 %v332
    %2498 = vmatpush.msra.mxu0 %v324
    %2499 = vmatmul.f32.gmra.mxu0 %v2424
    %v2500 = vpop.f32.mrf.mxu0
    %v2501 = vadd.f32 0.0, %v2500
    %2502 = vdwg.mxu0
    %2503 = vmatpush.msra.mxu0 %v572
    %2504 = vmatpush.msra.mxu0 %v564
    %2505 = vmatpush.msra.mxu0 %v556
    %2506 = vmatpush.msra.mxu0 %v548
    %2507 = vmatpush.msra.mxu0 %v540
    %2508 = vmatpush.msra.mxu0 %v532
    %2509 = vmatpush.msra.mxu0 %v524
    %2510 = vmatpush.msra.mxu0 %v516
    %2511 = vmatpush.msra.mxu0 %v508
    %2512 = vmatpush.msra.mxu0 %v500
    %2513 = vmatpush.msra.mxu0 %v492
    %2514 = vmatpush.msra.mxu0 %v484
    %2515 = vmatpush.msra.mxu0 %v476
    %2516 = vmatpush.msra.mxu0 %v468
    %2517 = vmatpush.msra.mxu0 %v460
    %2518 = vmatpush.msra.mxu0 %v452
    %2519 = vmatmul.f32.gmra.mxu0 %v2442
    %v2520 = vpop.f32.mrf.mxu0
    %v2521 = vadd.f32 %v2501, %v2520
    %2522 = vdwg.mxu0
    %2523 = vmatpush.msra.mxu0 %v445
    %2524 = vmatpush.msra.mxu0 %v437
    %2525 = vmatpush.msra.mxu0 %v429
    %2526 = vmatpush.msra.mxu0 %v421
    %2527 = vmatpush.msra.mxu0 %v413
    %2528 = vmatpush.msra.mxu0 %v405
    %2529 = vmatpush.msra.mxu0 %v397
    %2530 = vmatpush.msra.mxu0 %v389
    %2531 = vmatpush.msra.mxu0 %v381
    %2532 = vmatpush.msra.mxu0 %v373
    %2533 = vmatpush.msra.mxu0 %v365
    %2534 = vmatpush.msra.mxu0 %v357
    %2535 = vmatpush.msra.mxu0 %v349
    %2536 = vmatpush.msra.mxu0 %v341
    %2537 = vmatpush.msra.mxu0 %v333
    %2538 = vmatpush.msra.mxu0 %v325
    %2539 = vmatmul.f32.gmra.mxu0 %v2424
    %v2540 = vpop.f32.mrf.mxu0
    %v2541 = vadd.f32 0.0, %v2540
    %2542 = vdwg.mxu0
    %2543 = vmatpush.msra.mxu0 %v573
    %2544 = vmatpush.msra.mxu0 %v565
    %2545 = vmatpush.msra.mxu0 %v557
    %2546 = vmatpush.msra.mxu0 %v549
    %2547 = vmatpush.msra.mxu0 %v541
    %2548 = vmatpush.msra.mxu0 %v533
    %2549 = vmatpush.msra.mxu0 %v525
    %2550 = vmatpush.msra.mxu0 %v517
    %2551 = vmatpush.msra.mxu0 %v509
    %2552 = vmatpush.msra.mxu0 %v501
    %2553 = vmatpush.msra.mxu0 %v493
    %2554 = vmatpush.msra.mxu0 %v485
    %2555 = vmatpush.msra.mxu0 %v477
    %2556 = vmatpush.msra.mxu0 %v469
    %2557 = vmatpush.msra.mxu0 %v461
    %2558 = vmatpush.msra.mxu0 %v453
    %2559 = vmatmul.f32.gmra.mxu0 %v2442
    %v2560 = vpop.f32.mrf.mxu0
    %v2561 = vadd.f32 %v2541, %v2560
    %2562 = vdwg.mxu0
    %2563 = vmatpush.msra.mxu0 %v446
    %2564 = vmatpush.msra.mxu0 %v438
    %2565 = vmatpush.msra.mxu0 %v430
    %2566 = vmatpush.msra.mxu0 %v422
    %2567 = vmatpush.msra.mxu0 %v414
    %2568 = vmatpush.msra.mxu0 %v406
    %2569 = vmatpush.msra.mxu0 %v398
    %2570 = vmatpush.msra.mxu0 %v390
    %2571 = vmatpush.msra.mxu0 %v382
    %2572 = vmatpush.msra.mxu0 %v374
    %2573 = vmatpush.msra.mxu0 %v366
    %2574 = vmatpush.msra.mxu0 %v358
    %2575 = vmatpush.msra.mxu0 %v350
    %2576 = vmatpush.msra.mxu0 %v342
    %2577 = vmatpush.msra.mxu0 %v334
    %2578 = vmatpush.msra.mxu0 %v326
    %2579 = vmatmul.f32.gmra.mxu0 %v2424
    %v2580 = vpop.f32.mrf.mxu0
    %v2581 = vadd.f32 0.0, %v2580
    %2582 = vdwg.mxu0
    %2583 = vmatpush.msra.mxu0 %v574
    %2584 = vmatpush.msra.mxu0 %v566
    %2585 = vmatpush.msra.mxu0 %v558
    %2586 = vmatpush.msra.mxu0 %v550
    %2587 = vmatpush.msra.mxu0 %v542
    %2588 = vmatpush.msra.mxu0 %v534
    %2589 = vmatpush.msra.mxu0 %v526
    %2590 = vmatpush.msra.mxu0 %v518
    %2591 = vmatpush.msra.mxu0 %v510
    %2592 = vmatpush.msra.mxu0 %v502
    %2593 = vmatpush.msra.mxu0 %v494
    %2594 = vmatpush.msra.mxu0 %v486
    %2595 = vmatpush.msra.mxu0 %v478
    %2596 = vmatpush.msra.mxu0 %v470
    %2597 = vmatpush.msra.mxu0 %v462
    %2598 = vmatpush.msra.mxu0 %v454
    %2599 = vmatmul.f32.gmra.mxu0 %v2442
    %v2600 = vpop.f32.mrf.mxu0
    %v2601 = vadd.f32 %v2581, %v2600
    %2602 = vdwg.mxu0
    %2603 = vmatpush.msra.mxu0 %v447
    %2604 = vmatpush.msra.mxu0 %v439
    %2605 = vmatpush.msra.mxu0 %v431
    %2606 = vmatpush.msra.mxu0 %v423
    %2607 = vmatpush.msra.mxu0 %v415
    %2608 = vmatpush.msra.mxu0 %v407
    %2609 = vmatpush.msra.mxu0 %v399
    %2610 = vmatpush.msra.mxu0 %v391
    %2611 = vmatpush.msra.mxu0 %v383
    %2612 = vmatpush.msra.mxu0 %v375
    %2613 = vmatpush.msra.mxu0 %v367
    %2614 = vmatpush.msra.mxu0 %v359
    %2615 = vmatpush.msra.mxu0 %v351
    %2616 = vmatpush.msra.mxu0 %v343
    %2617 = vmatpush.msra.mxu0 %v335
    %2618 = vmatpush.msra.mxu0 %v327
    %2619 = vmatmul.f32.gmra.mxu0 %v2424
    %v2620 = vpop.f32.mrf.mxu0
    %v2621 = vadd.f32 0.0, %v2620
    %2622 = vdwg.mxu0
    %2623 = vmatpush.msra.mxu0 %v575
    %2624 = vmatpush.msra.mxu0 %v567
    %2625 = vmatpush.msra.mxu0 %v559
    %2626 = vmatpush.msra.mxu0 %v551
    %2627 = vmatpush.msra.mxu0 %v543
    %2628 = vmatpush.msra.mxu0 %v535
    %2629 = vmatpush.msra.mxu0 %v527
    %2630 = vmatpush.msra.mxu0 %v519
    %2631 = vmatpush.msra.mxu0 %v511
    %2632 = vmatpush.msra.mxu0 %v503
    %2633 = vmatpush.msra.mxu0 %v495
    %2634 = vmatpush.msra.mxu0 %v487
    %2635 = vmatpush.msra.mxu0 %v479
    %2636 = vmatpush.msra.mxu0 %v471
    %2637 = vmatpush.msra.mxu0 %v463
    %2638 = vmatpush.msra.mxu0 %v455
    %2639 = vmatmul.f32.gmra.mxu0 %v2442
    %v2640 = vpop.f32.mrf.mxu0
    %v2641 = vadd.f32 %v2621, %v2640
    %2642 = vdwg.mxu0
    %2643 = vmatpush.msra.mxu0 %v448
    %2644 = vmatpush.msra.mxu0 %v440
    %2645 = vmatpush.msra.mxu0 %v432
    %2646 = vmatpush.msra.mxu0 %v424
    %2647 = vmatpush.msra.mxu0 %v416
    %2648 = vmatpush.msra.mxu0 %v408
    %2649 = vmatpush.msra.mxu0 %v400
    %2650 = vmatpush.msra.mxu0 %v392
    %2651 = vmatpush.msra.mxu0 %v384
    %2652 = vmatpush.msra.mxu0 %v376
    %2653 = vmatpush.msra.mxu0 %v368
    %2654 = vmatpush.msra.mxu0 %v360
    %2655 = vmatpush.msra.mxu0 %v352
    %2656 = vmatpush.msra.mxu0 %v344
    %2657 = vmatpush.msra.mxu0 %v336
    %2658 = vmatpush.msra.mxu0 %v328
    %2659 = vmatmul.f32.gmra.mxu0 %v2424
    %v2660 = vpop.f32.mrf.mxu0
    %v2661 = vadd.f32 0.0, %v2660
    %2662 = vdwg.mxu0
    %2663 = vmatpush.msra.mxu0 %v576
    %2664 = vmatpush.msra.mxu0 %v568
    %2665 = vmatpush.msra.mxu0 %v560
    %2666 = vmatpush.msra.mxu0 %v552
    %2667 = vmatpush.msra.mxu0 %v544
    %2668 = vmatpush.msra.mxu0 %v536
    %2669 = vmatpush.msra.mxu0 %v528
    %2670 = vmatpush.msra.mxu0 %v520
    %2671 = vmatpush.msra.mxu0 %v512
    %2672 = vmatpush.msra.mxu0 %v504
    %2673 = vmatpush.msra.mxu0 %v496
    %2674 = vmatpush.msra.mxu0 %v488
    %2675 = vmatpush.msra.mxu0 %v480
    %2676 = vmatpush.msra.mxu0 %v472
    %2677 = vmatpush.msra.mxu0 %v464
    %2678 = vmatpush.msra.mxu0 %v456
    %2679 = vmatmul.f32.gmra.mxu0 %v2442
    %v2680 = vpop.f32.mrf.mxu0
    %v2681 = vadd.f32 %v2661, %v2680
    %2682 = vdwg.mxu0
    %2683 = vmatpush.msra.mxu0 %v449
    %2684 = vmatpush.msra.mxu0 %v441
    %2685 = vmatpush.msra.mxu0 %v433
    %2686 = vmatpush.msra.mxu0 %v425
    %2687 = vmatpush.msra.mxu0 %v417
    %2688 = vmatpush.msra.mxu0 %v409
    %2689 = vmatpush.msra.mxu0 %v401
    %2690 = vmatpush.msra.mxu0 %v393
    %2691 = vmatpush.msra.mxu0 %v385
    %2692 = vmatpush.msra.mxu0 %v377
    %2693 = vmatpush.msra.mxu0 %v369
    %2694 = vmatpush.msra.mxu0 %v361
    %2695 = vmatpush.msra.mxu0 %v353
    %2696 = vmatpush.msra.mxu0 %v345
    %2697 = vmatpush.msra.mxu0 %v337
    %2698 = vmatpush.msra.mxu0 %v329
    %2699 = vmatmul.f32.gmra.mxu0 %v2424
    %v2700 = vpop.f32.mrf.mxu0
    %v2701 = vadd.f32 0.0, %v2700
    %2702 = vdwg.mxu0
    %2703 = vmatpush.msra.mxu0 %v577
    %2704 = vmatpush.msra.mxu0 %v569
    %2705 = vmatpush.msra.mxu0 %v561
    %2706 = vmatpush.msra.mxu0 %v553
    %2707 = vmatpush.msra.mxu0 %v545
    %2708 = vmatpush.msra.mxu0 %v537
    %2709 = vmatpush.msra.mxu0 %v529
    %2710 = vmatpush.msra.mxu0 %v521
    %2711 = vmatpush.msra.mxu0 %v513
    %2712 = vmatpush.msra.mxu0 %v505
    %2713 = vmatpush.msra.mxu0 %v497
    %2714 = vmatpush.msra.mxu0 %v489
    %2715 = vmatpush.msra.mxu0 %v481
    %2716 = vmatpush.msra.mxu0 %v473
    %2717 = vmatpush.msra.mxu0 %v465
    %2718 = vmatpush.msra.mxu0 %v457
    %2719 = vmatmul.f32.gmra.mxu0 %v2442
    %v2720 = vpop.f32.mrf.mxu0
    %v2721 = vadd.f32 %v2701, %v2720
    %2722 = vdwg.mxu0
    %2723 = vmatpush.msra.mxu0 %v450
    %2724 = vmatpush.msra.mxu0 %v442
    %2725 = vmatpush.msra.mxu0 %v434
    %2726 = vmatpush.msra.mxu0 %v426
    %2727 = vmatpush.msra.mxu0 %v418
    %2728 = vmatpush.msra.mxu0 %v410
    %2729 = vmatpush.msra.mxu0 %v402
    %2730 = vmatpush.msra.mxu0 %v394
    %2731 = vmatpush.msra.mxu0 %v386
    %2732 = vmatpush.msra.mxu0 %v378
    %2733 = vmatpush.msra.mxu0 %v370
    %2734 = vmatpush.msra.mxu0 %v362
    %2735 = vmatpush.msra.mxu0 %v354
    %2736 = vmatpush.msra.mxu0 %v346
    %2737 = vmatpush.msra.mxu0 %v338
    %2738 = vmatpush.msra.mxu0 %v330
    %2739 = vmatmul.f32.gmra.mxu0 %v2424
    %v2740 = vpop.f32.mrf.mxu0
    %v2741 = vadd.f32 0.0, %v2740
    %2742 = vdwg.mxu0
    %2743 = vmatpush.msra.mxu0 %v578
    %2744 = vmatpush.msra.mxu0 %v570
    %2745 = vmatpush.msra.mxu0 %v562
    %2746 = vmatpush.msra.mxu0 %v554
    %2747 = vmatpush.msra.mxu0 %v546
    %2748 = vmatpush.msra.mxu0 %v538
    %2749 = vmatpush.msra.mxu0 %v530
    %2750 = vmatpush.msra.mxu0 %v522
    %2751 = vmatpush.msra.mxu0 %v514
    %2752 = vmatpush.msra.mxu0 %v506
    %2753 = vmatpush.msra.mxu0 %v498
    %2754 = vmatpush.msra.mxu0 %v490
    %2755 = vmatpush.msra.mxu0 %v482
    %2756 = vmatpush.msra.mxu0 %v474
    %2757 = vmatpush.msra.mxu0 %v466
    %2758 = vmatpush.msra.mxu0 %v458
    %2759 = vmatmul.f32.gmra.mxu0 %v2442
    %v2760 = vpop.f32.mrf.mxu0
    %v2761 = vadd.f32 %v2741, %v2760
    %2762 = vdwg.mxu0
    %s2763 = smul.u32 6, 4
    %s2764 = smul.addr %s2763, 8
    %s2765 = scalar_lea.vmem [#allocation2], %s2764
    %v2766 = vld [vmem:[%s2765] sm:$0xff]
    %v2767 = vld [vmem:[%s2765 + $0x8] sm:$0xff]
    %v2768 = vld [vmem:[%s2765 + $0x10] sm:$0xff]
    %v2769 = vld [vmem:[%s2765 + $0x18] sm:$0xff]
    %v2770 = vadd.f32 %v2766, %v2481
    %v2771 = vadd.f32 %v2767, %v2521
    %v2772 = vadd.f32 %v2768, %v2561
    %v2773 = vadd.f32 %v2769, %v2601
    %v2774 = vadd.f32 %v2641, %v911
    %v2775 = vadd.f32 %v2681, %v912
    %v2776 = vadd.f32 %v2721, %v913
    %v2777 = vadd.f32 %v2761, %v914
    %v2778 = vmul.f32 %v2770, 0.5
    %v2779 = vtanh.pop %v2778
    %v2780 = vadd.f32 %v2779, 1.0
    %v2781 = vmul.f32 %v2780, 0.5
    %v2782 = vmul.f32 %v2771, 0.5
    %v2783 = vtanh.pop %v2782
    %v2784 = vadd.f32 %v2783, 1.0
    %v2785 = vmul.f32 %v2784, 0.5
    %v2786 = vtanh.pop %v2772
    %v2787 = vmul.f32 %v2773, 0.5
    %v2788 = vtanh.pop %v2787
    %v2789 = vadd.f32 %v2788, 1.0
    %v2790 = vmul.f32 %v2789, 0.5
    %v2791 = vmul.f32 %v2785, %v2422
    %v2792 = vmul.f32 %v2781, %v2786
    %v2793 = vadd.f32 %v2791, %v2792
    %v2794 = vtanh.pop %v2793
    %v2795 = vmul.f32 %v2790, %v2794
    %v2796 = vmul.f32 %v2774, 0.5
    %v2797 = vtanh.pop %v2796
    %v2798 = vadd.f32 %v2797, 1.0
    %v2799 = vmul.f32 %v2798, 0.5
    %v2800 = vmul.f32 %v2775, 0.5
    %v2801 = vtanh.pop %v2800
    %v2802 = vadd.f32 %v2801, 1.0
    %v2803 = vmul.f32 %v2802, 0.5
    %v2804 = vtanh.pop %v2776
    %v2805 = vmul.f32 %v2777, 0.5
    %v2806 = vtanh.pop %v2805
    %v2807 = vadd.f32 %v2806, 1.0
    %v2808 = vmul.f32 %v2807, 0.5
    %v2809 = vmul.f32 %v2803, %v2440
    %v2810 = vmul.f32 %v2799, %v2804
    %v2811 = vadd.f32 %v2809, %v2810
    %v2812 = vtanh.pop %v2811
    %v2813 = vmul.f32 %v2808, %v2812
    %2814 = vmatpush.msra.mxu0 %v443
    %2815 = vmatpush.msra.mxu0 %v435
    %2816 = vmatpush.msra.mxu0 %v427
    %2817 = vmatpush.msra.mxu0 %v419
    %2818 = vmatpush.msra.mxu0 %v411
    %2819 = vmatpush.msra.mxu0 %v403
    %2820 = vmatpush.msra.mxu0 %v395
    %2821 = vmatpush.msra.mxu0 %v387
    %2822 = vmatpush.msra.mxu0 %v379
    %2823 = vmatpush.msra.mxu0 %v371
    %2824 = vmatpush.msra.mxu0 %v363
    %2825 = vmatpush.msra.mxu0 %v355
    %2826 = vmatpush.msra.mxu0 %v347
    %2827 = vmatpush.msra.mxu0 %v339
    %2828 = vmatpush.msra.mxu0 %v331
    %2829 = vmatpush.msra.mxu0 %v323
    %2830 = vmatmul.f32.gmra.mxu0 %v2795
    %v2831 = vpop.f32.mrf.mxu0
    %v2832 = vadd.f32 0.0, %v2831
    %2833 = vdwg.mxu0
    %2834 = vmatpush.msra.mxu0 %v571
    %2835 = vmatpush.msra.mxu0 %v563
    %2836 = vmatpush.msra.mxu0 %v555
    %2837 = vmatpush.msra.mxu0 %v547
    %2838 = vmatpush.msra.mxu0 %v539
    %2839 = vmatpush.msra.mxu0 %v531
    %2840 = vmatpush.msra.mxu0 %v523
    %2841 = vmatpush.msra.mxu0 %v515
    %2842 = vmatpush.msra.mxu0 %v507
    %2843 = vmatpush.msra.mxu0 %v499
    %2844 = vmatpush.msra.mxu0 %v491
    %2845 = vmatpush.msra.mxu0 %v483
    %2846 = vmatpush.msra.mxu0 %v475
    %2847 = vmatpush.msra.mxu0 %v467
    %2848 = vmatpush.msra.mxu0 %v459
    %2849 = vmatpush.msra.mxu0 %v451
    %2850 = vmatmul.f32.gmra.mxu0 %v2813
    %v2851 = vpop.f32.mrf.mxu0
    %v2852 = vadd.f32 %v2832, %v2851
    %2853 = vdwg.mxu0
    %2854 = vmatpush.msra.mxu0 %v444
    %2855 = vmatpush.msra.mxu0 %v436
    %2856 = vmatpush.msra.mxu0 %v428
    %2857 = vmatpush.msra.mxu0 %v420
    %2858 = vmatpush.msra.mxu0 %v412
    %2859 = vmatpush.msra.mxu0 %v404
    %2860 = vmatpush.msra.mxu0 %v396
    %2861 = vmatpush.msra.mxu0 %v388
    %2862 = vmatpush.msra.mxu0 %v380
    %2863 = vmatpush.msra.mxu0 %v372
    %2864 = vmatpush.msra.mxu0 %v364
    %2865 = vmatpush.msra.mxu0 %v356
    %2866 = vmatpush.msra.mxu0 %v348
    %2867 = vmatpush.msra.mxu0 %v340
    %2868 = vmatpush.msra.mxu0 %v332
    %2869 = vmatpush.msra.mxu0 %v324
    %2870 = vmatmul.f32.gmra.mxu0 %v2795
    %v2871 = vpop.f32.mrf.mxu0
    %v2872 = vadd.f32 0.0, %v2871
    %2873 = vdwg.mxu0
    %2874 = vmatpush.msra.mxu0 %v572
    %2875 = vmatpush.msra.mxu0 %v564
    %2876 = vmatpush.msra.mxu0 %v556
    %2877 = vmatpush.msra.mxu0 %v548
    %2878 = vmatpush.msra.mxu0 %v540
    %2879 = vmatpush.msra.mxu0 %v532
    %2880 = vmatpush.msra.mxu0 %v524
    %2881 = vmatpush.msra.mxu0 %v516
    %2882 = vmatpush.msra.mxu0 %v508
    %2883 = vmatpush.msra.mxu0 %v500
    %2884 = vmatpush.msra.mxu0 %v492
    %2885 = vmatpush.msra.mxu0 %v484
    %2886 = vmatpush.msra.mxu0 %v476
    %2887 = vmatpush.msra.mxu0 %v468
    %2888 = vmatpush.msra.mxu0 %v460
    %2889 = vmatpush.msra.mxu0 %v452
    %2890 = vmatmul.f32.gmra.mxu0 %v2813
    %v2891 = vpop.f32.mrf.mxu0
    %v2892 = vadd.f32 %v2872, %v2891
    %2893 = vdwg.mxu0
    %2894 = vmatpush.msra.mxu0 %v445
    %2895 = vmatpush.msra.mxu0 %v437
    %2896 = vmatpush.msra.mxu0 %v429
    %2897 = vmatpush.msra.mxu0 %v421
    %2898 = vmatpush.msra.mxu0 %v413
    %2899 = vmatpush.msra.mxu0 %v405
    %2900 = vmatpush.msra.mxu0 %v397
    %2901 = vmatpush.msra.mxu0 %v389
    %2902 = vmatpush.msra.mxu0 %v381
    %2903 = vmatpush.msra.mxu0 %v373
    %2904 = vmatpush.msra.mxu0 %v365
    %2905 = vmatpush.msra.mxu0 %v357
    %2906 = vmatpush.msra.mxu0 %v349
    %2907 = vmatpush.msra.mxu0 %v341
    %2908 = vmatpush.msra.mxu0 %v333
    %2909 = vmatpush.msra.mxu0 %v325
    %2910 = vmatmul.f32.gmra.mxu0 %v2795
    %v2911 = vpop.f32.mrf.mxu0
    %v2912 = vadd.f32 0.0, %v2911
    %2913 = vdwg.mxu0
    %2914 = vmatpush.msra.mxu0 %v573
    %2915 = vmatpush.msra.mxu0 %v565
    %2916 = vmatpush.msra.mxu0 %v557
    %2917 = vmatpush.msra.mxu0 %v549
    %2918 = vmatpush.msra.mxu0 %v541
    %2919 = vmatpush.msra.mxu0 %v533
    %2920 = vmatpush.msra.mxu0 %v525
    %2921 = vmatpush.msra.mxu0 %v517
    %2922 = vmatpush.msra.mxu0 %v509
    %2923 = vmatpush.msra.mxu0 %v501
    %2924 = vmatpush.msra.mxu0 %v493
    %2925 = vmatpush.msra.mxu0 %v485
    %2926 = vmatpush.msra.mxu0 %v477
    %2927 = vmatpush.msra.mxu0 %v469
    %2928 = vmatpush.msra.mxu0 %v461
    %2929 = vmatpush.msra.mxu0 %v453
    %2930 = vmatmul.f32.gmra.mxu0 %v2813
    %v2931 = vpop.f32.mrf.mxu0
    %v2932 = vadd.f32 %v2912, %v2931
    %2933 = vdwg.mxu0
    %2934 = vmatpush.msra.mxu0 %v446
    %2935 = vmatpush.msra.mxu0 %v438
    %2936 = vmatpush.msra.mxu0 %v430
    %2937 = vmatpush.msra.mxu0 %v422
    %2938 = vmatpush.msra.mxu0 %v414
    %2939 = vmatpush.msra.mxu0 %v406
    %2940 = vmatpush.msra.mxu0 %v398
    %2941 = vmatpush.msra.mxu0 %v390
    %2942 = vmatpush.msra.mxu0 %v382
    %2943 = vmatpush.msra.mxu0 %v374
    %2944 = vmatpush.msra.mxu0 %v366
    %2945 = vmatpush.msra.mxu0 %v358
    %2946 = vmatpush.msra.mxu0 %v350
    %2947 = vmatpush.msra.mxu0 %v342
    %2948 = vmatpush.msra.mxu0 %v334
    %2949 = vmatpush.msra.mxu0 %v326
    %2950 = vmatmul.f32.gmra.mxu0 %v2795
    %v2951 = vpop.f32.mrf.mxu0
    %v2952 = vadd.f32 0.0, %v2951
    %2953 = vdwg.mxu0
    %2954 = vmatpush.msra.mxu0 %v574
    %2955 = vmatpush.msra.mxu0 %v566
    %2956 = vmatpush.msra.mxu0 %v558
    %2957 = vmatpush.msra.mxu0 %v550
    %2958 = vmatpush.msra.mxu0 %v542
    %2959 = vmatpush.msra.mxu0 %v534
    %2960 = vmatpush.msra.mxu0 %v526
    %2961 = vmatpush.msra.mxu0 %v518
    %2962 = vmatpush.msra.mxu0 %v510
    %2963 = vmatpush.msra.mxu0 %v502
    %2964 = vmatpush.msra.mxu0 %v494
    %2965 = vmatpush.msra.mxu0 %v486
    %2966 = vmatpush.msra.mxu0 %v478
    %2967 = vmatpush.msra.mxu0 %v470
    %2968 = vmatpush.msra.mxu0 %v462
    %2969 = vmatpush.msra.mxu0 %v454
    %2970 = vmatmul.f32.gmra.mxu0 %v2813
    %v2971 = vpop.f32.mrf.mxu0
    %v2972 = vadd.f32 %v2952, %v2971
    %2973 = vdwg.mxu0
    %2974 = vmatpush.msra.mxu0 %v447
    %2975 = vmatpush.msra.mxu0 %v439
    %2976 = vmatpush.msra.mxu0 %v431
    %2977 = vmatpush.msra.mxu0 %v423
    %2978 = vmatpush.msra.mxu0 %v415
    %2979 = vmatpush.msra.mxu0 %v407
    %2980 = vmatpush.msra.mxu0 %v399
    %2981 = vmatpush.msra.mxu0 %v391
    %2982 = vmatpush.msra.mxu0 %v383
    %2983 = vmatpush.msra.mxu0 %v375
    %2984 = vmatpush.msra.mxu0 %v367
    %2985 = vmatpush.msra.mxu0 %v359
    %2986 = vmatpush.msra.mxu0 %v351
    %2987 = vmatpush.msra.mxu0 %v343
    %2988 = vmatpush.msra.mxu0 %v335
    %2989 = vmatpush.msra.mxu0 %v327
    %2990 = vmatmul.f32.gmra.mxu0 %v2795
    %v2991 = vpop.f32.mrf.mxu0
    %v2992 = vadd.f32 0.0, %v2991
    %2993 = vdwg.mxu0
    %2994 = vmatpush.msra.mxu0 %v575
    %2995 = vmatpush.msra.mxu0 %v567
    %2996 = vmatpush.msra.mxu0 %v559
    %2997 = vmatpush.msra.mxu0 %v551
    %2998 = vmatpush.msra.mxu0 %v543
    %2999 = vmatpush.msra.mxu0 %v535
    %3000 = vmatpush.msra.mxu0 %v527
    %3001 = vmatpush.msra.mxu0 %v519
    %3002 = vmatpush.msra.mxu0 %v511
    %3003 = vmatpush.msra.mxu0 %v503
    %3004 = vmatpush.msra.mxu0 %v495
    %3005 = vmatpush.msra.mxu0 %v487
    %3006 = vmatpush.msra.mxu0 %v479
    %3007 = vmatpush.msra.mxu0 %v471
    %3008 = vmatpush.msra.mxu0 %v463
    %3009 = vmatpush.msra.mxu0 %v455
    %3010 = vmatmul.f32.gmra.mxu0 %v2813
    %v3011 = vpop.f32.mrf.mxu0
    %v3012 = vadd.f32 %v2992, %v3011
    %3013 = vdwg.mxu0
    %3014 = vmatpush.msra.mxu0 %v448
    %3015 = vmatpush.msra.mxu0 %v440
    %3016 = vmatpush.msra.mxu0 %v432
    %3017 = vmatpush.msra.mxu0 %v424
    %3018 = vmatpush.msra.mxu0 %v416
    %3019 = vmatpush.msra.mxu0 %v408
    %3020 = vmatpush.msra.mxu0 %v400
    %3021 = vmatpush.msra.mxu0 %v392
    %3022 = vmatpush.msra.mxu0 %v384
    %3023 = vmatpush.msra.mxu0 %v376
    %3024 = vmatpush.msra.mxu0 %v368
    %3025 = vmatpush.msra.mxu0 %v360
    %3026 = vmatpush.msra.mxu0 %v352
    %3027 = vmatpush.msra.mxu0 %v344
    %3028 = vmatpush.msra.mxu0 %v336
    %3029 = vmatpush.msra.mxu0 %v328
    %3030 = vmatmul.f32.gmra.mxu0 %v2795
    %v3031 = vpop.f32.mrf.mxu0
    %v3032 = vadd.f32 0.0, %v3031
    %3033 = vdwg.mxu0
    %3034 = vmatpush.msra.mxu0 %v576
    %3035 = vmatpush.msra.mxu0 %v568
    %3036 = vmatpush.msra.mxu0 %v560
    %3037 = vmatpush.msra.mxu0 %v552
    %3038 = vmatpush.msra.mxu0 %v544
    %3039 = vmatpush.msra.mxu0 %v536
    %3040 = vmatpush.msra.mxu0 %v528
    %3041 = vmatpush.msra.mxu0 %v520
    %3042 = vmatpush.msra.mxu0 %v512
    %3043 = vmatpush.msra.mxu0 %v504
    %3044 = vmatpush.msra.mxu0 %v496
    %3045 = vmatpush.msra.mxu0 %v488
    %3046 = vmatpush.msra.mxu0 %v480
    %3047 = vmatpush.msra.mxu0 %v472
    %3048 = vmatpush.msra.mxu0 %v464
    %3049 = vmatpush.msra.mxu0 %v456
    %3050 = vmatmul.f32.gmra.mxu0 %v2813
    %v3051 = vpop.f32.mrf.mxu0
    %v3052 = vadd.f32 %v3032, %v3051
    %3053 = vdwg.mxu0
    %3054 = vmatpush.msra.mxu0 %v449
    %3055 = vmatpush.msra.mxu0 %v441
    %3056 = vmatpush.msra.mxu0 %v433
    %3057 = vmatpush.msra.mxu0 %v425
    %3058 = vmatpush.msra.mxu0 %v417
    %3059 = vmatpush.msra.mxu0 %v409
    %3060 = vmatpush.msra.mxu0 %v401
    %3061 = vmatpush.msra.mxu0 %v393
    %3062 = vmatpush.msra.mxu0 %v385
    %3063 = vmatpush.msra.mxu0 %v377
    %3064 = vmatpush.msra.mxu0 %v369
    %3065 = vmatpush.msra.mxu0 %v361
    %3066 = vmatpush.msra.mxu0 %v353
    %3067 = vmatpush.msra.mxu0 %v345
    %3068 = vmatpush.msra.mxu0 %v337
    %3069 = vmatpush.msra.mxu0 %v329
    %3070 = vmatmul.f32.gmra.mxu0 %v2795
    %v3071 = vpop.f32.mrf.mxu0
    %v3072 = vadd.f32 0.0, %v3071
    %3073 = vdwg.mxu0
    %3074 = vmatpush.msra.mxu0 %v577
    %3075 = vmatpush.msra.mxu0 %v569
    %3076 = vmatpush.msra.mxu0 %v561
    %3077 = vmatpush.msra.mxu0 %v553
    %3078 = vmatpush.msra.mxu0 %v545
    %3079 = vmatpush.msra.mxu0 %v537
    %3080 = vmatpush.msra.mxu0 %v529
    %3081 = vmatpush.msra.mxu0 %v521
    %3082 = vmatpush.msra.mxu0 %v513
    %3083 = vmatpush.msra.mxu0 %v505
    %3084 = vmatpush.msra.mxu0 %v497
    %3085 = vmatpush.msra.mxu0 %v489
    %3086 = vmatpush.msra.mxu0 %v481
    %3087 = vmatpush.msra.mxu0 %v473
    %3088 = vmatpush.msra.mxu0 %v465
    %3089 = vmatpush.msra.mxu0 %v457
    %3090 = vmatmul.f32.gmra.mxu0 %v2813
    %v3091 = vpop.f32.mrf.mxu0
    %v3092 = vadd.f32 %v3072, %v3091
    %3093 = vdwg.mxu0
    %3094 = vmatpush.msra.mxu0 %v450
    %3095 = vmatpush.msra.mxu0 %v442
    %3096 = vmatpush.msra.mxu0 %v434
    %3097 = vmatpush.msra.mxu0 %v426
    %3098 = vmatpush.msra.mxu0 %v418
    %3099 = vmatpush.msra.mxu0 %v410
    %3100 = vmatpush.msra.mxu0 %v402
    %3101 = vmatpush.msra.mxu0 %v394
    %3102 = vmatpush.msra.mxu0 %v386
    %3103 = vmatpush.msra.mxu0 %v378
    %3104 = vmatpush.msra.mxu0 %v370
    %3105 = vmatpush.msra.mxu0 %v362
    %3106 = vmatpush.msra.mxu0 %v354
    %3107 = vmatpush.msra.mxu0 %v346
    %3108 = vmatpush.msra.mxu0 %v338
    %3109 = vmatpush.msra.mxu0 %v330
    %3110 = vmatmul.f32.gmra.mxu0 %v2795
    %v3111 = vpop.f32.mrf.mxu0
    %v3112 = vadd.f32 0.0, %v3111
    %3113 = vdwg.mxu0
    %3114 = vmatpush.msra.mxu0 %v578
    %3115 = vmatpush.msra.mxu0 %v570
    %3116 = vmatpush.msra.mxu0 %v562
    %3117 = vmatpush.msra.mxu0 %v554
    %3118 = vmatpush.msra.mxu0 %v546
    %3119 = vmatpush.msra.mxu0 %v538
    %3120 = vmatpush.msra.mxu0 %v530
    %3121 = vmatpush.msra.mxu0 %v522
    %3122 = vmatpush.msra.mxu0 %v514
    %3123 = vmatpush.msra.mxu0 %v506
    %3124 = vmatpush.msra.mxu0 %v498
    %3125 = vmatpush.msra.mxu0 %v490
    %3126 = vmatpush.msra.mxu0 %v482
    %3127 = vmatpush.msra.mxu0 %v474
    %3128 = vmatpush.msra.mxu0 %v466
    %3129 = vmatpush.msra.mxu0 %v458
    %3130 = vmatmul.f32.gmra.mxu0 %v2813
    %v3131 = vpop.f32.mrf.mxu0
    %v3132 = vadd.f32 %v3112, %v3131
    %3133 = vdwg.mxu0
    %s3134 = smul.u32 7, 4
    %s3135 = smul.addr %s3134, 8
    %s3136 = scalar_lea.vmem [#allocation2], %s3135
    %v3137 = vld [vmem:[%s3136] sm:$0xff]
    %v3138 = vld [vmem:[%s3136 + $0x8] sm:$0xff]
    %v3139 = vld [vmem:[%s3136 + $0x10] sm:$0xff]
    %v3140 = vld [vmem:[%s3136 + $0x18] sm:$0xff]
    %v3141 = vadd.f32 %v3137, %v2852
    %v3142 = vadd.f32 %v3138, %v2892
    %v3143 = vadd.f32 %v3139, %v2932
    %v3144 = vadd.f32 %v3140, %v2972
    %v3145 = vadd.f32 %v3012, %v911
    %v3146 = vadd.f32 %v3052, %v912
    %v3147 = vadd.f32 %v3092, %v913
    %v3148 = vadd.f32 %v3132, %v914
    %v3149 = vmul.f32 %v3141, 0.5
    %v3150 = vtanh.pop %v3149
    %v3151 = vadd.f32 %v3150, 1.0
    %v3152 = vmul.f32 %v3151, 0.5
    %v3153 = vmul.f32 %v3142, 0.5
    %v3154 = vtanh.pop %v3153
    %v3155 = vadd.f32 %v3154, 1.0
    %v3156 = vmul.f32 %v3155, 0.5
    %v3157 = vtanh.pop %v3143
    %v3158 = vmul.f32 %v3144, 0.5
    %v3159 = vtanh.pop %v3158
    %v3160 = vadd.f32 %v3159, 1.0
    %v3161 = vmul.f32 %v3160, 0.5
    %v3162 = vmul.f32 %v3156, %v2793
    %v3163 = vmul.f32 %v3152, %v3157
    %v3164 = vadd.f32 %v3162, %v3163
    %v3165 = vtanh.pop %v3164
    %v3166 = vmul.f32 %v3161, %v3165
    %v3167 = vmul.f32 %v3145, 0.5
    %v3168 = vtanh.pop %v3167
    %v3169 = vadd.f32 %v3168, 1.0
    %v3170 = vmul.f32 %v3169, 0.5
    %v3171 = vmul.f32 %v3146, 0.5
    %v3172 = vtanh.pop %v3171
    %v3173 = vadd.f32 %v3172, 1.0
    %v3174 = vmul.f32 %v3173, 0.5
    %v3175 = vtanh.pop %v3147
    %v3176 = vmul.f32 %v3148, 0.5
    %v3177 = vtanh.pop %v3176
    %v3178 = vadd.f32 %v3177, 1.0
    %v3179 = vmul.f32 %v3178, 0.5
    %v3180 = vmul.f32 %v3174, %v2811
    %v3181 = vmul.f32 %v3170, %v3175
    %v3182 = vadd.f32 %v3180, %v3181
    %v3183 = vtanh.pop %v3182
    %v3184 = vmul.f32 %v3179, %v3183
    %3185 = vmatpush.msra.mxu0 %v447
    %3186 = vmatpush.msra.mxu0 %v439
    %3187 = vmatpush.msra.mxu0 %v431
    %3188 = vmatpush.msra.mxu0 %v423
    %3189 = vmatpush.msra.mxu0 %v415
    %3190 = vmatpush.msra.mxu0 %v407
    %3191 = vmatpush.msra.mxu0 %v399
    %3192 = vmatpush.msra.mxu0 %v391
    %3193 = vmatpush.msra.mxu0 %v383
    %3194 = vmatpush.msra.mxu0 %v375
    %3195 = vmatpush.msra.mxu0 %v367
    %3196 = vmatpush.msra.mxu0 %v359
    %3197 = vmatpush.msra.mxu0 %v351
    %3198 = vmatpush.msra.mxu0 %v343
    %3199 = vmatpush.msra.mxu0 %v335
    %3200 = vmatpush.msra.mxu0 %v327
    %3201 = vmatmul.f32.gmra.mxu0 %v3166
    %v3202 = vpop.f32.mrf.mxu0
    %v3203 = vadd.f32 %v911, %v3202
    %3204 = vdwg.mxu0
    %3205 = vmatpush.msra.mxu0 %v575
    %3206 = vmatpush.msra.mxu0 %v567
    %3207 = vmatpush.msra.mxu0 %v559
    %3208 = vmatpush.msra.mxu0 %v551
    %3209 = vmatpush.msra.mxu0 %v543
    %3210 = vmatpush.msra.mxu0 %v535
    %3211 = vmatpush.msra.mxu0 %v527
    %3212 = vmatpush.msra.mxu0 %v519
    %3213 = vmatpush.msra.mxu0 %v511
    %3214 = vmatpush.msra.mxu0 %v503
    %3215 = vmatpush.msra.mxu0 %v495
    %3216 = vmatpush.msra.mxu0 %v487
    %3217 = vmatpush.msra.mxu0 %v479
    %3218 = vmatpush.msra.mxu0 %v471
    %3219 = vmatpush.msra.mxu0 %v463
    %3220 = vmatpush.msra.mxu0 %v455
    %3221 = vmatmul.f32.gmra.mxu0 %v3184
    %v3222 = vpop.f32.mrf.mxu0
    %v3223 = vadd.f32 %v3203, %v3222
    %3224 = vdwg.mxu0
    %3225 = vmatpush.msra.mxu0 %v448
    %3226 = vmatpush.msra.mxu0 %v440
    %3227 = vmatpush.msra.mxu0 %v432
    %3228 = vmatpush.msra.mxu0 %v424
    %3229 = vmatpush.msra.mxu0 %v416
    %3230 = vmatpush.msra.mxu0 %v408
    %3231 = vmatpush.msra.mxu0 %v400
    %3232 = vmatpush.msra.mxu0 %v392
    %3233 = vmatpush.msra.mxu0 %v384
    %3234 = vmatpush.msra.mxu0 %v376
    %3235 = vmatpush.msra.mxu0 %v368
    %3236 = vmatpush.msra.mxu0 %v360
    %3237 = vmatpush.msra.mxu0 %v352
    %3238 = vmatpush.msra.mxu0 %v344
    %3239 = vmatpush.msra.mxu0 %v336
    %3240 = vmatpush.msra.mxu0 %v328
    %3241 = vmatmul.f32.gmra.mxu0 %v3166
    %v3242 = vpop.f32.mrf.mxu0
    %v3243 = vadd.f32 %v912, %v3242
    %3244 = vdwg.mxu0
    %3245 = vmatpush.msra.mxu0 %v576
    %3246 = vmatpush.msra.mxu0 %v568
    %3247 = vmatpush.msra.mxu0 %v560
    %3248 = vmatpush.msra.mxu0 %v552
    %3249 = vmatpush.msra.mxu0 %v544
    %3250 = vmatpush.msra.mxu0 %v536
    %3251 = vmatpush.msra.mxu0 %v528
    %3252 = vmatpush.msra.mxu0 %v520
    %3253 = vmatpush.msra.mxu0 %v512
    %3254 = vmatpush.msra.mxu0 %v504
    %3255 = vmatpush.msra.mxu0 %v496
    %3256 = vmatpush.msra.mxu0 %v488
    %3257 = vmatpush.msra.mxu0 %v480
    %3258 = vmatpush.msra.mxu0 %v472
    %3259 = vmatpush.msra.mxu0 %v464
    %3260 = vmatpush.msra.mxu0 %v456
    %3261 = vmatmul.f32.gmra.mxu0 %v3184
    %v3262 = vpop.f32.mrf.mxu0
    %v3263 = vadd.f32 %v3243, %v3262
    %3264 = vdwg.mxu0
    %3265 = vmatpush.msra.mxu0 %v449
    %3266 = vmatpush.msra.mxu0 %v441
    %3267 = vmatpush.msra.mxu0 %v433
    %3268 = vmatpush.msra.mxu0 %v425
    %3269 = vmatpush.msra.mxu0 %v417
    %3270 = vmatpush.msra.mxu0 %v409
    %3271 = vmatpush.msra.mxu0 %v401
    %3272 = vmatpush.msra.mxu0 %v393
    %3273 = vmatpush.msra.mxu0 %v385
    %3274 = vmatpush.msra.mxu0 %v377
    %3275 = vmatpush.msra.mxu0 %v369
    %3276 = vmatpush.msra.mxu0 %v361
    %3277 = vmatpush.msra.mxu0 %v353
    %3278 = vmatpush.msra.mxu0 %v345
    %3279 = vmatpush.msra.mxu0 %v337
    %3280 = vmatpush.msra.mxu0 %v329
    %3281 = vmatmul.f32.gmra.mxu0 %v3166
    %v3282 = vpop.f32.mrf.mxu0
    %v3283 = vadd.f32 %v913, %v3282
    %3284 = vdwg.mxu0
    %3285 = vmatpush.msra.mxu0 %v577
    %3286 = vmatpush.msra.mxu0 %v569
    %3287 = vmatpush.msra.mxu0 %v561
    %3288 = vmatpush.msra.mxu0 %v553
    %3289 = vmatpush.msra.mxu0 %v545
    %3290 = vmatpush.msra.mxu0 %v537
    %3291 = vmatpush.msra.mxu0 %v529
    %3292 = vmatpush.msra.mxu0 %v521
    %3293 = vmatpush.msra.mxu0 %v513
    %3294 = vmatpush.msra.mxu0 %v505
    %3295 = vmatpush.msra.mxu0 %v497
    %3296 = vmatpush.msra.mxu0 %v489
    %3297 = vmatpush.msra.mxu0 %v481
    %3298 = vmatpush.msra.mxu0 %v473
    %3299 = vmatpush.msra.mxu0 %v465
    %3300 = vmatpush.msra.mxu0 %v457
    %3301 = vmatmul.f32.gmra.mxu0 %v3184
    %v3302 = vpop.f32.mrf.mxu0
    %v3303 = vadd.f32 %v3283, %v3302
    %3304 = vdwg.mxu0
    %3305 = vmatpush.msra.mxu0 %v450
    %3306 = vmatpush.msra.mxu0 %v442
    %3307 = vmatpush.msra.mxu0 %v434
    %3308 = vmatpush.msra.mxu0 %v426
    %3309 = vmatpush.msra.mxu0 %v418
    %3310 = vmatpush.msra.mxu0 %v410
    %3311 = vmatpush.msra.mxu0 %v402
    %3312 = vmatpush.msra.mxu0 %v394
    %3313 = vmatpush.msra.mxu0 %v386
    %3314 = vmatpush.msra.mxu0 %v378
    %3315 = vmatpush.msra.mxu0 %v370
    %3316 = vmatpush.msra.mxu0 %v362
    %3317 = vmatpush.msra.mxu0 %v354
    %3318 = vmatpush.msra.mxu0 %v346
    %3319 = vmatpush.msra.mxu0 %v338
    %3320 = vmatpush.msra.mxu0 %v330
    %3321 = vmatmul.f32.gmra.mxu0 %v3166
    %v3322 = vpop.f32.mrf.mxu0
    %v3323 = vadd.f32 %v914, %v3322
    %3324 = vdwg.mxu0
    %3325 = vmatpush.msra.mxu0 %v578
    %3326 = vmatpush.msra.mxu0 %v570
    %3327 = vmatpush.msra.mxu0 %v562
    %3328 = vmatpush.msra.mxu0 %v554
    %3329 = vmatpush.msra.mxu0 %v546
    %3330 = vmatpush.msra.mxu0 %v538
    %3331 = vmatpush.msra.mxu0 %v530
    %3332 = vmatpush.msra.mxu0 %v522
    %3333 = vmatpush.msra.mxu0 %v514
    %3334 = vmatpush.msra.mxu0 %v506
    %3335 = vmatpush.msra.mxu0 %v498
    %3336 = vmatpush.msra.mxu0 %v490
    %3337 = vmatpush.msra.mxu0 %v482
    %3338 = vmatpush.msra.mxu0 %v474
    %3339 = vmatpush.msra.mxu0 %v466
    %3340 = vmatpush.msra.mxu0 %v458
    %3341 = vmatmul.f32.gmra.mxu0 %v3184
    %v3342 = vpop.f32.mrf.mxu0
    %v3343 = vadd.f32 %v3323, %v3342
    %3344 = vdwg.mxu0
    %v3345 = vmul.f32 %v3223, 0.5
    %v3346 = vtanh.pop %v3345
    %v3347 = vadd.f32 %v3346, 1.0
    %v3348 = vmul.f32 %v3347, 0.5
    %v3349 = vmul.f32 %v3263, 0.5
    %v3350 = vtanh.pop %v3349
    %v3351 = vadd.f32 %v3350, 1.0
    %v3352 = vmul.f32 %v3351, 0.5
    %v3353 = vtanh.pop %v3303
    %v3354 = vmul.f32 %v3343, 0.5
    %v3355 = vtanh.pop %v3354
    %v3356 = vadd.f32 %v3355, 1.0
    %v3357 = vmul.f32 %v3356, 0.5
    %v3358 = vmul.f32 %v3352, %v3182
    %v3359 = vmul.f32 %v3348, %v3353
    %v3360 = vadd.f32 %v3358, %v3359
    %v3361 = vtanh.pop %v3360
    %v3362 = vmul.f32 %v3357, %v3361
    %v3363 = vld [vmem:[#allocation5] sm:$0xff]
    %v3364 = vld [vmem:[#allocation5 + $0x8] sm:$0xff]
    %v3365 = vld [vmem:[#allocation5 + $0x10] sm:$0xff]
    %v3366 = vld [vmem:[#allocation5 + $0x18] sm:$0xff]
    %v3367 = vld [vmem:[#allocation5 + $0x20] sm:$0xff]
    %v3368 = vld [vmem:[#allocation5 + $0x28] sm:$0xff]
    %v3369 = vld [vmem:[#allocation5 + $0x30] sm:$0xff]
    %v3370 = vld [vmem:[#allocation5 + $0x38] sm:$0xff]
    %v3371 = vld [vmem:[#allocation5 + $0x40] sm:$0xff]
    %v3372 = vld [vmem:[#allocation5 + $0x48] sm:$0xff]
    %v3373 = vld [vmem:[#allocation5 + $0x50] sm:$0xff]
    %v3374 = vld [vmem:[#allocation5 + $0x58] sm:$0xff]
    %v3375 = vld [vmem:[#allocation5 + $0x60] sm:$0xff]
    %v3376 = vld [vmem:[#allocation5 + $0x68] sm:$0xff]
    %v3377 = vld [vmem:[#allocation5 + $0x70] sm:$0xff]
    %v3378 = vld [vmem:[#allocation5 + $0x78] sm:$0xff]
    %v3379 = vld [vmem:[%s6] sm:$0x1]
    %v3381 = vperm.slane %v3379, 0
    %3383 = vmatpush.msra.mxu0 %v3378
    %3384 = vmatpush.msra.mxu0 %v3377
    %3385 = vmatpush.msra.mxu0 %v3376
    %3386 = vmatpush.msra.mxu0 %v3375
    %3387 = vmatpush.msra.mxu0 %v3374
    %3388 = vmatpush.msra.mxu0 %v3373
    %3389 = vmatpush.msra.mxu0 %v3372
    %3390 = vmatpush.msra.mxu0 %v3371
    %3391 = vmatpush.msra.mxu0 %v3370
    %3392 = vmatpush.msra.mxu0 %v3369
    %3393 = vmatpush.msra.mxu0 %v3368
    %3394 = vmatpush.msra.mxu0 %v3367
    %3395 = vmatpush.msra.mxu0 %v3366
    %3396 = vmatpush.msra.mxu0 %v3365
    %3397 = vmatpush.msra.mxu0 %v3364
    %3398 = vmatpush.msra.mxu0 %v3363
    %3399 = vmatmul.f32.gmra.mxu0 %v3362
    %v3400 = vpop.f32.mrf.mxu0
    %v3401 = vadd.f32 %v3381, %v3400
    %3402 = vdwg.mxu0
    %3403 = vst [vmem:[%s7] sm:$0xff] %v3401
    // Predicated region
    $region34: #{qnetwork_lstm_forward.1} parent=1 // pred_check
      _
    $region35: #{qnetwork_lstm_forward.1} parent=1 // pred_check_branch
      %3405 = sbr.rel (0) target = $region37
    $region36: #{qnetwork_lstm_forward.1} parent=1 // pred_region
      _
    $region37: #{qnetwork_lstm_forward.1} parent=1 // pred_fallthru
      _
    // Predicated region
    $region38: #{qnetwork_lstm_forward.1} parent=1 // pred_check
      _
    $region39: #{qnetwork_lstm_forward.1} parent=1 // pred_check_branch
      %3407 = sbr.rel (0) target = $region41
    $region40: #{qnetwork_lstm_forward.1} parent=1 // pred_region
      _
    $region41: #{qnetwork_lstm_forward.1} parent=1 // pred_fallthru
      _
    %3408 = vsyncpa [#allocation6], 1
  %3409 = vsyncmov [#allocation4]
  %s3410 = vpop.sfrf %3409
  %p3411 = scmp.eq.s32.totalorder %s3410, 0
  %p3412 = pneg %p3411
  %3414 = shalt.err (%p3412)

</llo_original>
